<compile_context>
chip_gen: v7x
topology: tpu7x:2x2x1
jax: 0.10.0
libtpu: 0.0.40
codegen_flags: <defaults>
</compile_context>

<pallas_src>
import functools

import jax
import jax.numpy as jnp
from jax.experimental import pallas as pl
from jax.experimental.pallas import tpu as pltpu

DIMS = (554, 1024, 512, 256, 128, 64, 1)   # torch Net layer sizes
IN_F = DIMS[0]                              # 554
PAD_IN = 640                                # 554 rounded up to a multiple of 128
PAD_LO = (IN_F // 128) * 128                # 512: lane-aligned start of the zero tail
PAD_OUT = 128                               # final N=1 -> lane-dense 128-wide slab


def mlp_kernel(x_ref,
               w0, b0, w1, b1, w2, b2, w3, b3, w4, b4, w5, b5,
               o_ref, xpad_ref):
    """Full forward pass for one batch tile; all weights resident in VMEM.

    The tile is split into two row halves so there are two independent
    matmul chains the scheduler can overlap (MXU of one half under the
    VPU bias/ReLU/cast of the other)."""
    tb = x_ref.shape[0]
    half = tb // 2

    # In-kernel 554->640 zero-pad + f32->bf16 cast.  Zero the lane-aligned tail
    # [512:640) every step (megacore-safe: no reliance on program_id == 0),
    # then overwrite [0:554); columns [554:640) keep the zeros.
    xpad_ref[:, PAD_LO:] = jnp.zeros((tb, PAD_IN - PAD_LO), jnp.bfloat16)
    xpad_ref[:, :IN_F] = x_ref[...].astype(jnp.bfloat16)

    ha = xpad_ref[:half, :]
    hb = xpad_ref[half:, :]
    for w, b in ((w0, b0), (w1, b1), (w2, b2), (w3, b3), (w4, b4)):
        wv = w[...]
        bv = b[...]
        aa = jnp.dot(ha, wv, preferred_element_type=jnp.float32) + bv
        ab = jnp.dot(hb, wv, preferred_element_type=jnp.float32) + bv
        ha = jnp.maximum(aa, 0.0).astype(jnp.bfloat16)   # ReLU, bf16 for next MXU push
        hb = jnp.maximum(ab, 0.0).astype(jnp.bfloat16)
    wv = w5[...]
    bv = b5[...]
    oa = jnp.dot(ha, wv, preferred_element_type=jnp.float32) + bv
    ob = jnp.dot(hb, wv, preferred_element_type=jnp.float32) + bv
    o_ref[:half, :] = oa.astype(o_ref.dtype)             # lane-dense (half, 128) stores
    o_ref[half:, :] = ob.astype(o_ref.dtype)


def init_params(key):
    """torch.nn.Linear-style init U(-1/sqrt(fan_in), +), stored as (in, out) f32."""
    params = []
    for i in range(len(DIMS) - 1):
        fan_in, fan_out = DIMS[i], DIMS[i + 1]
        key, kw, kb = jax.random.split(key, 3)
        bound = 1.0 / (fan_in ** 0.5)
        w = jax.random.uniform(kw, (fan_in, fan_out), jnp.float32, -bound, bound)
        b = jax.random.uniform(kb, (1, fan_out), jnp.float32, -bound, bound)
        params.append((w, b))
    return params


def prepare_params(params):
    """Cast weights to bf16; zero-pad layer-0 rows (554->640) and the final
    layer's columns (1->128).  Biases stay f32 (added after f32 accumulation)."""
    prepared = []
    n = len(params)
    for i, (w, b) in enumerate(params):
        w = w.astype(jnp.bfloat16)
        b = b.astype(jnp.float32)
        if i == 0:
            w = jnp.pad(w, ((0, PAD_IN - w.shape[0]), (0, 0)))
        if i == n - 1:
            w = jnp.pad(w, ((0, 0), (0, PAD_OUT - w.shape[1])))
            b = jnp.pad(b, ((0, 0), (0, PAD_OUT - b.shape[1])))
        prepared.append((w, b))
    return prepared


@functools.partial(jax.jit, static_argnames=("tile_b",))
def _forward(x, prepared, *, tile_b):
    B, F = x.shape
    num_steps = pl.cdiv(B, tile_b)
    b_pad = num_steps * tile_b
    xp = x if b_pad == B else jnp.pad(x, ((0, b_pad - B), (0, 0)))

    # v7x has 2 TensorCores: shard the batch axis whenever there is more than
    # one grid step.  Single-TC chips (v5e/v6e) are unaffected by this choice.
    semantics = ("parallel",) if num_steps >= 2 else ("arbitrary",)

    def resident(shape):
        # Constant index_map -> single-buffer: weights/biases stay resident in
        # VMEM with no 2x double-buffering cost.
        return pl.BlockSpec(shape, lambda i: (0, 0),
                            pipeline_mode=pl.Buffered(buffer_count=1))

    flat = []
    in_specs = [pl.BlockSpec((tile_b, F), lambda i: (i, 0))]   # x: full last dim (554)
    for w, b in prepared:
        flat.extend([w, b])
        in_specs.append(resident(w.shape))
        in_specs.append(resident(b.shape))

    flops = 2 * b_pad * sum(int(w.shape[0]) * int(w.shape[1]) for w, _ in prepared)
    bytes_accessed = (xp.size * 4
                      + sum(w.size * 2 + b.size * 4 for w, b in prepared)
                      + b_pad * PAD_OUT * 4)

    out = pl.pallas_call(
        mlp_kernel,
        out_shape=jax.ShapeDtypeStruct((b_pad, PAD_OUT), jnp.float32),
        grid=(num_steps,),
        in_specs=in_specs,
        out_specs=pl.BlockSpec((tile_b, PAD_OUT), lambda i: (i, 0)),
        scratch_shapes=[pltpu.VMEM((tile_b, PAD_IN), jnp.bfloat16)],
        compiler_params=pltpu.CompilerParams(dimension_semantics=semantics),
        cost_estimate=pl.CostEstimate(flops=flops, transcendentals=0,
                                      bytes_accessed=bytes_accessed),
    )(xp, *flat)
    # Strip batch padding and the lane padding of the final layer.
    return out[:B, :1]


def _round_up(n, m):
    return ((n + m - 1) // m) * m


def net_forward(x, prepared, *, max_tile_b=512):
    """Tile heuristic: tiles up to 512 rows (big MXU pushes, low per-step
    overhead, VMEM safe on every generation incl. v7x).  For B > 256 we force
    >= 2 grid steps so v7x's second TensorCore gets work; tiles are multiples
    of 16 so the in-kernel half-split stays sublane-aligned."""
    B = x.shape[0]
    steps = max(1, (B + max_tile_b - 1) // max_tile_b)
    if B > 256 and steps < 2:
        steps = 2
    tile_b = max(16, _round_up((B + steps - 1) // steps, 16))
    return _forward(x, prepared, tile_b=tile_b)


def net_forward_ref(x, prepared):
    """Pure-JAX reference using the same bf16 weights / bf16 layer boundaries."""
    h = jnp.pad(x, ((0, 0), (0, PAD_IN - x.shape[1]))).astype(jnp.bfloat16)
    n = len(prepared)
    for i, (w, b) in enumerate(prepared):
        h = jnp.dot(h.astype(jnp.float32), w.astype(jnp.float32)) + b
        if i < n - 1:
            h = jnp.maximum(h, 0.0).astype(jnp.bfloat16)
    return h[:, :1]


if __name__ == "__main__":
    key = jax.random.PRNGKey(0)
    kx, kp = jax.random.split(key)
    params = init_params(kp)
    prepared = prepare_params(params)

    # small example batch (single grid step)
    B = 8
    x = jax.random.normal(kx, (B, DIMS[0]), jnp.float32)
    out = jax.block_until_ready(net_forward(x, prepared))
    ref = net_forward_ref(x, prepared)
    assert out.shape == (B, 1), out.shape
    assert jnp.allclose(out, ref, atol=2e-2, rtol=2e-2), \
        float(jnp.max(jnp.abs(out - ref)))

    # batch that is not a multiple of the tile: handled by row padding
    B2 = 20
    x2 = jax.random.normal(jax.random.PRNGKey(1), (B2, DIMS[0]), jnp.float32)
    out2 = jax.block_until_ready(net_forward(x2, prepared))
    ref2 = net_forward_ref(x2, prepared)
    assert out2.shape == (B2, 1), out2.shape
    assert jnp.allclose(out2, ref2, atol=2e-2, rtol=2e-2)

    # batch large enough to trigger the multi-step / "parallel" (megacore) path
    B3 = 300
    x3 = jax.random.normal(jax.random.PRNGKey(2), (B3, DIMS[0]), jnp.float32)
    out3 = jax.block_until_ready(net_forward(x3, prepared))
    ref3 = net_forward_ref(x3, prepared)
    assert out3.shape == (B3, 1), out3.shape
    assert jnp.allclose(out3, ref3, atol=2e-2, rtol=2e-2)

    print("KERNEL_OK")
</pallas_src>

<mosaic_0001>
module attributes {stable_mosaic.version = 11 : i64} {
  func.func @mlp_kernel(%arg0: i32, %arg1: memref<16x554xf32, #tpu.memory_space<vmem>>, %arg2: memref<640x1024xbf16, #tpu.memory_space<vmem>>, %arg3: memref<1x1024xf32, #tpu.memory_space<vmem>>, %arg4: memref<1024x512xbf16, #tpu.memory_space<vmem>>, %arg5: memref<1x512xf32, #tpu.memory_space<vmem>>, %arg6: memref<512x256xbf16, #tpu.memory_space<vmem>>, %arg7: memref<1x256xf32, #tpu.memory_space<vmem>>, %arg8: memref<256x128xbf16, #tpu.memory_space<vmem>>, %arg9: memref<1x128xf32, #tpu.memory_space<vmem>>, %arg10: memref<128x64xbf16, #tpu.memory_space<vmem>>, %arg11: memref<1x64xf32, #tpu.memory_space<vmem>>, %arg12: memref<64x128xbf16, #tpu.memory_space<vmem>>, %arg13: memref<1x128xf32, #tpu.memory_space<vmem>>, %arg14: memref<16x128xf32, #tpu.memory_space<vmem>>, %arg15: memref<16x640xbf16, #tpu.memory_space<vmem>>) attributes {dimension_semantics = [#tpu.dimension_semantics<arbitrary>], iteration_bounds = array<i64: 1>, scalar_prefetch = 0 : i64, scratch_operands = 1 : i64, tpu.core_type = #tpu.core_type<tc>, window_params = [{transform_indices = @transform_0, window_bounds = array<i64: 16, 554>}, {pipeline_mode = #tpu.pipeline_mode<synchronous>, transform_indices = @transform_1, window_bounds = array<i64: 640, 1024>}, {pipeline_mode = #tpu.pipeline_mode<synchronous>, transform_indices = @transform_2, window_bounds = array<i64: 1, 1024>}, {pipeline_mode = #tpu.pipeline_mode<synchronous>, transform_indices = @transform_3, window_bounds = array<i64: 1024, 512>}, {pipeline_mode = #tpu.pipeline_mode<synchronous>, transform_indices = @transform_4, window_bounds = array<i64: 1, 512>}, {pipeline_mode = #tpu.pipeline_mode<synchronous>, transform_indices = @transform_5, window_bounds = array<i64: 512, 256>}, {pipeline_mode = #tpu.pipeline_mode<synchronous>, transform_indices = @transform_6, window_bounds = array<i64: 1, 256>}, {pipeline_mode = #tpu.pipeline_mode<synchronous>, transform_indices = @transform_7, window_bounds = array<i64: 256, 128>}, {pipeline_mode = #tpu.pipeline_mode<synchronous>, transform_indices = @transform_8, window_bounds = array<i64: 1, 128>}, {pipeline_mode = #tpu.pipeline_mode<synchronous>, transform_indices = @transform_9, window_bounds = array<i64: 128, 64>}, {pipeline_mode = #tpu.pipeline_mode<synchronous>, transform_indices = @transform_10, window_bounds = array<i64: 1, 64>}, {pipeline_mode = #tpu.pipeline_mode<synchronous>, transform_indices = @transform_11, window_bounds = array<i64: 64, 128>}, {pipeline_mode = #tpu.pipeline_mode<synchronous>, transform_indices = @transform_12, window_bounds = array<i64: 1, 128>}, {transform_indices = @transform_13, window_bounds = array<i64: 16, 128>}]} {
    %cst = arith.constant 0.000000e+00 : bf16
    %0 = vector.broadcast %cst : bf16 to vector<16x128xbf16>
    %c0 = arith.constant 0 : index
    %c512 = arith.constant 512 : index
    %1 = vector.load %arg15[%c0, %c512] : memref<16x640xbf16, #tpu.memory_space<vmem>>, vector<16x128xbf16>
    tpu.vector_store %arg15[%c0, %c512], %0 {strides = array<i32>} : memref<16x640xbf16, #tpu.memory_space<vmem>>, vector<16x128xbf16>,
    %c0_0 = arith.constant 0 : index
    %c0_1 = arith.constant 0 : index
    %2 = vector.load %arg1[%c0_0, %c0_1] : memref<16x554xf32, #tpu.memory_space<vmem>>, vector<16x554xf32>
    %3 = arith.truncf %2 : vector<16x554xf32> to vector<16x554xbf16>
    %c0_2 = arith.constant 0 : index
    %c0_3 = arith.constant 0 : index
    %4 = vector.load %arg15[%c0_2, %c0_3] : memref<16x640xbf16, #tpu.memory_space<vmem>>, vector<16x554xbf16>
    tpu.vector_store %arg15[%c0_2, %c0_3], %3 {strides = array<i32>} : memref<16x640xbf16, #tpu.memory_space<vmem>>, vector<16x554xbf16>,
    %c0_4 = arith.constant 0 : index
    %c0_5 = arith.constant 0 : index
    %5 = vector.load %arg15[%c0_4, %c0_5] : memref<16x640xbf16, #tpu.memory_space<vmem>>, vector<8x640xbf16>
    %c8 = arith.constant 8 : index
    %c0_6 = arith.constant 0 : index
    %6 = vector.load %arg15[%c8, %c0_6] : memref<16x640xbf16, #tpu.memory_space<vmem>>, vector<8x640xbf16>
    %c0_7 = arith.constant 0 : index
    %c0_8 = arith.constant 0 : index
    %7 = vector.load %arg2[%c0_7, %c0_8] : memref<640x1024xbf16, #tpu.memory_space<vmem>>, vector<640x1024xbf16>
    %c0_9 = arith.constant 0 : index
    %c0_10 = arith.constant 0 : index
    %8 = vector.load %arg3[%c0_9, %c0_10] : memref<1x1024xf32, #tpu.memory_space<vmem>>, vector<1x1024xf32>
    %cst_11 = arith.constant dense<0.000000e+00> : vector<8x1024xf32>
    %9 = tpu.matmul %5, %7, %cst_11 {dimension_numbers = #tpu.dot_dimension_numbers<[1], [0], [0], [1], [0, 0, 1, 1], [], []>} : vector<8x640xbf16>, vector<640x1024xbf16>, vector<8x1024xf32> -> vector<8x1024xf32>
    %10 = vector.broadcast %8 : vector<1x1024xf32> to vector<8x1024xf32>
    %11 = arith.addf %9, %10 : vector<8x1024xf32>
    %cst_12 = arith.constant dense<0.000000e+00> : vector<8x1024xf32>
    %12 = tpu.matmul %6, %7, %cst_12 {dimension_numbers = #tpu.dot_dimension_numbers<[1], [0], [0], [1], [0, 0, 1, 1], [], []>} : vector<8x640xbf16>, vector<640x1024xbf16>, vector<8x1024xf32> -> vector<8x1024xf32>
    %13 = vector.broadcast %8 : vector<1x1024xf32> to vector<8x1024xf32>
    %14 = arith.addf %12, %13 : vector<8x1024xf32>
    %cst_13 = arith.constant 0.000000e+00 : f32
    %15 = vector.broadcast %cst_13 : f32 to vector<8x1024xf32>
    %16 = arith.maximumf %11, %15 : vector<8x1024xf32>
    %17 = arith.truncf %16 : vector<8x1024xf32> to vector<8x1024xbf16>
    %cst_14 = arith.constant 0.000000e+00 : f32
    %18 = vector.broadcast %cst_14 : f32 to vector<8x1024xf32>
    %19 = arith.maximumf %14, %18 : vector<8x1024xf32>
    %20 = arith.truncf %19 : vector<8x1024xf32> to vector<8x1024xbf16>
    %c0_15 = arith.constant 0 : index
    %c0_16 = arith.constant 0 : index
    %21 = vector.load %arg4[%c0_15, %c0_16] : memref<1024x512xbf16, #tpu.memory_space<vmem>>, vector<1024x512xbf16>
    %c0_17 = arith.constant 0 : index
    %c0_18 = arith.constant 0 : index
    %22 = vector.load %arg5[%c0_17, %c0_18] : memref<1x512xf32, #tpu.memory_space<vmem>>, vector<1x512xf32>
    %cst_19 = arith.constant dense<0.000000e+00> : vector<8x512xf32>
    %23 = tpu.matmul %17, %21, %cst_19 {dimension_numbers = #tpu.dot_dimension_numbers<[1], [0], [0], [1], [0, 0, 1, 1], [], []>} : vector<8x1024xbf16>, vector<1024x512xbf16>, vector<8x512xf32> -> vector<8x512xf32>
    %24 = vector.broadcast %22 : vector<1x512xf32> to vector<8x512xf32>
    %25 = arith.addf %23, %24 : vector<8x512xf32>
    %cst_20 = arith.constant dense<0.000000e+00> : vector<8x512xf32>
    %26 = tpu.matmul %20, %21, %cst_20 {dimension_numbers = #tpu.dot_dimension_numbers<[1], [0], [0], [1], [0, 0, 1, 1], [], []>} : vector<8x1024xbf16>, vector<1024x512xbf16>, vector<8x512xf32> -> vector<8x512xf32>
    %27 = vector.broadcast %22 : vector<1x512xf32> to vector<8x512xf32>
    %28 = arith.addf %26, %27 : vector<8x512xf32>
    %cst_21 = arith.constant 0.000000e+00 : f32
    %29 = vector.broadcast %cst_21 : f32 to vector<8x512xf32>
    %30 = arith.maximumf %25, %29 : vector<8x512xf32>
    %31 = arith.truncf %30 : vector<8x512xf32> to vector<8x512xbf16>
    %cst_22 = arith.constant 0.000000e+00 : f32
    %32 = vector.broadcast %cst_22 : f32 to vector<8x512xf32>
    %33 = arith.maximumf %28, %32 : vector<8x512xf32>
    %34 = arith.truncf %33 : vector<8x512xf32> to vector<8x512xbf16>
    %c0_23 = arith.constant 0 : index
    %c0_24 = arith.constant 0 : index
    %35 = vector.load %arg6[%c0_23, %c0_24] : memref<512x256xbf16, #tpu.memory_space<vmem>>, vector<512x256xbf16>
    %c0_25 = arith.constant 0 : index
    %c0_26 = arith.constant 0 : index
    %36 = vector.load %arg7[%c0_25, %c0_26] : memref<1x256xf32, #tpu.memory_space<vmem>>, vector<1x256xf32>
    %cst_27 = arith.constant dense<0.000000e+00> : vector<8x256xf32>
    %37 = tpu.matmul %31, %35, %cst_27 {dimension_numbers = #tpu.dot_dimension_numbers<[1], [0], [0], [1], [0, 0, 1, 1], [], []>} : vector<8x512xbf16>, vector<512x256xbf16>, vector<8x256xf32> -> vector<8x256xf32>
    %38 = vector.broadcast %36 : vector<1x256xf32> to vector<8x256xf32>
    %39 = arith.addf %37, %38 : vector<8x256xf32>
    %cst_28 = arith.constant dense<0.000000e+00> : vector<8x256xf32>
    %40 = tpu.matmul %34, %35, %cst_28 {dimension_numbers = #tpu.dot_dimension_numbers<[1], [0], [0], [1], [0, 0, 1, 1], [], []>} : vector<8x512xbf16>, vector<512x256xbf16>, vector<8x256xf32> -> vector<8x256xf32>
    %41 = vector.broadcast %36 : vector<1x256xf32> to vector<8x256xf32>
    %42 = arith.addf %40, %41 : vector<8x256xf32>
    %cst_29 = arith.constant 0.000000e+00 : f32
    %43 = vector.broadcast %cst_29 : f32 to vector<8x256xf32>
    %44 = arith.maximumf %39, %43 : vector<8x256xf32>
    %45 = arith.truncf %44 : vector<8x256xf32> to vector<8x256xbf16>
    %cst_30 = arith.constant 0.000000e+00 : f32
    %46 = vector.broadcast %cst_30 : f32 to vector<8x256xf32>
    %47 = arith.maximumf %42, %46 : vector<8x256xf32>
    %48 = arith.truncf %47 : vector<8x256xf32> to vector<8x256xbf16>
    %c0_31 = arith.constant 0 : index
    %c0_32 = arith.constant 0 : index
    %49 = vector.load %arg8[%c0_31, %c0_32] : memref<256x128xbf16, #tpu.memory_space<vmem>>, vector<256x128xbf16>
    %c0_33 = arith.constant 0 : index
    %c0_34 = arith.constant 0 : index
    %50 = vector.load %arg9[%c0_33, %c0_34] : memref<1x128xf32, #tpu.memory_space<vmem>>, vector<1x128xf32>
    %cst_35 = arith.constant dense<0.000000e+00> : vector<8x128xf32>
    %51 = tpu.matmul %45, %49, %cst_35 {dimension_numbers = #tpu.dot_dimension_numbers<[1], [0], [0], [1], [0, 0, 1, 1], [], []>} : vector<8x256xbf16>, vector<256x128xbf16>, vector<8x128xf32> -> vector<8x128xf32>
    %52 = vector.broadcast %50 : vector<1x128xf32> to vector<8x128xf32>
    %53 = arith.addf %51, %52 : vector<8x128xf32>
    %cst_36 = arith.constant dense<0.000000e+00> : vector<8x128xf32>
    %54 = tpu.matmul %48, %49, %cst_36 {dimension_numbers = #tpu.dot_dimension_numbers<[1], [0], [0], [1], [0, 0, 1, 1], [], []>} : vector<8x256xbf16>, vector<256x128xbf16>, vector<8x128xf32> -> vector<8x128xf32>
    %55 = vector.broadcast %50 : vector<1x128xf32> to vector<8x128xf32>
    %56 = arith.addf %54, %55 : vector<8x128xf32>
    %cst_37 = arith.constant 0.000000e+00 : f32
    %57 = vector.broadcast %cst_37 : f32 to vector<8x128xf32>
    %58 = arith.maximumf %53, %57 : vector<8x128xf32>
    %59 = arith.truncf %58 : vector<8x128xf32> to vector<8x128xbf16>
    %cst_38 = arith.constant 0.000000e+00 : f32
    %60 = vector.broadcast %cst_38 : f32 to vector<8x128xf32>
    %61 = arith.maximumf %56, %60 : vector<8x128xf32>
    %62 = arith.truncf %61 : vector<8x128xf32> to vector<8x128xbf16>
    %c0_39 = arith.constant 0 : index
    %c0_40 = arith.constant 0 : index
    %63 = vector.load %arg10[%c0_39, %c0_40] : memref<128x64xbf16, #tpu.memory_space<vmem>>, vector<128x64xbf16>
    %c0_41 = arith.constant 0 : index
    %c0_42 = arith.constant 0 : index
    %64 = vector.load %arg11[%c0_41, %c0_42] : memref<1x64xf32, #tpu.memory_space<vmem>>, vector<1x64xf32>
    %cst_43 = arith.constant dense<0.000000e+00> : vector<8x64xf32>
    %65 = tpu.matmul %59, %63, %cst_43 {dimension_numbers = #tpu.dot_dimension_numbers<[1], [0], [0], [1], [0, 0, 1, 1], [], []>} : vector<8x128xbf16>, vector<128x64xbf16>, vector<8x64xf32> -> vector<8x64xf32>
    %66 = vector.broadcast %64 : vector<1x64xf32> to vector<8x64xf32>
    %67 = arith.addf %65, %66 : vector<8x64xf32>
    %cst_44 = arith.constant dense<0.000000e+00> : vector<8x64xf32>
    %68 = tpu.matmul %62, %63, %cst_44 {dimension_numbers = #tpu.dot_dimension_numbers<[1], [0], [0], [1], [0, 0, 1, 1], [], []>} : vector<8x128xbf16>, vector<128x64xbf16>, vector<8x64xf32> -> vector<8x64xf32>
    %69 = vector.broadcast %64 : vector<1x64xf32> to vector<8x64xf32>
    %70 = arith.addf %68, %69 : vector<8x64xf32>
    %cst_45 = arith.constant 0.000000e+00 : f32
    %71 = vector.broadcast %cst_45 : f32 to vector<8x64xf32>
    %72 = arith.maximumf %67, %71 : vector<8x64xf32>
    %73 = arith.truncf %72 : vector<8x64xf32> to vector<8x64xbf16>
    %cst_46 = arith.constant 0.000000e+00 : f32
    %74 = vector.broadcast %cst_46 : f32 to vector<8x64xf32>
    %75 = arith.maximumf %70, %74 : vector<8x64xf32>
    %76 = arith.truncf %75 : vector<8x64xf32> to vector<8x64xbf16>
    %c0_47 = arith.constant 0 : index
    %c0_48 = arith.constant 0 : index
    %77 = vector.load %arg12[%c0_47, %c0_48] : memref<64x128xbf16, #tpu.memory_space<vmem>>, vector<64x128xbf16>
    %c0_49 = arith.constant 0 : index
    %c0_50 = arith.constant 0 : index
    %78 = vector.load %arg13[%c0_49, %c0_50] : memref<1x128xf32, #tpu.memory_space<vmem>>, vector<1x128xf32>
    %cst_51 = arith.constant dense<0.000000e+00> : vector<8x128xf32>
    %79 = tpu.matmul %73, %77, %cst_51 {dimension_numbers = #tpu.dot_dimension_numbers<[1], [0], [0], [1], [0, 0, 1, 1], [], []>} : vector<8x64xbf16>, vector<64x128xbf16>, vector<8x128xf32> -> vector<8x128xf32>
    %80 = vector.broadcast %78 : vector<1x128xf32> to vector<8x128xf32>
    %81 = arith.addf %79, %80 : vector<8x128xf32>
    %cst_52 = arith.constant dense<0.000000e+00> : vector<8x128xf32>
    %82 = tpu.matmul %76, %77, %cst_52 {dimension_numbers = #tpu.dot_dimension_numbers<[1], [0], [0], [1], [0, 0, 1, 1], [], []>} : vector<8x64xbf16>, vector<64x128xbf16>, vector<8x128xf32> -> vector<8x128xf32>
    %83 = vector.broadcast %78 : vector<1x128xf32> to vector<8x128xf32>
    %84 = arith.addf %82, %83 : vector<8x128xf32>
    %c0_53 = arith.constant 0 : index
    %c0_54 = arith.constant 0 : index
    %85 = vector.load %arg14[%c0_53, %c0_54] : memref<16x128xf32, #tpu.memory_space<vmem>>, vector<8x128xf32>
    tpu.vector_store %arg14[%c0_53, %c0_54], %81 {strides = array<i32>} : memref<16x128xf32, #tpu.memory_space<vmem>>, vector<8x128xf32>,
    %c8_55 = arith.constant 8 : index
    %c0_56 = arith.constant 0 : index
    %86 = vector.load %arg14[%c8_55, %c0_56] : memref<16x128xf32, #tpu.memory_space<vmem>>, vector<8x128xf32>
    tpu.vector_store %arg14[%c8_55, %c0_56], %84 {strides = array<i32>} : memref<16x128xf32, #tpu.memory_space<vmem>>, vector<8x128xf32>,
    return
  }
  func.func @transform_0(%arg0: i32) -> (i32, i32) {
    %c0_i32 = arith.constant 0 : i32
    %c0_i32_0 = arith.constant 0 : i32
    return %arg0, %c0_i32 : i32, i32
  }
  func.func @transform_1(%arg0: i32) -> (i32, i32) {
    %c0_i32 = arith.constant 0 : i32
    %c0_i32_0 = arith.constant 0 : i32
    %c0_i32_1 = arith.constant 0 : i32
    return %c0_i32, %c0_i32_0 : i32, i32
  }
  func.func @transform_2(%arg0: i32) -> (i32, i32) {
    %c0_i32 = arith.constant 0 : i32
    %c0_i32_0 = arith.constant 0 : i32
    %c0_i32_1 = arith.constant 0 : i32
    return %c0_i32, %c0_i32_0 : i32, i32
  }
  func.func @transform_3(%arg0: i32) -> (i32, i32) {
    %c0_i32 = arith.constant 0 : i32
    %c0_i32_0 = arith.constant 0 : i32
    %c0_i32_1 = arith.constant 0 : i32
    return %c0_i32, %c0_i32_0 : i32, i32
  }
  func.func @transform_4(%arg0: i32) -> (i32, i32) {
    %c0_i32 = arith.constant 0 : i32
    %c0_i32_0 = arith.constant 0 : i32
    %c0_i32_1 = arith.constant 0 : i32
    return %c0_i32, %c0_i32_0 : i32, i32
  }
  func.func @transform_5(%arg0: i32) -> (i32, i32) {
    %c0_i32 = arith.constant 0 : i32
    %c0_i32_0 = arith.constant 0 : i32
    %c0_i32_1 = arith.constant 0 : i32
    return %c0_i32, %c0_i32_0 : i32, i32
  }
  func.func @transform_6(%arg0: i32) -> (i32, i32) {
    %c0_i32 = arith.constant 0 : i32
    %c0_i32_0 = arith.constant 0 : i32
    %c0_i32_1 = arith.constant 0 : i32
    return %c0_i32, %c0_i32_0 : i32, i32
  }
  func.func @transform_7(%arg0: i32) -> (i32, i32) {
    %c0_i32 = arith.constant 0 : i32
    %c0_i32_0 = arith.constant 0 : i32
    %c0_i32_1 = arith.constant 0 : i32
    return %c0_i32, %c0_i32_0 : i32, i32
  }
  func.func @transform_8(%arg0: i32) -> (i32, i32) {
    %c0_i32 = arith.constant 0 : i32
    %c0_i32_0 = arith.constant 0 : i32
    %c0_i32_1 = arith.constant 0 : i32
    return %c0_i32, %c0_i32_0 : i32, i32
  }
  func.func @transform_9(%arg0: i32) -> (i32, i32) {
    %c0_i32 = arith.constant 0 : i32
    %c0_i32_0 = arith.constant 0 : i32
    %c0_i32_1 = arith.constant 0 : i32
    return %c0_i32, %c0_i32_0 : i32, i32
  }
  func.func @transform_10(%arg0: i32) -> (i32, i32) {
    %c0_i32 = arith.constant 0 : i32
    %c0_i32_0 = arith.constant 0 : i32
    %c0_i32_1 = arith.constant 0 : i32
    return %c0_i32, %c0_i32_0 : i32, i32
  }
  func.func @transform_11(%arg0: i32) -> (i32, i32) {
    %c0_i32 = arith.constant 0 : i32
    %c0_i32_0 = arith.constant 0 : i32
    %c0_i32_1 = arith.constant 0 : i32
    return %c0_i32, %c0_i32_0 : i32, i32
  }
  func.func @transform_12(%arg0: i32) -> (i32, i32) {
    %c0_i32 = arith.constant 0 : i32
    %c0_i32_0 = arith.constant 0 : i32
    %c0_i32_1 = arith.constant 0 : i32
    return %c0_i32, %c0_i32_0 : i32, i32
  }
  func.func @transform_13(%arg0: i32) -> (i32, i32) {
    %c0_i32 = arith.constant 0 : i32
    %c0_i32_0 = arith.constant 0 : i32
    return %arg0, %c0_i32 : i32, i32
  }
}

</mosaic_0001>

<llo_original>
// kernel: _forward.1
$region0: #{_forward.1}
  #allocation0 [shape = 'u32[]', space=smem, size = 0x4, offset = 0x4, fixed_abs, tag = 'smem constant byte address 0x4 - core index']
  #allocation1 [shape = 'u32[144,128]{1,0:T(1,128)}', space=vmem, size = 0x12000, scoped, tag = 'internal scratch']
  #allocation2 [shape = 'bf16[16,640]{1,0:T(16,128)(2,1)}', space=vmem, size = 0x5000, scoped, tag = 'scratch operand']
  %s0 = inlined_call_operand.vmem [shape: f32[16,554], index: 0, kind: input, shape index: {}]
  %s1 = inlined_call_operand.hbm [shape: bf16[640,1024], index: 1, kind: input, shape index: {}]
  %s2 = inlined_call_operand.hbm [shape: f32[1,1024], index: 2, kind: input, shape index: {}]
  %s3 = inlined_call_operand.hbm [shape: bf16[1024,512], index: 3, kind: input, shape index: {}]
  %s4 = inlined_call_operand.hbm [shape: f32[1,512], index: 4, kind: input, shape index: {}]
  %s5 = inlined_call_operand.hbm [shape: bf16[512,256], index: 5, kind: input, shape index: {}]
  %s6 = inlined_call_operand.hbm [shape: f32[1,256], index: 6, kind: input, shape index: {}]
  %s7 = inlined_call_operand.hbm [shape: bf16[256,128], index: 7, kind: input, shape index: {}]
  %s8 = inlined_call_operand.hbm [shape: f32[1,128], index: 8, kind: input, shape index: {}]
  %s9 = inlined_call_operand.vmem [shape: bf16[128,64], index: 9, kind: input, shape index: {}]
  %s10 = inlined_call_operand.hbm [shape: f32[1,64], index: 10, kind: input, shape index: {}]
  %s11 = inlined_call_operand.hbm [shape: bf16[64,128], index: 11, kind: input, shape index: {}]
  %s12 = inlined_call_operand.hbm [shape: f32[1,128], index: 12, kind: input, shape index: {}]
  %s13 = inlined_call_operand.vmem [shape: f32[16,128], index: 13, kind: output, shape index: {}]
  %s14 = sld [smem:[#allocation0]]
  $region106: #{_forward.1} parent=0
    _
  %s16 = ssub.s32 1, %s14
  %s17 = scalar_select 0, %s16, %s14
  $region1: #{_forward.1} parent=0
    #allocation3 [shape = 'u8[1310720]{0}', space=vmem, size = 0x140000, scoped, tag = 'input window, operand 1, single buffered']
    #allocation4 [shape = 's32[1]{0}', space=sflag, size = 0x4, scoped, tag = 'scoped memory for _forward.1']
    #allocation5 [shape = 'u8[4096]{0}', space=vmem, size = 0x1000, scoped, tag = 'input window, operand 2, single buffered']
    #allocation6 [shape = 's32[1]{0}', space=sflag, size = 0x4, scoped, tag = 'scoped memory for _forward.1']
    #allocation7 [shape = 'u8[1048576]{0}', space=vmem, size = 0x100000, scoped, tag = 'input window, operand 3, single buffered']
    #allocation8 [shape = 'u8[2048]{0}', space=vmem, size = 0x800, scoped, tag = 'input window, operand 4, single buffered']
    #allocation9 [shape = 's32[1]{0}', space=sflag, size = 0x4, scoped, tag = 'scoped memory for _forward.1']
    #allocation10 [shape = 'u8[262144]{0}', space=vmem, size = 0x40000, scoped, tag = 'input window, operand 5, single buffered']
    #allocation11 [shape = 'u8[1024]{0}', space=vmem, size = 0x400, scoped, tag = 'input window, operand 6, single buffered']
    #allocation12 [shape = 's32[1]{0}', space=sflag, size = 0x4, scoped, tag = 'scoped memory for _forward.1']
    #allocation13 [shape = 'u8[65536]{0}', space=vmem, size = 0x10000, scoped, tag = 'input window, operand 7, single buffered']
    #allocation14 [shape = 'u8[512]{0}', space=vmem, size = 0x400, scoped, tag = 'input window, operand 8, single buffered']
    #allocation15 [shape = 's32[1]{0}', space=sflag, size = 0x4, scoped, tag = 'scoped memory for _forward.1']
    #allocation16 [shape = 'u8[512]{0}', space=vmem, size = 0x400, scoped, tag = 'input window, operand 10, single buffered']
    #allocation17 [shape = 'u8[16384]{0}', space=vmem, size = 0x4000, scoped, tag = 'input window, operand 11, single buffered']
    #allocation18 [shape = 's32[1]{0}', space=sflag, size = 0x4, scoped, tag = 'scoped memory for _forward.1']
    #allocation19 [shape = 'u8[512]{0}', space=vmem, size = 0x400, scoped, tag = 'input window, operand 12, single buffered']
    %18 = vsyncpa [#allocation4], 0
    %19 = vsyncpa [#allocation6], 0
    %20 = vsyncpa [#allocation9], 0
    %21 = vsyncpa [#allocation12], 0
    %22 = vsyncpa [#allocation15], 0
    %23 = vsyncpa [#allocation18], 0
    // Predicated region
    $region2: #{_forward.1} parent=1 // pred_check
      _
    $region3: #{_forward.1} parent=1 // pred_check_branch
      %25 = sbr.rel (0) target = $region5
    $region4: #{_forward.1} parent=1 // pred_region
      _
    $region5: #{_forward.1} parent=1 // pred_fallthru
      _
    // Predicated region
    $region6: #{_forward.1} parent=1 // pred_check
      _
    $region7: #{_forward.1} parent=1 // pred_check_branch
      %27 = sbr.rel (0) target = $region9
    $region8: #{_forward.1} parent=1 // pred_region
      %s29 = ssub.s32 40960, 40960
      %30 = vsyncadd [#allocation4], %s29
      %s31 = sshll.u32 [#allocation3], 4
      %s32 = int_to_ptr.vmem [resolvable:$true] %s31
      %37 = dma.hbm_to_vmem [thread:$0]  %s1, 40960, %s32, [#allocation4], 512, 512, 32
    $region9: #{_forward.1} parent=1 // pred_fallthru
      _
    // Predicated region
    $region10: #{_forward.1} parent=1 // pred_check
      _
    $region11: #{_forward.1} parent=1 // pred_check_branch
      %39 = sbr.rel (0) target = $region13
    $region12: #{_forward.1} parent=1 // pred_region
      %s41 = ssub.s32 128, 128
      %42 = vsyncadd [#allocation6], %s41
      %s44 = sshll.u32 [#allocation5], 4
      %s45 = int_to_ptr.vmem [resolvable:$true] %s44
      %47 = dma.hbm_to_vmem [thread:$0]  %s2, 128, %s45, [#allocation6]
    $region13: #{_forward.1} parent=1 // pred_fallthru
      _
    // Predicated region
    $region14: #{_forward.1} parent=1 // pred_check
      _
    $region15: #{_forward.1} parent=1 // pred_check_branch
      %49 = sbr.rel (0) target = $region17
    $region16: #{_forward.1} parent=1 // pred_region
      %s51 = ssub.s32 32768, 32768
      %52 = vsyncadd [#allocation6], %s51
      %s53 = sshll.u32 [#allocation7], 4
      %s54 = int_to_ptr.vmem [resolvable:$true] %s53
      %59 = dma.hbm_to_vmem [thread:$0]  %s3, 32768, %s54, [#allocation6], 256, 256, 16
    $region17: #{_forward.1} parent=1 // pred_fallthru
      _
    // Predicated region
    $region18: #{_forward.1} parent=1 // pred_check
      _
    $region19: #{_forward.1} parent=1 // pred_check_branch
      %61 = sbr.rel (0) target = $region21
    $region20: #{_forward.1} parent=1 // pred_region
      %s63 = ssub.s32 64, 64
      %64 = vsyncadd [#allocation9], %s63
      %s66 = sshll.u32 [#allocation8], 4
      %s67 = int_to_ptr.vmem [resolvable:$true] %s66
      %69 = dma.hbm_to_vmem [thread:$0]  %s4, 64, %s67, [#allocation9]
    $region21: #{_forward.1} parent=1 // pred_fallthru
      _
    // Predicated region
    $region22: #{_forward.1} parent=1 // pred_check
      _
    $region23: #{_forward.1} parent=1 // pred_check_branch
      %71 = sbr.rel (0) target = $region25
    $region24: #{_forward.1} parent=1 // pred_region
      %s73 = ssub.s32 8192, 8192
      %74 = vsyncadd [#allocation9], %s73
      %s75 = sshll.u32 [#allocation10], 4
      %s76 = int_to_ptr.vmem [resolvable:$true] %s75
      %81 = dma.hbm_to_vmem [thread:$0]  %s5, 8192, %s76, [#allocation9], 128, 128, 8
    $region25: #{_forward.1} parent=1 // pred_fallthru
      _
    // Predicated region
    $region26: #{_forward.1} parent=1 // pred_check
      _
    $region27: #{_forward.1} parent=1 // pred_check_branch
      %83 = sbr.rel (0) target = $region29
    $region28: #{_forward.1} parent=1 // pred_region
      %s85 = ssub.s32 32, 32
      %86 = vsyncadd [#allocation12], %s85
      %s88 = sshll.u32 [#allocation11], 4
      %s89 = int_to_ptr.vmem [resolvable:$true] %s88
      %91 = dma.hbm_to_vmem [thread:$0]  %s6, 32, %s89, [#allocation12]
    $region29: #{_forward.1} parent=1 // pred_fallthru
      _
    // Predicated region
    $region30: #{_forward.1} parent=1 // pred_check
      _
    $region31: #{_forward.1} parent=1 // pred_check_branch
      %93 = sbr.rel (0) target = $region33
    $region32: #{_forward.1} parent=1 // pred_region
      %s95 = ssub.s32 2048, 2048
      %96 = vsyncadd [#allocation12], %s95
      %s97 = sshll.u32 [#allocation13], 4
      %s98 = int_to_ptr.vmem [resolvable:$true] %s97
      %103 = dma.hbm_to_vmem [thread:$0]  %s7, 2048, %s98, [#allocation12], 64, 64, 4
    $region33: #{_forward.1} parent=1 // pred_fallthru
      _
    // Predicated region
    $region34: #{_forward.1} parent=1 // pred_check
      _
    $region35: #{_forward.1} parent=1 // pred_check_branch
      %105 = sbr.rel (0) target = $region37
    $region36: #{_forward.1} parent=1 // pred_region
      %s107 = ssub.s32 16, 16
      %108 = vsyncadd [#allocation15], %s107
      %s110 = sshll.u32 [#allocation14], 4
      %s111 = int_to_ptr.vmem [resolvable:$true] %s110
      %113 = dma.hbm_to_vmem [thread:$0]  %s8, 16, %s111, [#allocation15]
    $region37: #{_forward.1} parent=1 // pred_fallthru
      _
    // Predicated region
    $region38: #{_forward.1} parent=1 // pred_check
      _
    $region39: #{_forward.1} parent=1 // pred_check_branch
      %115 = sbr.rel (0) target = $region41
    $region40: #{_forward.1} parent=1 // pred_region
      _
    $region41: #{_forward.1} parent=1 // pred_fallthru
      _
    // Predicated region
    $region42: #{_forward.1} parent=1 // pred_check
      _
    $region43: #{_forward.1} parent=1 // pred_check_branch
      %117 = sbr.rel (0) target = $region45
    $region44: #{_forward.1} parent=1 // pred_region
      %s119 = ssub.s32 16, 16
      %120 = vsyncadd [#allocation15], %s119
      %s122 = sshll.u32 [#allocation16], 4
      %s123 = int_to_ptr.vmem [resolvable:$true] %s122
      %125 = dma.hbm_to_vmem [thread:$0]  %s10, 16, %s123, [#allocation15]
    $region45: #{_forward.1} parent=1 // pred_fallthru
      _
    // Predicated region
    $region46: #{_forward.1} parent=1 // pred_check
      _
    $region47: #{_forward.1} parent=1 // pred_check_branch
      %127 = sbr.rel (0) target = $region49
    $region48: #{_forward.1} parent=1 // pred_region
      %s129 = ssub.s32 512, 512
      %130 = vsyncadd [#allocation18], %s129
      %s131 = sshll.u32 [#allocation17], 4
      %s132 = int_to_ptr.vmem [resolvable:$true] %s131
      %137 = dma.hbm_to_vmem [thread:$0]  %s11, 512, %s132, [#allocation18], 64, 64, 4
    $region49: #{_forward.1} parent=1 // pred_fallthru
      _
    // Predicated region
    $region50: #{_forward.1} parent=1 // pred_check
      _
    $region51: #{_forward.1} parent=1 // pred_check_branch
      %139 = sbr.rel (0) target = $region53
    $region52: #{_forward.1} parent=1 // pred_region
      %s141 = ssub.s32 16, 16
      %142 = vsyncadd [#allocation18], %s141
      %s144 = sshll.u32 [#allocation19], 4
      %s145 = int_to_ptr.vmem [resolvable:$true] %s144
      %147 = dma.hbm_to_vmem [thread:$0]  %s12, 16, %s145, [#allocation18]
    $region53: #{_forward.1} parent=1 // pred_fallthru
      _
    // Predicated region
    $region54: #{_forward.1} parent=1 // pred_check
      _
    $region55: #{_forward.1} parent=1 // pred_check_branch
      %149 = sbr.rel (0) target = $region57
    $region56: #{_forward.1} parent=1 // pred_region
      %150 = dma.done [#allocation4], 40960
    $region57: #{_forward.1} parent=1 // pred_fallthru
      _
    // Predicated region
    $region58: #{_forward.1} parent=1 // pred_check
      _
    $region59: #{_forward.1} parent=1 // pred_check_branch
      %152 = sbr.rel (0) target = $region61
    $region60: #{_forward.1} parent=1 // pred_region
      %153 = dma.done [#allocation6], 128
    $region61: #{_forward.1} parent=1 // pred_fallthru
      _
    // Predicated region
    $region62: #{_forward.1} parent=1 // pred_check
      _
    $region63: #{_forward.1} parent=1 // pred_check_branch
      %155 = sbr.rel (0) target = $region65
    $region64: #{_forward.1} parent=1 // pred_region
      %156 = dma.done [#allocation6], 32768
    $region65: #{_forward.1} parent=1 // pred_fallthru
      _
    // Predicated region
    $region66: #{_forward.1} parent=1 // pred_check
      _
    $region67: #{_forward.1} parent=1 // pred_check_branch
      %158 = sbr.rel (0) target = $region69
    $region68: #{_forward.1} parent=1 // pred_region
      %159 = dma.done [#allocation9], 64
    $region69: #{_forward.1} parent=1 // pred_fallthru
      _
    // Predicated region
    $region70: #{_forward.1} parent=1 // pred_check
      _
    $region71: #{_forward.1} parent=1 // pred_check_branch
      %161 = sbr.rel (0) target = $region73
    $region72: #{_forward.1} parent=1 // pred_region
      %162 = dma.done [#allocation9], 8192
    $region73: #{_forward.1} parent=1 // pred_fallthru
      _
    // Predicated region
    $region74: #{_forward.1} parent=1 // pred_check
      _
    $region75: #{_forward.1} parent=1 // pred_check_branch
      %164 = sbr.rel (0) target = $region77
    $region76: #{_forward.1} parent=1 // pred_region
      %165 = dma.done [#allocation12], 32
    $region77: #{_forward.1} parent=1 // pred_fallthru
      _
    // Predicated region
    $region78: #{_forward.1} parent=1 // pred_check
      _
    $region79: #{_forward.1} parent=1 // pred_check_branch
      %167 = sbr.rel (0) target = $region81
    $region80: #{_forward.1} parent=1 // pred_region
      %168 = dma.done [#allocation12], 2048
    $region81: #{_forward.1} parent=1 // pred_fallthru
      _
    // Predicated region
    $region82: #{_forward.1} parent=1 // pred_check
      _
    $region83: #{_forward.1} parent=1 // pred_check_branch
      %170 = sbr.rel (0) target = $region85
    $region84: #{_forward.1} parent=1 // pred_region
      %171 = dma.done [#allocation15], 16
    $region85: #{_forward.1} parent=1 // pred_fallthru
      _
    // Predicated region
    $region86: #{_forward.1} parent=1 // pred_check
      _
    $region87: #{_forward.1} parent=1 // pred_check_branch
      %173 = sbr.rel (0) target = $region89
    $region88: #{_forward.1} parent=1 // pred_region
      %174 = dma.done [#allocation15], 16
    $region89: #{_forward.1} parent=1 // pred_fallthru
      _
    // Predicated region
    $region90: #{_forward.1} parent=1 // pred_check
      _
    $region91: #{_forward.1} parent=1 // pred_check_branch
      %176 = sbr.rel (0) target = $region93
    $region92: #{_forward.1} parent=1 // pred_region
      %177 = dma.done [#allocation18], 512
    $region93: #{_forward.1} parent=1 // pred_fallthru
      _
    // Predicated region
    $region94: #{_forward.1} parent=1 // pred_check
      _
    $region95: #{_forward.1} parent=1 // pred_check_branch
      %179 = sbr.rel (0) target = $region97
    $region96: #{_forward.1} parent=1 // pred_region
      %180 = dma.done [#allocation18], 16
    $region97: #{_forward.1} parent=1 // pred_fallthru
      _
    %182 = vst [vmem:[#allocation2 + $0x20] sm:$0xff] 0
    %v183 = vld [vmem:[%s0] sm:$0xff]
    %v184 = vld [vmem:[%s0 + $0x8] sm:$0xff]
    %v185 = vld [vmem:[%s0 + $0x10] sm:$0xff]
    %v186 = vld [vmem:[%s0 + $0x18] sm:$0xff]
    %v187 = vld [vmem:[%s0 + $0x20] sm:$0xff]
    %v188 = vld [vmem:[%s0 + $0x28] sm:$0xff]
    %v189 = vld [vmem:[%s0 + $0x30] sm:$0xff]
    %v190 = vld [vmem:[%s0 + $0x38] sm:$0xff]
    %v191 = vld [vmem:[%s0 + $0x40] sm:$0xff]
    %v192 = vld [vmem:[%s0 + $0x48] sm:$0xff]
    %v193 = vpack.c.bf16 %v188, %v183
    %v194 = vpack.c.bf16 %v189, %v184
    %v195 = vpack.c.bf16 %v190, %v185
    %v196 = vpack.c.bf16 %v191, %v186
    %v197 = vpack.c.bf16 %v192, %v187
    %198 = vst [vmem:[#allocation2] sm:$0xff] %v193
    %199 = vst [vmem:[#allocation2 + $0x8] sm:$0xff] %v194
    %200 = vst [vmem:[#allocation2 + $0x10] sm:$0xff] %v195
    %201 = vst [vmem:[#allocation2 + $0x18] sm:$0xff] %v196
    %vm202 = vcmask 343040
    %203 = vst.msk [vmem:[#allocation2 + $0x20] sm:$0xff] %vm202, %v197
    %v204 = vld [vmem:[#allocation2] sm:$0xf]
    %v205 = vld [vmem:[#allocation2 + $0x8] sm:$0xf]
    %v206 = vld [vmem:[#allocation2 + $0x10] sm:$0xf]
    %v207 = vld [vmem:[#allocation2 + $0x18] sm:$0xf]
    %v208 = vld [vmem:[#allocation2 + $0x20] sm:$0xf]
    %v209 = vld [vmem:[#allocation2] sm:$0xf0]
    %v210 = vld [vmem:[#allocation2 + $0x8] sm:$0xf0]
    %v211 = vld [vmem:[#allocation2 + $0x10] sm:$0xf0]
    %v212 = vld [vmem:[#allocation2 + $0x18] sm:$0xf0]
    %v213 = vld [vmem:[#allocation2 + $0x20] sm:$0xf0]
    %v214 = vld [vmem:[#allocation3] sm:$0xff]
    %v215 = vld [vmem:[#allocation3 + $0x8] sm:$0xff]
    %v216 = vld [vmem:[#allocation3 + $0x10] sm:$0xff]
    %v217 = vld [vmem:[#allocation3 + $0x18] sm:$0xff]
    %v218 = vld [vmem:[#allocation3 + $0x20] sm:$0xff]
    %v219 = vld [vmem:[#allocation3 + $0x28] sm:$0xff]
    %v220 = vld [vmem:[#allocation3 + $0x30] sm:$0xff]
    %v221 = vld [vmem:[#allocation3 + $0x38] sm:$0xff]
    %v222 = vld [vmem:[#allocation3 + $0x40] sm:$0xff]
    %v223 = vld [vmem:[#allocation3 + $0x48] sm:$0xff]
    %v224 = vld [vmem:[#allocation3 + $0x50] sm:$0xff]
    %v225 = vld [vmem:[#allocation3 + $0x58] sm:$0xff]
    %v226 = vld [vmem:[#allocation3 + $0x60] sm:$0xff]
    %v227 = vld [vmem:[#allocation3 + $0x68] sm:$0xff]
    %v228 = vld [vmem:[#allocation3 + $0x70] sm:$0xff]
    %v229 = vld [vmem:[#allocation3 + $0x78] sm:$0xff]
    %v230 = vld [vmem:[#allocation3 + $0x80] sm:$0xff]
    %v231 = vld [vmem:[#allocation3 + $0x88] sm:$0xff]
    %v232 = vld [vmem:[#allocation3 + $0x90] sm:$0xff]
    %v233 = vld [vmem:[#allocation3 + $0x98] sm:$0xff]
    %v234 = vld [vmem:[#allocation3 + $0xa0] sm:$0xff]
    %v235 = vld [vmem:[#allocation3 + $0xa8] sm:$0xff]
    %v236 = vld [vmem:[#allocation3 + $0xb0] sm:$0xff]
    %v237 = vld [vmem:[#allocation3 + $0xb8] sm:$0xff]
    %v238 = vld [vmem:[#allocation3 + $0xc0] sm:$0xff]
    %v239 = vld [vmem:[#allocation3 + $0xc8] sm:$0xff]
    %v240 = vld [vmem:[#allocation3 + $0xd0] sm:$0xff]
    %v241 = vld [vmem:[#allocation3 + $0xd8] sm:$0xff]
    %v242 = vld [vmem:[#allocation3 + $0xe0] sm:$0xff]
    %v243 = vld [vmem:[#allocation3 + $0xe8] sm:$0xff]
    %v244 = vld [vmem:[#allocation3 + $0xf0] sm:$0xff]
    %v245 = vld [vmem:[#allocation3 + $0xf8] sm:$0xff]
    %v246 = vld [vmem:[#allocation3 + $0x100] sm:$0xff]
    %v247 = vld [vmem:[#allocation3 + $0x108] sm:$0xff]
    %v248 = vld [vmem:[#allocation3 + $0x110] sm:$0xff]
    %v249 = vld [vmem:[#allocation3 + $0x118] sm:$0xff]
    %v250 = vld [vmem:[#allocation3 + $0x120] sm:$0xff]
    %v251 = vld [vmem:[#allocation3 + $0x128] sm:$0xff]
    %v252 = vld [vmem:[#allocation3 + $0x130] sm:$0xff]
    %v253 = vld [vmem:[#allocation3 + $0x138] sm:$0xff]
    %v254 = vld [vmem:[#allocation3 + $0x140] sm:$0xff]
    %v255 = vld [vmem:[#allocation3 + $0x148] sm:$0xff]
    %v256 = vld [vmem:[#allocation3 + $0x150] sm:$0xff]
    %v257 = vld [vmem:[#allocation3 + $0x158] sm:$0xff]
    %v258 = vld [vmem:[#allocation3 + $0x160] sm:$0xff]
    %v259 = vld [vmem:[#allocation3 + $0x168] sm:$0xff]
    %v260 = vld [vmem:[#allocation3 + $0x170] sm:$0xff]
    %v261 = vld [vmem:[#allocation3 + $0x178] sm:$0xff]
    %v262 = vld [vmem:[#allocation3 + $0x180] sm:$0xff]
    %v263 = vld [vmem:[#allocation3 + $0x188] sm:$0xff]
    %v264 = vld [vmem:[#allocation3 + $0x190] sm:$0xff]
    %v265 = vld [vmem:[#allocation3 + $0x198] sm:$0xff]
    %v266 = vld [vmem:[#allocation3 + $0x1a0] sm:$0xff]
    %v267 = vld [vmem:[#allocation3 + $0x1a8] sm:$0xff]
    %v268 = vld [vmem:[#allocation3 + $0x1b0] sm:$0xff]
    %v269 = vld [vmem:[#allocation3 + $0x1b8] sm:$0xff]
    %v270 = vld [vmem:[#allocation3 + $0x1c0] sm:$0xff]
    %v271 = vld [vmem:[#allocation3 + $0x1c8] sm:$0xff]
    %v272 = vld [vmem:[#allocation3 + $0x1d0] sm:$0xff]
    %v273 = vld [vmem:[#allocation3 + $0x1d8] sm:$0xff]
    %v274 = vld [vmem:[#allocation3 + $0x1e0] sm:$0xff]
    %v275 = vld [vmem:[#allocation3 + $0x1e8] sm:$0xff]
    %v276 = vld [vmem:[#allocation3 + $0x1f0] sm:$0xff]
    %v277 = vld [vmem:[#allocation3 + $0x1f8] sm:$0xff]
    %v278 = vld [vmem:[#allocation3 + $0x200] sm:$0xff]
    %v279 = vld [vmem:[#allocation3 + $0x208] sm:$0xff]
    %v280 = vld [vmem:[#allocation3 + $0x210] sm:$0xff]
    %v281 = vld [vmem:[#allocation3 + $0x218] sm:$0xff]
    %v282 = vld [vmem:[#allocation3 + $0x220] sm:$0xff]
    %v283 = vld [vmem:[#allocation3 + $0x228] sm:$0xff]
    %v284 = vld [vmem:[#allocation3 + $0x230] sm:$0xff]
    %v285 = vld [vmem:[#allocation3 + $0x238] sm:$0xff]
    %v286 = vld [vmem:[#allocation3 + $0x240] sm:$0xff]
    %v287 = vld [vmem:[#allocation3 + $0x248] sm:$0xff]
    %v288 = vld [vmem:[#allocation3 + $0x250] sm:$0xff]
    %v289 = vld [vmem:[#allocation3 + $0x258] sm:$0xff]
    %v290 = vld [vmem:[#allocation3 + $0x260] sm:$0xff]
    %v291 = vld [vmem:[#allocation3 + $0x268] sm:$0xff]
    %v292 = vld [vmem:[#allocation3 + $0x270] sm:$0xff]
    %v293 = vld [vmem:[#allocation3 + $0x278] sm:$0xff]
    %v294 = vld [vmem:[#allocation3 + $0x280] sm:$0xff]
    %v295 = vld [vmem:[#allocation3 + $0x288] sm:$0xff]
    %v296 = vld [vmem:[#allocation3 + $0x290] sm:$0xff]
    %v297 = vld [vmem:[#allocation3 + $0x298] sm:$0xff]
    %v298 = vld [vmem:[#allocation3 + $0x2a0] sm:$0xff]
    %v299 = vld [vmem:[#allocation3 + $0x2a8] sm:$0xff]
    %v300 = vld [vmem:[#allocation3 + $0x2b0] sm:$0xff]
    %v301 = vld [vmem:[#allocation3 + $0x2b8] sm:$0xff]
    %v302 = vld [vmem:[#allocation3 + $0x2c0] sm:$0xff]
    %v303 = vld [vmem:[#allocation3 + $0x2c8] sm:$0xff]
    %v304 = vld [vmem:[#allocation3 + $0x2d0] sm:$0xff]
    %v305 = vld [vmem:[#allocation3 + $0x2d8] sm:$0xff]
    %v306 = vld [vmem:[#allocation3 + $0x2e0] sm:$0xff]
    %v307 = vld [vmem:[#allocation3 + $0x2e8] sm:$0xff]
    %v308 = vld [vmem:[#allocation3 + $0x2f0] sm:$0xff]
    %v309 = vld [vmem:[#allocation3 + $0x2f8] sm:$0xff]
    %v310 = vld [vmem:[#allocation3 + $0x300] sm:$0xff]
    %v311 = vld [vmem:[#allocation3 + $0x308] sm:$0xff]
    %v312 = vld [vmem:[#allocation3 + $0x310] sm:$0xff]
    %v313 = vld [vmem:[#allocation3 + $0x318] sm:$0xff]
    %v314 = vld [vmem:[#allocation3 + $0x320] sm:$0xff]
    %v315 = vld [vmem:[#allocation3 + $0x328] sm:$0xff]
    %v316 = vld [vmem:[#allocation3 + $0x330] sm:$0xff]
    %v317 = vld [vmem:[#allocation3 + $0x338] sm:$0xff]
    %v318 = vld [vmem:[#allocation3 + $0x340] sm:$0xff]
    %v319 = vld [vmem:[#allocation3 + $0x348] sm:$0xff]
    %v320 = vld [vmem:[#allocation3 + $0x350] sm:$0xff]
    %v321 = vld [vmem:[#allocation3 + $0x358] sm:$0xff]
    %v322 = vld [vmem:[#allocation3 + $0x360] sm:$0xff]
    %v323 = vld [vmem:[#allocation3 + $0x368] sm:$0xff]
    %v324 = vld [vmem:[#allocation3 + $0x370] sm:$0xff]
    %v325 = vld [vmem:[#allocation3 + $0x378] sm:$0xff]
    %v326 = vld [vmem:[#allocation3 + $0x380] sm:$0xff]
    %v327 = vld [vmem:[#allocation3 + $0x388] sm:$0xff]
    %v328 = vld [vmem:[#allocation3 + $0x390] sm:$0xff]
    %v329 = vld [vmem:[#allocation3 + $0x398] sm:$0xff]
    %v330 = vld [vmem:[#allocation3 + $0x3a0] sm:$0xff]
    %v331 = vld [vmem:[#allocation3 + $0x3a8] sm:$0xff]
    %v332 = vld [vmem:[#allocation3 + $0x3b0] sm:$0xff]
    %v333 = vld [vmem:[#allocation3 + $0x3b8] sm:$0xff]
    %v334 = vld [vmem:[#allocation3 + $0x3c0] sm:$0xff]
    %v335 = vld [vmem:[#allocation3 + $0x3c8] sm:$0xff]
    %v336 = vld [vmem:[#allocation3 + $0x3d0] sm:$0xff]
    %v337 = vld [vmem:[#allocation3 + $0x3d8] sm:$0xff]
    %v338 = vld [vmem:[#allocation3 + $0x3e0] sm:$0xff]
    %v339 = vld [vmem:[#allocation3 + $0x3e8] sm:$0xff]
    %v340 = vld [vmem:[#allocation3 + $0x3f0] sm:$0xff]
    %v341 = vld [vmem:[#allocation3 + $0x3f8] sm:$0xff]
    %v342 = vld [vmem:[#allocation3 + $0x400] sm:$0xff]
    %v343 = vld [vmem:[#allocation3 + $0x408] sm:$0xff]
    %v344 = vld [vmem:[#allocation3 + $0x410] sm:$0xff]
    %v345 = vld [vmem:[#allocation3 + $0x418] sm:$0xff]
    %v346 = vld [vmem:[#allocation3 + $0x420] sm:$0xff]
    %v347 = vld [vmem:[#allocation3 + $0x428] sm:$0xff]
    %v348 = vld [vmem:[#allocation3 + $0x430] sm:$0xff]
    %v349 = vld [vmem:[#allocation3 + $0x438] sm:$0xff]
    %v350 = vld [vmem:[#allocation3 + $0x440] sm:$0xff]
    %v351 = vld [vmem:[#allocation3 + $0x448] sm:$0xff]
    %v352 = vld [vmem:[#allocation3 + $0x450] sm:$0xff]
    %v353 = vld [vmem:[#allocation3 + $0x458] sm:$0xff]
    %v354 = vld [vmem:[#allocation3 + $0x460] sm:$0xff]
    %v355 = vld [vmem:[#allocation3 + $0x468] sm:$0xff]
    %v356 = vld [vmem:[#allocation3 + $0x470] sm:$0xff]
    %v357 = vld [vmem:[#allocation3 + $0x478] sm:$0xff]
    %v358 = vld [vmem:[#allocation3 + $0x480] sm:$0xff]
    %v359 = vld [vmem:[#allocation3 + $0x488] sm:$0xff]
    %v360 = vld [vmem:[#allocation3 + $0x490] sm:$0xff]
    %v361 = vld [vmem:[#allocation3 + $0x498] sm:$0xff]
    %v362 = vld [vmem:[#allocation3 + $0x4a0] sm:$0xff]
    %v363 = vld [vmem:[#allocation3 + $0x4a8] sm:$0xff]
    %v364 = vld [vmem:[#allocation3 + $0x4b0] sm:$0xff]
    %v365 = vld [vmem:[#allocation3 + $0x4b8] sm:$0xff]
    %v366 = vld [vmem:[#allocation3 + $0x4c0] sm:$0xff]
    %v367 = vld [vmem:[#allocation3 + $0x4c8] sm:$0xff]
    %v368 = vld [vmem:[#allocation3 + $0x4d0] sm:$0xff]
    %v369 = vld [vmem:[#allocation3 + $0x4d8] sm:$0xff]
    %v370 = vld [vmem:[#allocation3 + $0x4e0] sm:$0xff]
    %v371 = vld [vmem:[#allocation3 + $0x4e8] sm:$0xff]
    %v372 = vld [vmem:[#allocation3 + $0x4f0] sm:$0xff]
    %v373 = vld [vmem:[#allocation3 + $0x4f8] sm:$0xff]
    %v374 = vld [vmem:[#allocation3 + $0x500] sm:$0xff]
    %v375 = vld [vmem:[#allocation3 + $0x508] sm:$0xff]
    %v376 = vld [vmem:[#allocation3 + $0x510] sm:$0xff]
    %v377 = vld [vmem:[#allocation3 + $0x518] sm:$0xff]
    %v378 = vld [vmem:[#allocation3 + $0x520] sm:$0xff]
    %v379 = vld [vmem:[#allocation3 + $0x528] sm:$0xff]
    %v380 = vld [vmem:[#allocation3 + $0x530] sm:$0xff]
    %v381 = vld [vmem:[#allocation3 + $0x538] sm:$0xff]
    %v382 = vld [vmem:[#allocation3 + $0x540] sm:$0xff]
    %v383 = vld [vmem:[#allocation3 + $0x548] sm:$0xff]
    %v384 = vld [vmem:[#allocation3 + $0x550] sm:$0xff]
    %v385 = vld [vmem:[#allocation3 + $0x558] sm:$0xff]
    %v386 = vld [vmem:[#allocation3 + $0x560] sm:$0xff]
    %v387 = vld [vmem:[#allocation3 + $0x568] sm:$0xff]
    %v388 = vld [vmem:[#allocation3 + $0x570] sm:$0xff]
    %v389 = vld [vmem:[#allocation3 + $0x578] sm:$0xff]
    %v390 = vld [vmem:[#allocation3 + $0x580] sm:$0xff]
    %v391 = vld [vmem:[#allocation3 + $0x588] sm:$0xff]
    %v392 = vld [vmem:[#allocation3 + $0x590] sm:$0xff]
    %v393 = vld [vmem:[#allocation3 + $0x598] sm:$0xff]
    %v394 = vld [vmem:[#allocation3 + $0x5a0] sm:$0xff]
    %v395 = vld [vmem:[#allocation3 + $0x5a8] sm:$0xff]
    %v396 = vld [vmem:[#allocation3 + $0x5b0] sm:$0xff]
    %v397 = vld [vmem:[#allocation3 + $0x5b8] sm:$0xff]
    %v398 = vld [vmem:[#allocation3 + $0x5c0] sm:$0xff]
    %v399 = vld [vmem:[#allocation3 + $0x5c8] sm:$0xff]
    %v400 = vld [vmem:[#allocation3 + $0x5d0] sm:$0xff]
    %v401 = vld [vmem:[#allocation3 + $0x5d8] sm:$0xff]
    %v402 = vld [vmem:[#allocation3 + $0x5e0] sm:$0xff]
    %v403 = vld [vmem:[#allocation3 + $0x5e8] sm:$0xff]
    %v404 = vld [vmem:[#allocation3 + $0x5f0] sm:$0xff]
    %v405 = vld [vmem:[#allocation3 + $0x5f8] sm:$0xff]
    %v406 = vld [vmem:[#allocation3 + $0x600] sm:$0xff]
    %v407 = vld [vmem:[#allocation3 + $0x608] sm:$0xff]
    %v408 = vld [vmem:[#allocation3 + $0x610] sm:$0xff]
    %v409 = vld [vmem:[#allocation3 + $0x618] sm:$0xff]
    %v410 = vld [vmem:[#allocation3 + $0x620] sm:$0xff]
    %v411 = vld [vmem:[#allocation3 + $0x628] sm:$0xff]
    %v412 = vld [vmem:[#allocation3 + $0x630] sm:$0xff]
    %v413 = vld [vmem:[#allocation3 + $0x638] sm:$0xff]
    %v414 = vld [vmem:[#allocation3 + $0x640] sm:$0xff]
    %v415 = vld [vmem:[#allocation3 + $0x648] sm:$0xff]
    %v416 = vld [vmem:[#allocation3 + $0x650] sm:$0xff]
    %v417 = vld [vmem:[#allocation3 + $0x658] sm:$0xff]
    %v418 = vld [vmem:[#allocation3 + $0x660] sm:$0xff]
    %v419 = vld [vmem:[#allocation3 + $0x668] sm:$0xff]
    %v420 = vld [vmem:[#allocation3 + $0x670] sm:$0xff]
    %v421 = vld [vmem:[#allocation3 + $0x678] sm:$0xff]
    %v422 = vld [vmem:[#allocation3 + $0x680] sm:$0xff]
    %v423 = vld [vmem:[#allocation3 + $0x688] sm:$0xff]
    %v424 = vld [vmem:[#allocation3 + $0x690] sm:$0xff]
    %v425 = vld [vmem:[#allocation3 + $0x698] sm:$0xff]
    %v426 = vld [vmem:[#allocation3 + $0x6a0] sm:$0xff]
    %v427 = vld [vmem:[#allocation3 + $0x6a8] sm:$0xff]
    %v428 = vld [vmem:[#allocation3 + $0x6b0] sm:$0xff]
    %v429 = vld [vmem:[#allocation3 + $0x6b8] sm:$0xff]
    %v430 = vld [vmem:[#allocation3 + $0x6c0] sm:$0xff]
    %v431 = vld [vmem:[#allocation3 + $0x6c8] sm:$0xff]
    %v432 = vld [vmem:[#allocation3 + $0x6d0] sm:$0xff]
    %v433 = vld [vmem:[#allocation3 + $0x6d8] sm:$0xff]
    %v434 = vld [vmem:[#allocation3 + $0x6e0] sm:$0xff]
    %v435 = vld [vmem:[#allocation3 + $0x6e8] sm:$0xff]
    %v436 = vld [vmem:[#allocation3 + $0x6f0] sm:$0xff]
    %v437 = vld [vmem:[#allocation3 + $0x6f8] sm:$0xff]
    %v438 = vld [vmem:[#allocation3 + $0x700] sm:$0xff]
    %v439 = vld [vmem:[#allocation3 + $0x708] sm:$0xff]
    %v440 = vld [vmem:[#allocation3 + $0x710] sm:$0xff]
    %v441 = vld [vmem:[#allocation3 + $0x718] sm:$0xff]
    %v442 = vld [vmem:[#allocation3 + $0x720] sm:$0xff]
    %v443 = vld [vmem:[#allocation3 + $0x728] sm:$0xff]
    %v444 = vld [vmem:[#allocation3 + $0x730] sm:$0xff]
    %v445 = vld [vmem:[#allocation3 + $0x738] sm:$0xff]
    %v446 = vld [vmem:[#allocation3 + $0x740] sm:$0xff]
    %v447 = vld [vmem:[#allocation3 + $0x748] sm:$0xff]
    %v448 = vld [vmem:[#allocation3 + $0x750] sm:$0xff]
    %v449 = vld [vmem:[#allocation3 + $0x758] sm:$0xff]
    %v450 = vld [vmem:[#allocation3 + $0x760] sm:$0xff]
    %v451 = vld [vmem:[#allocation3 + $0x768] sm:$0xff]
    %v452 = vld [vmem:[#allocation3 + $0x770] sm:$0xff]
    %v453 = vld [vmem:[#allocation3 + $0x778] sm:$0xff]
    %v454 = vld [vmem:[#allocation3 + $0x780] sm:$0xff]
    %v455 = vld [vmem:[#allocation3 + $0x788] sm:$0xff]
    %v456 = vld [vmem:[#allocation3 + $0x790] sm:$0xff]
    %v457 = vld [vmem:[#allocation3 + $0x798] sm:$0xff]
    %v458 = vld [vmem:[#allocation3 + $0x7a0] sm:$0xff]
    %v459 = vld [vmem:[#allocation3 + $0x7a8] sm:$0xff]
    %v460 = vld [vmem:[#allocation3 + $0x7b0] sm:$0xff]
    %v461 = vld [vmem:[#allocation3 + $0x7b8] sm:$0xff]
    %v462 = vld [vmem:[#allocation3 + $0x7c0] sm:$0xff]
    %v463 = vld [vmem:[#allocation3 + $0x7c8] sm:$0xff]
    %v464 = vld [vmem:[#allocation3 + $0x7d0] sm:$0xff]
    %v465 = vld [vmem:[#allocation3 + $0x7d8] sm:$0xff]
    %v466 = vld [vmem:[#allocation3 + $0x7e0] sm:$0xff]
    %v467 = vld [vmem:[#allocation3 + $0x7e8] sm:$0xff]
    %v468 = vld [vmem:[#allocation3 + $0x7f0] sm:$0xff]
    %v469 = vld [vmem:[#allocation3 + $0x7f8] sm:$0xff]
    %v470 = vld [vmem:[#allocation3 + $0x800] sm:$0xff]
    %v471 = vld [vmem:[#allocation3 + $0x808] sm:$0xff]
    %v472 = vld [vmem:[#allocation3 + $0x810] sm:$0xff]
    %v473 = vld [vmem:[#allocation3 + $0x818] sm:$0xff]
    %v474 = vld [vmem:[#allocation3 + $0x820] sm:$0xff]
    %v475 = vld [vmem:[#allocation3 + $0x828] sm:$0xff]
    %v476 = vld [vmem:[#allocation3 + $0x830] sm:$0xff]
    %v477 = vld [vmem:[#allocation3 + $0x838] sm:$0xff]
    %v478 = vld [vmem:[#allocation3 + $0x840] sm:$0xff]
    %v479 = vld [vmem:[#allocation3 + $0x848] sm:$0xff]
    %v480 = vld [vmem:[#allocation3 + $0x850] sm:$0xff]
    %v481 = vld [vmem:[#allocation3 + $0x858] sm:$0xff]
    %v482 = vld [vmem:[#allocation3 + $0x860] sm:$0xff]
    %v483 = vld [vmem:[#allocation3 + $0x868] sm:$0xff]
    %v484 = vld [vmem:[#allocation3 + $0x870] sm:$0xff]
    %v485 = vld [vmem:[#allocation3 + $0x878] sm:$0xff]
    %v486 = vld [vmem:[#allocation3 + $0x880] sm:$0xff]
    %v487 = vld [vmem:[#allocation3 + $0x888] sm:$0xff]
    %v488 = vld [vmem:[#allocation3 + $0x890] sm:$0xff]
    %v489 = vld [vmem:[#allocation3 + $0x898] sm:$0xff]
    %v490 = vld [vmem:[#allocation3 + $0x8a0] sm:$0xff]
    %v491 = vld [vmem:[#allocation3 + $0x8a8] sm:$0xff]
    %v492 = vld [vmem:[#allocation3 + $0x8b0] sm:$0xff]
    %v493 = vld [vmem:[#allocation3 + $0x8b8] sm:$0xff]
    %v494 = vld [vmem:[#allocation3 + $0x8c0] sm:$0xff]
    %v495 = vld [vmem:[#allocation3 + $0x8c8] sm:$0xff]
    %v496 = vld [vmem:[#allocation3 + $0x8d0] sm:$0xff]
    %v497 = vld [vmem:[#allocation3 + $0x8d8] sm:$0xff]
    %v498 = vld [vmem:[#allocation3 + $0x8e0] sm:$0xff]
    %v499 = vld [vmem:[#allocation3 + $0x8e8] sm:$0xff]
    %v500 = vld [vmem:[#allocation3 + $0x8f0] sm:$0xff]
    %v501 = vld [vmem:[#allocation3 + $0x8f8] sm:$0xff]
    %v502 = vld [vmem:[#allocation3 + $0x900] sm:$0xff]
    %v503 = vld [vmem:[#allocation3 + $0x908] sm:$0xff]
    %v504 = vld [vmem:[#allocation3 + $0x910] sm:$0xff]
    %v505 = vld [vmem:[#allocation3 + $0x918] sm:$0xff]
    %v506 = vld [vmem:[#allocation3 + $0x920] sm:$0xff]
    %v507 = vld [vmem:[#allocation3 + $0x928] sm:$0xff]
    %v508 = vld [vmem:[#allocation3 + $0x930] sm:$0xff]
    %v509 = vld [vmem:[#allocation3 + $0x938] sm:$0xff]
    %v510 = vld [vmem:[#allocation3 + $0x940] sm:$0xff]
    %v511 = vld [vmem:[#allocation3 + $0x948] sm:$0xff]
    %v512 = vld [vmem:[#allocation3 + $0x950] sm:$0xff]
    %v513 = vld [vmem:[#allocation3 + $0x958] sm:$0xff]
    %v514 = vld [vmem:[#allocation3 + $0x960] sm:$0xff]
    %v515 = vld [vmem:[#allocation3 + $0x968] sm:$0xff]
    %v516 = vld [vmem:[#allocation3 + $0x970] sm:$0xff]
    %v517 = vld [vmem:[#allocation3 + $0x978] sm:$0xff]
    %v518 = vld [vmem:[#allocation3 + $0x980] sm:$0xff]
    %v519 = vld [vmem:[#allocation3 + $0x988] sm:$0xff]
    %v520 = vld [vmem:[#allocation3 + $0x990] sm:$0xff]
    %v521 = vld [vmem:[#allocation3 + $0x998] sm:$0xff]
    %v522 = vld [vmem:[#allocation3 + $0x9a0] sm:$0xff]
    %v523 = vld [vmem:[#allocation3 + $0x9a8] sm:$0xff]
    %v524 = vld [vmem:[#allocation3 + $0x9b0] sm:$0xff]
    %v525 = vld [vmem:[#allocation3 + $0x9b8] sm:$0xff]
    %v526 = vld [vmem:[#allocation3 + $0x9c0] sm:$0xff]
    %v527 = vld [vmem:[#allocation3 + $0x9c8] sm:$0xff]
    %v528 = vld [vmem:[#allocation3 + $0x9d0] sm:$0xff]
    %v529 = vld [vmem:[#allocation3 + $0x9d8] sm:$0xff]
    %v530 = vld [vmem:[#allocation3 + $0x9e0] sm:$0xff]
    %v531 = vld [vmem:[#allocation3 + $0x9e8] sm:$0xff]
    %v532 = vld [vmem:[#allocation3 + $0x9f0] sm:$0xff]
    %v533 = vld [vmem:[#allocation3 + $0x9f8] sm:$0xff]
    %v534 = vld [vmem:[#allocation5] sm:$0xff]
    %v536 = vlaneseq
    %v537 = vshrl.u32 %v536, 7
    %v538 = vsub.s32 0, %v537
    %v539 = vrot.slane %v534, %v538
    %v540 = vlaneseq
    %v541 = vshrl.u32 %v540, 7
    %v542 = vsub.s32 1, %v541
    %v543 = vrot.slane %v534, %v542
    %v544 = vlaneseq
    %v545 = vshrl.u32 %v544, 7
    %v546 = vsub.s32 2, %v545
    %v547 = vrot.slane %v534, %v546
    %v548 = vlaneseq
    %v549 = vshrl.u32 %v548, 7
    %v550 = vsub.s32 3, %v549
    %v551 = vrot.slane %v534, %v550
    %v552 = vlaneseq
    %v553 = vshrl.u32 %v552, 7
    %v554 = vsub.s32 4, %v553
    %v555 = vrot.slane %v534, %v554
    %v556 = vlaneseq
    %v557 = vshrl.u32 %v556, 7
    %v558 = vsub.s32 5, %v557
    %v559 = vrot.slane %v534, %v558
    %v560 = vlaneseq
    %v561 = vshrl.u32 %v560, 7
    %v562 = vsub.s32 6, %v561
    %v563 = vrot.slane %v534, %v562
    %v564 = vlaneseq
    %v565 = vshrl.u32 %v564, 7
    %v566 = vsub.s32 7, %v565
    %v567 = vrot.slane %v534, %v566
    %v896 = vunpack.c.l.b16 %v214
    %v897 = vunpack.c.h.b16 %v214
    %v898 = vunpack.c.l.b16 %v215
    %v899 = vunpack.c.h.b16 %v215
    %v900 = vunpack.c.l.b16 %v216
    %v901 = vunpack.c.h.b16 %v216
    %v902 = vunpack.c.l.b16 %v217
    %v903 = vunpack.c.h.b16 %v217
    %v904 = vunpack.c.l.b16 %v218
    %v905 = vunpack.c.h.b16 %v218
    %v906 = vunpack.c.l.b16 %v219
    %v907 = vunpack.c.h.b16 %v219
    %v908 = vunpack.c.l.b16 %v220
    %v909 = vunpack.c.h.b16 %v220
    %v910 = vunpack.c.l.b16 %v221
    %v911 = vunpack.c.h.b16 %v221
    %v912 = vunpack.c.l.b16 %v222
    %v913 = vunpack.c.h.b16 %v222
    %v914 = vunpack.c.l.b16 %v223
    %v915 = vunpack.c.h.b16 %v223
    %v916 = vunpack.c.l.b16 %v224
    %v917 = vunpack.c.h.b16 %v224
    %v918 = vunpack.c.l.b16 %v225
    %v919 = vunpack.c.h.b16 %v225
    %v920 = vunpack.c.l.b16 %v226
    %v921 = vunpack.c.h.b16 %v226
    %v922 = vunpack.c.l.b16 %v227
    %v923 = vunpack.c.h.b16 %v227
    %v924 = vunpack.c.l.b16 %v228
    %v925 = vunpack.c.h.b16 %v228
    %v926 = vunpack.c.l.b16 %v229
    %v927 = vunpack.c.h.b16 %v229
    %v928 = vunpack.c.l.b16 %v230
    %v929 = vunpack.c.h.b16 %v230
    %v930 = vunpack.c.l.b16 %v231
    %v931 = vunpack.c.h.b16 %v231
    %v932 = vunpack.c.l.b16 %v232
    %v933 = vunpack.c.h.b16 %v232
    %v934 = vunpack.c.l.b16 %v233
    %v935 = vunpack.c.h.b16 %v233
    %v936 = vunpack.c.l.b16 %v234
    %v937 = vunpack.c.h.b16 %v234
    %v938 = vunpack.c.l.b16 %v235
    %v939 = vunpack.c.h.b16 %v235
    %v940 = vunpack.c.l.b16 %v236
    %v941 = vunpack.c.h.b16 %v236
    %v942 = vunpack.c.l.b16 %v237
    %v943 = vunpack.c.h.b16 %v237
    %v944 = vunpack.c.l.b16 %v238
    %v945 = vunpack.c.h.b16 %v238
    %v946 = vunpack.c.l.b16 %v239
    %v947 = vunpack.c.h.b16 %v239
    %v948 = vunpack.c.l.b16 %v240
    %v949 = vunpack.c.h.b16 %v240
    %v950 = vunpack.c.l.b16 %v241
    %v951 = vunpack.c.h.b16 %v241
    %v952 = vunpack.c.l.b16 %v242
    %v953 = vunpack.c.h.b16 %v242
    %v954 = vunpack.c.l.b16 %v243
    %v955 = vunpack.c.h.b16 %v243
    %v956 = vunpack.c.l.b16 %v244
    %v957 = vunpack.c.h.b16 %v244
    %v958 = vunpack.c.l.b16 %v245
    %v959 = vunpack.c.h.b16 %v245
    %v960 = vunpack.c.l.b16 %v246
    %v961 = vunpack.c.h.b16 %v246
    %v962 = vunpack.c.l.b16 %v247
    %v963 = vunpack.c.h.b16 %v247
    %v964 = vunpack.c.l.b16 %v248
    %v965 = vunpack.c.h.b16 %v248
    %v966 = vunpack.c.l.b16 %v249
    %v967 = vunpack.c.h.b16 %v249
    %v968 = vunpack.c.l.b16 %v250
    %v969 = vunpack.c.h.b16 %v250
    %v970 = vunpack.c.l.b16 %v251
    %v971 = vunpack.c.h.b16 %v251
    %v972 = vunpack.c.l.b16 %v252
    %v973 = vunpack.c.h.b16 %v252
    %v974 = vunpack.c.l.b16 %v253
    %v975 = vunpack.c.h.b16 %v253
    %v976 = vunpack.c.l.b16 %v254
    %v977 = vunpack.c.h.b16 %v254
    %v978 = vunpack.c.l.b16 %v255
    %v979 = vunpack.c.h.b16 %v255
    %v980 = vunpack.c.l.b16 %v256
    %v981 = vunpack.c.h.b16 %v256
    %v982 = vunpack.c.l.b16 %v257
    %v983 = vunpack.c.h.b16 %v257
    %v984 = vunpack.c.l.b16 %v258
    %v985 = vunpack.c.h.b16 %v258
    %v986 = vunpack.c.l.b16 %v259
    %v987 = vunpack.c.h.b16 %v259
    %v988 = vunpack.c.l.b16 %v260
    %v989 = vunpack.c.h.b16 %v260
    %v990 = vunpack.c.l.b16 %v261
    %v991 = vunpack.c.h.b16 %v261
    %v992 = vunpack.c.l.b16 %v262
    %v993 = vunpack.c.h.b16 %v262
    %v994 = vunpack.c.l.b16 %v263
    %v995 = vunpack.c.h.b16 %v263
    %v996 = vunpack.c.l.b16 %v264
    %v997 = vunpack.c.h.b16 %v264
    %v998 = vunpack.c.l.b16 %v265
    %v999 = vunpack.c.h.b16 %v265
    %v1000 = vunpack.c.l.b16 %v266
    %v1001 = vunpack.c.h.b16 %v266
    %v1002 = vunpack.c.l.b16 %v267
    %v1003 = vunpack.c.h.b16 %v267
    %v1004 = vunpack.c.l.b16 %v268
    %v1005 = vunpack.c.h.b16 %v268
    %v1006 = vunpack.c.l.b16 %v269
    %v1007 = vunpack.c.h.b16 %v269
    %v1008 = vunpack.c.l.b16 %v270
    %v1009 = vunpack.c.h.b16 %v270
    %v1010 = vunpack.c.l.b16 %v271
    %v1011 = vunpack.c.h.b16 %v271
    %v1012 = vunpack.c.l.b16 %v272
    %v1013 = vunpack.c.h.b16 %v272
    %v1014 = vunpack.c.l.b16 %v273
    %v1015 = vunpack.c.h.b16 %v273
    %v1016 = vunpack.c.l.b16 %v274
    %v1017 = vunpack.c.h.b16 %v274
    %v1018 = vunpack.c.l.b16 %v275
    %v1019 = vunpack.c.h.b16 %v275
    %v1020 = vunpack.c.l.b16 %v276
    %v1021 = vunpack.c.h.b16 %v276
    %v1022 = vunpack.c.l.b16 %v277
    %v1023 = vunpack.c.h.b16 %v277
    %v1024 = vunpack.c.l.b16 %v278
    %v1025 = vunpack.c.h.b16 %v278
    %v1026 = vunpack.c.l.b16 %v279
    %v1027 = vunpack.c.h.b16 %v279
    %v1028 = vunpack.c.l.b16 %v280
    %v1029 = vunpack.c.h.b16 %v280
    %v1030 = vunpack.c.l.b16 %v281
    %v1031 = vunpack.c.h.b16 %v281
    %v1032 = vunpack.c.l.b16 %v282
    %v1033 = vunpack.c.h.b16 %v282
    %v1034 = vunpack.c.l.b16 %v283
    %v1035 = vunpack.c.h.b16 %v283
    %v1036 = vunpack.c.l.b16 %v284
    %v1037 = vunpack.c.h.b16 %v284
    %v1038 = vunpack.c.l.b16 %v285
    %v1039 = vunpack.c.h.b16 %v285
    %v1040 = vunpack.c.l.b16 %v286
    %v1041 = vunpack.c.h.b16 %v286
    %v1042 = vunpack.c.l.b16 %v287
    %v1043 = vunpack.c.h.b16 %v287
    %v1044 = vunpack.c.l.b16 %v288
    %v1045 = vunpack.c.h.b16 %v288
    %v1046 = vunpack.c.l.b16 %v289
    %v1047 = vunpack.c.h.b16 %v289
    %v1048 = vunpack.c.l.b16 %v290
    %v1049 = vunpack.c.h.b16 %v290
    %v1050 = vunpack.c.l.b16 %v291
    %v1051 = vunpack.c.h.b16 %v291
    %v1052 = vunpack.c.l.b16 %v292
    %v1053 = vunpack.c.h.b16 %v292
    %v1054 = vunpack.c.l.b16 %v293
    %v1055 = vunpack.c.h.b16 %v293
    %v1056 = vunpack.c.l.b16 %v294
    %v1057 = vunpack.c.h.b16 %v294
    %v1058 = vunpack.c.l.b16 %v295
    %v1059 = vunpack.c.h.b16 %v295
    %v1060 = vunpack.c.l.b16 %v296
    %v1061 = vunpack.c.h.b16 %v296
    %v1062 = vunpack.c.l.b16 %v297
    %v1063 = vunpack.c.h.b16 %v297
    %v1064 = vunpack.c.l.b16 %v298
    %v1065 = vunpack.c.h.b16 %v298
    %v1066 = vunpack.c.l.b16 %v299
    %v1067 = vunpack.c.h.b16 %v299
    %v1068 = vunpack.c.l.b16 %v300
    %v1069 = vunpack.c.h.b16 %v300
    %v1070 = vunpack.c.l.b16 %v301
    %v1071 = vunpack.c.h.b16 %v301
    %v1072 = vunpack.c.l.b16 %v302
    %v1073 = vunpack.c.h.b16 %v302
    %v1074 = vunpack.c.l.b16 %v303
    %v1075 = vunpack.c.h.b16 %v303
    %v1076 = vunpack.c.l.b16 %v304
    %v1077 = vunpack.c.h.b16 %v304
    %v1078 = vunpack.c.l.b16 %v305
    %v1079 = vunpack.c.h.b16 %v305
    %v1080 = vunpack.c.l.b16 %v306
    %v1081 = vunpack.c.h.b16 %v306
    %v1082 = vunpack.c.l.b16 %v307
    %v1083 = vunpack.c.h.b16 %v307
    %v1084 = vunpack.c.l.b16 %v308
    %v1085 = vunpack.c.h.b16 %v308
    %v1086 = vunpack.c.l.b16 %v309
    %v1087 = vunpack.c.h.b16 %v309
    %v1088 = vunpack.c.l.b16 %v310
    %v1089 = vunpack.c.h.b16 %v310
    %v1090 = vunpack.c.l.b16 %v311
    %v1091 = vunpack.c.h.b16 %v311
    %v1092 = vunpack.c.l.b16 %v312
    %v1093 = vunpack.c.h.b16 %v312
    %v1094 = vunpack.c.l.b16 %v313
    %v1095 = vunpack.c.h.b16 %v313
    %v1096 = vunpack.c.l.b16 %v314
    %v1097 = vunpack.c.h.b16 %v314
    %v1098 = vunpack.c.l.b16 %v315
    %v1099 = vunpack.c.h.b16 %v315
    %v1100 = vunpack.c.l.b16 %v316
    %v1101 = vunpack.c.h.b16 %v316
    %v1102 = vunpack.c.l.b16 %v317
    %v1103 = vunpack.c.h.b16 %v317
    %v1104 = vunpack.c.l.b16 %v318
    %v1105 = vunpack.c.h.b16 %v318
    %v1106 = vunpack.c.l.b16 %v319
    %v1107 = vunpack.c.h.b16 %v319
    %v1108 = vunpack.c.l.b16 %v320
    %v1109 = vunpack.c.h.b16 %v320
    %v1110 = vunpack.c.l.b16 %v321
    %v1111 = vunpack.c.h.b16 %v321
    %v1112 = vunpack.c.l.b16 %v322
    %v1113 = vunpack.c.h.b16 %v322
    %v1114 = vunpack.c.l.b16 %v323
    %v1115 = vunpack.c.h.b16 %v323
    %v1116 = vunpack.c.l.b16 %v324
    %v1117 = vunpack.c.h.b16 %v324
    %v1118 = vunpack.c.l.b16 %v325
    %v1119 = vunpack.c.h.b16 %v325
    %v1120 = vunpack.c.l.b16 %v326
    %v1121 = vunpack.c.h.b16 %v326
    %v1122 = vunpack.c.l.b16 %v327
    %v1123 = vunpack.c.h.b16 %v327
    %v1124 = vunpack.c.l.b16 %v328
    %v1125 = vunpack.c.h.b16 %v328
    %v1126 = vunpack.c.l.b16 %v329
    %v1127 = vunpack.c.h.b16 %v329
    %v1128 = vunpack.c.l.b16 %v330
    %v1129 = vunpack.c.h.b16 %v330
    %v1130 = vunpack.c.l.b16 %v331
    %v1131 = vunpack.c.h.b16 %v331
    %v1132 = vunpack.c.l.b16 %v332
    %v1133 = vunpack.c.h.b16 %v332
    %v1134 = vunpack.c.l.b16 %v333
    %v1135 = vunpack.c.h.b16 %v333
    %v1136 = vunpack.c.l.b16 %v334
    %v1137 = vunpack.c.h.b16 %v334
    %v1138 = vunpack.c.l.b16 %v335
    %v1139 = vunpack.c.h.b16 %v335
    %v1140 = vunpack.c.l.b16 %v336
    %v1141 = vunpack.c.h.b16 %v336
    %v1142 = vunpack.c.l.b16 %v337
    %v1143 = vunpack.c.h.b16 %v337
    %v1144 = vunpack.c.l.b16 %v338
    %v1145 = vunpack.c.h.b16 %v338
    %v1146 = vunpack.c.l.b16 %v339
    %v1147 = vunpack.c.h.b16 %v339
    %v1148 = vunpack.c.l.b16 %v340
    %v1149 = vunpack.c.h.b16 %v340
    %v1150 = vunpack.c.l.b16 %v341
    %v1151 = vunpack.c.h.b16 %v341
    %v1152 = vunpack.c.l.b16 %v342
    %v1153 = vunpack.c.h.b16 %v342
    %v1154 = vunpack.c.l.b16 %v343
    %v1155 = vunpack.c.h.b16 %v343
    %v1156 = vunpack.c.l.b16 %v344
    %v1157 = vunpack.c.h.b16 %v344
    %v1158 = vunpack.c.l.b16 %v345
    %v1159 = vunpack.c.h.b16 %v345
    %v1160 = vunpack.c.l.b16 %v346
    %v1161 = vunpack.c.h.b16 %v346
    %v1162 = vunpack.c.l.b16 %v347
    %v1163 = vunpack.c.h.b16 %v347
    %v1164 = vunpack.c.l.b16 %v348
    %v1165 = vunpack.c.h.b16 %v348
    %v1166 = vunpack.c.l.b16 %v349
    %v1167 = vunpack.c.h.b16 %v349
    %v1168 = vunpack.c.l.b16 %v350
    %v1169 = vunpack.c.h.b16 %v350
    %v1170 = vunpack.c.l.b16 %v351
    %v1171 = vunpack.c.h.b16 %v351
    %v1172 = vunpack.c.l.b16 %v352
    %v1173 = vunpack.c.h.b16 %v352
    %v1174 = vunpack.c.l.b16 %v353
    %v1175 = vunpack.c.h.b16 %v353
    %v1176 = vunpack.c.l.b16 %v354
    %v1177 = vunpack.c.h.b16 %v354
    %v1178 = vunpack.c.l.b16 %v355
    %v1179 = vunpack.c.h.b16 %v355
    %v1180 = vunpack.c.l.b16 %v356
    %v1181 = vunpack.c.h.b16 %v356
    %v1182 = vunpack.c.l.b16 %v357
    %v1183 = vunpack.c.h.b16 %v357
    %v1184 = vunpack.c.l.b16 %v358
    %v1185 = vunpack.c.h.b16 %v358
    %v1186 = vunpack.c.l.b16 %v359
    %v1187 = vunpack.c.h.b16 %v359
    %v1188 = vunpack.c.l.b16 %v360
    %v1189 = vunpack.c.h.b16 %v360
    %v1190 = vunpack.c.l.b16 %v361
    %v1191 = vunpack.c.h.b16 %v361
    %v1192 = vunpack.c.l.b16 %v362
    %v1193 = vunpack.c.h.b16 %v362
    %v1194 = vunpack.c.l.b16 %v363
    %v1195 = vunpack.c.h.b16 %v363
    %v1196 = vunpack.c.l.b16 %v364
    %v1197 = vunpack.c.h.b16 %v364
    %v1198 = vunpack.c.l.b16 %v365
    %v1199 = vunpack.c.h.b16 %v365
    %v1200 = vunpack.c.l.b16 %v366
    %v1201 = vunpack.c.h.b16 %v366
    %v1202 = vunpack.c.l.b16 %v367
    %v1203 = vunpack.c.h.b16 %v367
    %v1204 = vunpack.c.l.b16 %v368
    %v1205 = vunpack.c.h.b16 %v368
    %v1206 = vunpack.c.l.b16 %v369
    %v1207 = vunpack.c.h.b16 %v369
    %v1208 = vunpack.c.l.b16 %v370
    %v1209 = vunpack.c.h.b16 %v370
    %v1210 = vunpack.c.l.b16 %v371
    %v1211 = vunpack.c.h.b16 %v371
    %v1212 = vunpack.c.l.b16 %v372
    %v1213 = vunpack.c.h.b16 %v372
    %v1214 = vunpack.c.l.b16 %v373
    %v1215 = vunpack.c.h.b16 %v373
    %v1216 = vunpack.c.l.b16 %v374
    %v1217 = vunpack.c.h.b16 %v374
    %v1218 = vunpack.c.l.b16 %v375
    %v1219 = vunpack.c.h.b16 %v375
    %v1220 = vunpack.c.l.b16 %v376
    %v1221 = vunpack.c.h.b16 %v376
    %v1222 = vunpack.c.l.b16 %v377
    %v1223 = vunpack.c.h.b16 %v377
    %v1224 = vunpack.c.l.b16 %v378
    %v1225 = vunpack.c.h.b16 %v378
    %v1226 = vunpack.c.l.b16 %v379
    %v1227 = vunpack.c.h.b16 %v379
    %v1228 = vunpack.c.l.b16 %v380
    %v1229 = vunpack.c.h.b16 %v380
    %v1230 = vunpack.c.l.b16 %v381
    %v1231 = vunpack.c.h.b16 %v381
    %v1232 = vunpack.c.l.b16 %v382
    %v1233 = vunpack.c.h.b16 %v382
    %v1234 = vunpack.c.l.b16 %v383
    %v1235 = vunpack.c.h.b16 %v383
    %v1236 = vunpack.c.l.b16 %v384
    %v1237 = vunpack.c.h.b16 %v384
    %v1238 = vunpack.c.l.b16 %v385
    %v1239 = vunpack.c.h.b16 %v385
    %v1240 = vunpack.c.l.b16 %v386
    %v1241 = vunpack.c.h.b16 %v386
    %v1242 = vunpack.c.l.b16 %v387
    %v1243 = vunpack.c.h.b16 %v387
    %v1244 = vunpack.c.l.b16 %v388
    %v1245 = vunpack.c.h.b16 %v388
    %v1246 = vunpack.c.l.b16 %v389
    %v1247 = vunpack.c.h.b16 %v389
    %v1248 = vunpack.c.l.b16 %v390
    %v1249 = vunpack.c.h.b16 %v390
    %v1250 = vunpack.c.l.b16 %v391
    %v1251 = vunpack.c.h.b16 %v391
    %v1252 = vunpack.c.l.b16 %v392
    %v1253 = vunpack.c.h.b16 %v392
    %v1254 = vunpack.c.l.b16 %v393
    %v1255 = vunpack.c.h.b16 %v393
    %v1256 = vunpack.c.l.b16 %v394
    %v1257 = vunpack.c.h.b16 %v394
    %v1258 = vunpack.c.l.b16 %v395
    %v1259 = vunpack.c.h.b16 %v395
    %v1260 = vunpack.c.l.b16 %v396
    %v1261 = vunpack.c.h.b16 %v396
    %v1262 = vunpack.c.l.b16 %v397
    %v1263 = vunpack.c.h.b16 %v397
    %v1264 = vunpack.c.l.b16 %v398
    %v1265 = vunpack.c.h.b16 %v398
    %v1266 = vunpack.c.l.b16 %v399
    %v1267 = vunpack.c.h.b16 %v399
    %v1268 = vunpack.c.l.b16 %v400
    %v1269 = vunpack.c.h.b16 %v400
    %v1270 = vunpack.c.l.b16 %v401
    %v1271 = vunpack.c.h.b16 %v401
    %v1272 = vunpack.c.l.b16 %v402
    %v1273 = vunpack.c.h.b16 %v402
    %v1274 = vunpack.c.l.b16 %v403
    %v1275 = vunpack.c.h.b16 %v403
    %v1276 = vunpack.c.l.b16 %v404
    %v1277 = vunpack.c.h.b16 %v404
    %v1278 = vunpack.c.l.b16 %v405
    %v1279 = vunpack.c.h.b16 %v405
    %v1280 = vunpack.c.l.b16 %v406
    %v1281 = vunpack.c.h.b16 %v406
    %v1282 = vunpack.c.l.b16 %v407
    %v1283 = vunpack.c.h.b16 %v407
    %v1284 = vunpack.c.l.b16 %v408
    %v1285 = vunpack.c.h.b16 %v408
    %v1286 = vunpack.c.l.b16 %v409
    %v1287 = vunpack.c.h.b16 %v409
    %v1288 = vunpack.c.l.b16 %v410
    %v1289 = vunpack.c.h.b16 %v410
    %v1290 = vunpack.c.l.b16 %v411
    %v1291 = vunpack.c.h.b16 %v411
    %v1292 = vunpack.c.l.b16 %v412
    %v1293 = vunpack.c.h.b16 %v412
    %v1294 = vunpack.c.l.b16 %v413
    %v1295 = vunpack.c.h.b16 %v413
    %v1296 = vunpack.c.l.b16 %v414
    %v1297 = vunpack.c.h.b16 %v414
    %v1298 = vunpack.c.l.b16 %v415
    %v1299 = vunpack.c.h.b16 %v415
    %v1300 = vunpack.c.l.b16 %v416
    %v1301 = vunpack.c.h.b16 %v416
    %v1302 = vunpack.c.l.b16 %v417
    %v1303 = vunpack.c.h.b16 %v417
    %v1304 = vunpack.c.l.b16 %v418
    %v1305 = vunpack.c.h.b16 %v418
    %v1306 = vunpack.c.l.b16 %v419
    %v1307 = vunpack.c.h.b16 %v419
    %v1308 = vunpack.c.l.b16 %v420
    %v1309 = vunpack.c.h.b16 %v420
    %v1310 = vunpack.c.l.b16 %v421
    %v1311 = vunpack.c.h.b16 %v421
    %v1312 = vunpack.c.l.b16 %v422
    %v1313 = vunpack.c.h.b16 %v422
    %v1314 = vunpack.c.l.b16 %v423
    %v1315 = vunpack.c.h.b16 %v423
    %v1316 = vunpack.c.l.b16 %v424
    %v1317 = vunpack.c.h.b16 %v424
    %v1318 = vunpack.c.l.b16 %v425
    %v1319 = vunpack.c.h.b16 %v425
    %v1320 = vunpack.c.l.b16 %v426
    %v1321 = vunpack.c.h.b16 %v426
    %v1322 = vunpack.c.l.b16 %v427
    %v1323 = vunpack.c.h.b16 %v427
    %v1324 = vunpack.c.l.b16 %v428
    %v1325 = vunpack.c.h.b16 %v428
    %v1326 = vunpack.c.l.b16 %v429
    %v1327 = vunpack.c.h.b16 %v429
    %v1328 = vunpack.c.l.b16 %v430
    %v1329 = vunpack.c.h.b16 %v430
    %v1330 = vunpack.c.l.b16 %v431
    %v1331 = vunpack.c.h.b16 %v431
    %v1332 = vunpack.c.l.b16 %v432
    %v1333 = vunpack.c.h.b16 %v432
    %v1334 = vunpack.c.l.b16 %v433
    %v1335 = vunpack.c.h.b16 %v433
    %v1336 = vunpack.c.l.b16 %v434
    %v1337 = vunpack.c.h.b16 %v434
    %v1338 = vunpack.c.l.b16 %v435
    %v1339 = vunpack.c.h.b16 %v435
    %v1340 = vunpack.c.l.b16 %v436
    %v1341 = vunpack.c.h.b16 %v436
    %v1342 = vunpack.c.l.b16 %v437
    %v1343 = vunpack.c.h.b16 %v437
    %v1344 = vunpack.c.l.b16 %v438
    %v1345 = vunpack.c.h.b16 %v438
    %v1346 = vunpack.c.l.b16 %v439
    %v1347 = vunpack.c.h.b16 %v439
    %v1348 = vunpack.c.l.b16 %v440
    %v1349 = vunpack.c.h.b16 %v440
    %v1350 = vunpack.c.l.b16 %v441
    %v1351 = vunpack.c.h.b16 %v441
    %v1352 = vunpack.c.l.b16 %v442
    %v1353 = vunpack.c.h.b16 %v442
    %v1354 = vunpack.c.l.b16 %v443
    %v1355 = vunpack.c.h.b16 %v443
    %v1356 = vunpack.c.l.b16 %v444
    %v1357 = vunpack.c.h.b16 %v444
    %v1358 = vunpack.c.l.b16 %v445
    %v1359 = vunpack.c.h.b16 %v445
    %v1360 = vunpack.c.l.b16 %v446
    %v1361 = vunpack.c.h.b16 %v446
    %v1362 = vunpack.c.l.b16 %v447
    %v1363 = vunpack.c.h.b16 %v447
    %v1364 = vunpack.c.l.b16 %v448
    %v1365 = vunpack.c.h.b16 %v448
    %v1366 = vunpack.c.l.b16 %v449
    %v1367 = vunpack.c.h.b16 %v449
    %v1368 = vunpack.c.l.b16 %v450
    %v1369 = vunpack.c.h.b16 %v450
    %v1370 = vunpack.c.l.b16 %v451
    %v1371 = vunpack.c.h.b16 %v451
    %v1372 = vunpack.c.l.b16 %v452
    %v1373 = vunpack.c.h.b16 %v452
    %v1374 = vunpack.c.l.b16 %v453
    %v1375 = vunpack.c.h.b16 %v453
    %v1376 = vunpack.c.l.b16 %v454
    %v1377 = vunpack.c.h.b16 %v454
    %v1378 = vunpack.c.l.b16 %v455
    %v1379 = vunpack.c.h.b16 %v455
    %v1380 = vunpack.c.l.b16 %v456
    %v1381 = vunpack.c.h.b16 %v456
    %v1382 = vunpack.c.l.b16 %v457
    %v1383 = vunpack.c.h.b16 %v457
    %v1384 = vunpack.c.l.b16 %v458
    %v1385 = vunpack.c.h.b16 %v458
    %v1386 = vunpack.c.l.b16 %v459
    %v1387 = vunpack.c.h.b16 %v459
    %v1388 = vunpack.c.l.b16 %v460
    %v1389 = vunpack.c.h.b16 %v460
    %v1390 = vunpack.c.l.b16 %v461
    %v1391 = vunpack.c.h.b16 %v461
    %v1392 = vunpack.c.l.b16 %v462
    %v1393 = vunpack.c.h.b16 %v462
    %v1394 = vunpack.c.l.b16 %v463
    %v1395 = vunpack.c.h.b16 %v463
    %v1396 = vunpack.c.l.b16 %v464
    %v1397 = vunpack.c.h.b16 %v464
    %v1398 = vunpack.c.l.b16 %v465
    %v1399 = vunpack.c.h.b16 %v465
    %v1400 = vunpack.c.l.b16 %v466
    %v1401 = vunpack.c.h.b16 %v466
    %v1402 = vunpack.c.l.b16 %v467
    %v1403 = vunpack.c.h.b16 %v467
    %v1404 = vunpack.c.l.b16 %v468
    %v1405 = vunpack.c.h.b16 %v468
    %v1406 = vunpack.c.l.b16 %v469
    %v1407 = vunpack.c.h.b16 %v469
    %v1408 = vunpack.c.l.b16 %v470
    %v1409 = vunpack.c.h.b16 %v470
    %v1410 = vunpack.c.l.b16 %v471
    %v1411 = vunpack.c.h.b16 %v471
    %v1412 = vunpack.c.l.b16 %v472
    %v1413 = vunpack.c.h.b16 %v472
    %v1414 = vunpack.c.l.b16 %v473
    %v1415 = vunpack.c.h.b16 %v473
    %v1416 = vunpack.c.l.b16 %v474
    %v1417 = vunpack.c.h.b16 %v474
    %v1418 = vunpack.c.l.b16 %v475
    %v1419 = vunpack.c.h.b16 %v475
    %v1420 = vunpack.c.l.b16 %v476
    %v1421 = vunpack.c.h.b16 %v476
    %v1422 = vunpack.c.l.b16 %v477
    %v1423 = vunpack.c.h.b16 %v477
    %v1424 = vunpack.c.l.b16 %v478
    %v1425 = vunpack.c.h.b16 %v478
    %v1426 = vunpack.c.l.b16 %v479
    %v1427 = vunpack.c.h.b16 %v479
    %v1428 = vunpack.c.l.b16 %v480
    %v1429 = vunpack.c.h.b16 %v480
    %v1430 = vunpack.c.l.b16 %v481
    %v1431 = vunpack.c.h.b16 %v481
    %v1432 = vunpack.c.l.b16 %v482
    %v1433 = vunpack.c.h.b16 %v482
    %v1434 = vunpack.c.l.b16 %v483
    %v1435 = vunpack.c.h.b16 %v483
    %v1436 = vunpack.c.l.b16 %v484
    %v1437 = vunpack.c.h.b16 %v484
    %v1438 = vunpack.c.l.b16 %v485
    %v1439 = vunpack.c.h.b16 %v485
    %v1440 = vunpack.c.l.b16 %v486
    %v1441 = vunpack.c.h.b16 %v486
    %v1442 = vunpack.c.l.b16 %v487
    %v1443 = vunpack.c.h.b16 %v487
    %v1444 = vunpack.c.l.b16 %v488
    %v1445 = vunpack.c.h.b16 %v488
    %v1446 = vunpack.c.l.b16 %v489
    %v1447 = vunpack.c.h.b16 %v489
    %v1448 = vunpack.c.l.b16 %v490
    %v1449 = vunpack.c.h.b16 %v490
    %v1450 = vunpack.c.l.b16 %v491
    %v1451 = vunpack.c.h.b16 %v491
    %v1452 = vunpack.c.l.b16 %v492
    %v1453 = vunpack.c.h.b16 %v492
    %v1454 = vunpack.c.l.b16 %v493
    %v1455 = vunpack.c.h.b16 %v493
    %v1456 = vunpack.c.l.b16 %v494
    %v1457 = vunpack.c.h.b16 %v494
    %v1458 = vunpack.c.l.b16 %v495
    %v1459 = vunpack.c.h.b16 %v495
    %v1460 = vunpack.c.l.b16 %v496
    %v1461 = vunpack.c.h.b16 %v496
    %v1462 = vunpack.c.l.b16 %v497
    %v1463 = vunpack.c.h.b16 %v497
    %v1464 = vunpack.c.l.b16 %v498
    %v1465 = vunpack.c.h.b16 %v498
    %v1466 = vunpack.c.l.b16 %v499
    %v1467 = vunpack.c.h.b16 %v499
    %v1468 = vunpack.c.l.b16 %v500
    %v1469 = vunpack.c.h.b16 %v500
    %v1470 = vunpack.c.l.b16 %v501
    %v1471 = vunpack.c.h.b16 %v501
    %v1472 = vunpack.c.l.b16 %v502
    %v1473 = vunpack.c.h.b16 %v502
    %v1474 = vunpack.c.l.b16 %v503
    %v1475 = vunpack.c.h.b16 %v503
    %v1476 = vunpack.c.l.b16 %v504
    %v1477 = vunpack.c.h.b16 %v504
    %v1478 = vunpack.c.l.b16 %v505
    %v1479 = vunpack.c.h.b16 %v505
    %v1480 = vunpack.c.l.b16 %v506
    %v1481 = vunpack.c.h.b16 %v506
    %v1482 = vunpack.c.l.b16 %v507
    %v1483 = vunpack.c.h.b16 %v507
    %v1484 = vunpack.c.l.b16 %v508
    %v1485 = vunpack.c.h.b16 %v508
    %v1486 = vunpack.c.l.b16 %v509
    %v1487 = vunpack.c.h.b16 %v509
    %v1488 = vunpack.c.l.b16 %v510
    %v1489 = vunpack.c.h.b16 %v510
    %v1490 = vunpack.c.l.b16 %v511
    %v1491 = vunpack.c.h.b16 %v511
    %v1492 = vunpack.c.l.b16 %v512
    %v1493 = vunpack.c.h.b16 %v512
    %v1494 = vunpack.c.l.b16 %v513
    %v1495 = vunpack.c.h.b16 %v513
    %v1496 = vunpack.c.l.b16 %v514
    %v1497 = vunpack.c.h.b16 %v514
    %v1498 = vunpack.c.l.b16 %v515
    %v1499 = vunpack.c.h.b16 %v515
    %v1500 = vunpack.c.l.b16 %v516
    %v1501 = vunpack.c.h.b16 %v516
    %v1502 = vunpack.c.l.b16 %v517
    %v1503 = vunpack.c.h.b16 %v517
    %v1504 = vunpack.c.l.b16 %v518
    %v1505 = vunpack.c.h.b16 %v518
    %v1506 = vunpack.c.l.b16 %v519
    %v1507 = vunpack.c.h.b16 %v519
    %v1508 = vunpack.c.l.b16 %v520
    %v1509 = vunpack.c.h.b16 %v520
    %v1510 = vunpack.c.l.b16 %v521
    %v1511 = vunpack.c.h.b16 %v521
    %v1512 = vunpack.c.l.b16 %v522
    %v1513 = vunpack.c.h.b16 %v522
    %v1514 = vunpack.c.l.b16 %v523
    %v1515 = vunpack.c.h.b16 %v523
    %v1516 = vunpack.c.l.b16 %v524
    %v1517 = vunpack.c.h.b16 %v524
    %v1518 = vunpack.c.l.b16 %v525
    %v1519 = vunpack.c.h.b16 %v525
    %v1520 = vunpack.c.l.b16 %v526
    %v1521 = vunpack.c.h.b16 %v526
    %v1522 = vunpack.c.l.b16 %v527
    %v1523 = vunpack.c.h.b16 %v527
    %v1524 = vunpack.c.l.b16 %v528
    %v1525 = vunpack.c.h.b16 %v528
    %v1526 = vunpack.c.l.b16 %v529
    %v1527 = vunpack.c.h.b16 %v529
    %v1528 = vunpack.c.l.b16 %v530
    %v1529 = vunpack.c.h.b16 %v530
    %v1530 = vunpack.c.l.b16 %v531
    %v1531 = vunpack.c.h.b16 %v531
    %v1532 = vunpack.c.l.b16 %v532
    %v1533 = vunpack.c.h.b16 %v532
    %v1534 = vunpack.c.l.b16 %v533
    %v1535 = vunpack.c.h.b16 %v533
    %v1536 = vpack.c.b16 %v904, %v896
    %v1537 = vpack.c.b16 %v905, %v897
    %v1538 = vpack.c.b16 %v906, %v898
    %v1539 = vpack.c.b16 %v907, %v899
    %v1540 = vpack.c.b16 %v908, %v900
    %v1541 = vpack.c.b16 %v909, %v901
    %v1542 = vpack.c.b16 %v910, %v902
    %v1543 = vpack.c.b16 %v911, %v903
    %v1544 = vpack.c.b16 %v920, %v912
    %v1545 = vpack.c.b16 %v921, %v913
    %v1546 = vpack.c.b16 %v922, %v914
    %v1547 = vpack.c.b16 %v923, %v915
    %v1548 = vpack.c.b16 %v924, %v916
    %v1549 = vpack.c.b16 %v925, %v917
    %v1550 = vpack.c.b16 %v926, %v918
    %v1551 = vpack.c.b16 %v927, %v919
    %v1552 = vpack.c.b16 %v936, %v928
    %v1553 = vpack.c.b16 %v937, %v929
    %v1554 = vpack.c.b16 %v938, %v930
    %v1555 = vpack.c.b16 %v939, %v931
    %v1556 = vpack.c.b16 %v940, %v932
    %v1557 = vpack.c.b16 %v941, %v933
    %v1558 = vpack.c.b16 %v942, %v934
    %v1559 = vpack.c.b16 %v943, %v935
    %v1560 = vpack.c.b16 %v952, %v944
    %v1561 = vpack.c.b16 %v953, %v945
    %v1562 = vpack.c.b16 %v954, %v946
    %v1563 = vpack.c.b16 %v955, %v947
    %v1564 = vpack.c.b16 %v956, %v948
    %v1565 = vpack.c.b16 %v957, %v949
    %v1566 = vpack.c.b16 %v958, %v950
    %v1567 = vpack.c.b16 %v959, %v951
    %v1568 = vpack.c.b16 %v968, %v960
    %v1569 = vpack.c.b16 %v969, %v961
    %v1570 = vpack.c.b16 %v970, %v962
    %v1571 = vpack.c.b16 %v971, %v963
    %v1572 = vpack.c.b16 %v972, %v964
    %v1573 = vpack.c.b16 %v973, %v965
    %v1574 = vpack.c.b16 %v974, %v966
    %v1575 = vpack.c.b16 %v975, %v967
    %v1576 = vpack.c.b16 %v984, %v976
    %v1577 = vpack.c.b16 %v985, %v977
    %v1578 = vpack.c.b16 %v986, %v978
    %v1579 = vpack.c.b16 %v987, %v979
    %v1580 = vpack.c.b16 %v988, %v980
    %v1581 = vpack.c.b16 %v989, %v981
    %v1582 = vpack.c.b16 %v990, %v982
    %v1583 = vpack.c.b16 %v991, %v983
    %v1584 = vpack.c.b16 %v1000, %v992
    %v1585 = vpack.c.b16 %v1001, %v993
    %v1586 = vpack.c.b16 %v1002, %v994
    %v1587 = vpack.c.b16 %v1003, %v995
    %v1588 = vpack.c.b16 %v1004, %v996
    %v1589 = vpack.c.b16 %v1005, %v997
    %v1590 = vpack.c.b16 %v1006, %v998
    %v1591 = vpack.c.b16 %v1007, %v999
    %v1592 = vpack.c.b16 %v1016, %v1008
    %v1593 = vpack.c.b16 %v1017, %v1009
    %v1594 = vpack.c.b16 %v1018, %v1010
    %v1595 = vpack.c.b16 %v1019, %v1011
    %v1596 = vpack.c.b16 %v1020, %v1012
    %v1597 = vpack.c.b16 %v1021, %v1013
    %v1598 = vpack.c.b16 %v1022, %v1014
    %v1599 = vpack.c.b16 %v1023, %v1015
    %v1600 = vpack.c.b16 %v1032, %v1024
    %v1601 = vpack.c.b16 %v1033, %v1025
    %v1602 = vpack.c.b16 %v1034, %v1026
    %v1603 = vpack.c.b16 %v1035, %v1027
    %v1604 = vpack.c.b16 %v1036, %v1028
    %v1605 = vpack.c.b16 %v1037, %v1029
    %v1606 = vpack.c.b16 %v1038, %v1030
    %v1607 = vpack.c.b16 %v1039, %v1031
    %v1608 = vpack.c.b16 %v1048, %v1040
    %v1609 = vpack.c.b16 %v1049, %v1041
    %v1610 = vpack.c.b16 %v1050, %v1042
    %v1611 = vpack.c.b16 %v1051, %v1043
    %v1612 = vpack.c.b16 %v1052, %v1044
    %v1613 = vpack.c.b16 %v1053, %v1045
    %v1614 = vpack.c.b16 %v1054, %v1046
    %v1615 = vpack.c.b16 %v1055, %v1047
    %v1616 = vpack.c.b16 %v1064, %v1056
    %v1617 = vpack.c.b16 %v1065, %v1057
    %v1618 = vpack.c.b16 %v1066, %v1058
    %v1619 = vpack.c.b16 %v1067, %v1059
    %v1620 = vpack.c.b16 %v1068, %v1060
    %v1621 = vpack.c.b16 %v1069, %v1061
    %v1622 = vpack.c.b16 %v1070, %v1062
    %v1623 = vpack.c.b16 %v1071, %v1063
    %v1624 = vpack.c.b16 %v1080, %v1072
    %v1625 = vpack.c.b16 %v1081, %v1073
    %v1626 = vpack.c.b16 %v1082, %v1074
    %v1627 = vpack.c.b16 %v1083, %v1075
    %v1628 = vpack.c.b16 %v1084, %v1076
    %v1629 = vpack.c.b16 %v1085, %v1077
    %v1630 = vpack.c.b16 %v1086, %v1078
    %v1631 = vpack.c.b16 %v1087, %v1079
    %v1632 = vpack.c.b16 %v1096, %v1088
    %v1633 = vpack.c.b16 %v1097, %v1089
    %v1634 = vpack.c.b16 %v1098, %v1090
    %v1635 = vpack.c.b16 %v1099, %v1091
    %v1636 = vpack.c.b16 %v1100, %v1092
    %v1637 = vpack.c.b16 %v1101, %v1093
    %v1638 = vpack.c.b16 %v1102, %v1094
    %v1639 = vpack.c.b16 %v1103, %v1095
    %v1640 = vpack.c.b16 %v1112, %v1104
    %v1641 = vpack.c.b16 %v1113, %v1105
    %v1642 = vpack.c.b16 %v1114, %v1106
    %v1643 = vpack.c.b16 %v1115, %v1107
    %v1644 = vpack.c.b16 %v1116, %v1108
    %v1645 = vpack.c.b16 %v1117, %v1109
    %v1646 = vpack.c.b16 %v1118, %v1110
    %v1647 = vpack.c.b16 %v1119, %v1111
    %v1648 = vpack.c.b16 %v1128, %v1120
    %v1649 = vpack.c.b16 %v1129, %v1121
    %v1650 = vpack.c.b16 %v1130, %v1122
    %v1651 = vpack.c.b16 %v1131, %v1123
    %v1652 = vpack.c.b16 %v1132, %v1124
    %v1653 = vpack.c.b16 %v1133, %v1125
    %v1654 = vpack.c.b16 %v1134, %v1126
    %v1655 = vpack.c.b16 %v1135, %v1127
    %v1656 = vpack.c.b16 %v1144, %v1136
    %v1657 = vpack.c.b16 %v1145, %v1137
    %v1658 = vpack.c.b16 %v1146, %v1138
    %v1659 = vpack.c.b16 %v1147, %v1139
    %v1660 = vpack.c.b16 %v1148, %v1140
    %v1661 = vpack.c.b16 %v1149, %v1141
    %v1662 = vpack.c.b16 %v1150, %v1142
    %v1663 = vpack.c.b16 %v1151, %v1143
    %v1664 = vpack.c.b16 %v1160, %v1152
    %v1665 = vpack.c.b16 %v1161, %v1153
    %v1666 = vpack.c.b16 %v1162, %v1154
    %v1667 = vpack.c.b16 %v1163, %v1155
    %v1668 = vpack.c.b16 %v1164, %v1156
    %v1669 = vpack.c.b16 %v1165, %v1157
    %v1670 = vpack.c.b16 %v1166, %v1158
    %v1671 = vpack.c.b16 %v1167, %v1159
    %v1672 = vpack.c.b16 %v1176, %v1168
    %v1673 = vpack.c.b16 %v1177, %v1169
    %v1674 = vpack.c.b16 %v1178, %v1170
    %v1675 = vpack.c.b16 %v1179, %v1171
    %v1676 = vpack.c.b16 %v1180, %v1172
    %v1677 = vpack.c.b16 %v1181, %v1173
    %v1678 = vpack.c.b16 %v1182, %v1174
    %v1679 = vpack.c.b16 %v1183, %v1175
    %v1680 = vpack.c.b16 %v1192, %v1184
    %v1681 = vpack.c.b16 %v1193, %v1185
    %v1682 = vpack.c.b16 %v1194, %v1186
    %v1683 = vpack.c.b16 %v1195, %v1187
    %v1684 = vpack.c.b16 %v1196, %v1188
    %v1685 = vpack.c.b16 %v1197, %v1189
    %v1686 = vpack.c.b16 %v1198, %v1190
    %v1687 = vpack.c.b16 %v1199, %v1191
    %v1688 = vpack.c.b16 %v1208, %v1200
    %v1689 = vpack.c.b16 %v1209, %v1201
    %v1690 = vpack.c.b16 %v1210, %v1202
    %v1691 = vpack.c.b16 %v1211, %v1203
    %v1692 = vpack.c.b16 %v1212, %v1204
    %v1693 = vpack.c.b16 %v1213, %v1205
    %v1694 = vpack.c.b16 %v1214, %v1206
    %v1695 = vpack.c.b16 %v1215, %v1207
    %v1696 = vpack.c.b16 %v1224, %v1216
    %v1697 = vpack.c.b16 %v1225, %v1217
    %v1698 = vpack.c.b16 %v1226, %v1218
    %v1699 = vpack.c.b16 %v1227, %v1219
    %v1700 = vpack.c.b16 %v1228, %v1220
    %v1701 = vpack.c.b16 %v1229, %v1221
    %v1702 = vpack.c.b16 %v1230, %v1222
    %v1703 = vpack.c.b16 %v1231, %v1223
    %v1704 = vpack.c.b16 %v1240, %v1232
    %v1705 = vpack.c.b16 %v1241, %v1233
    %v1706 = vpack.c.b16 %v1242, %v1234
    %v1707 = vpack.c.b16 %v1243, %v1235
    %v1708 = vpack.c.b16 %v1244, %v1236
    %v1709 = vpack.c.b16 %v1245, %v1237
    %v1710 = vpack.c.b16 %v1246, %v1238
    %v1711 = vpack.c.b16 %v1247, %v1239
    %v1712 = vpack.c.b16 %v1256, %v1248
    %v1713 = vpack.c.b16 %v1257, %v1249
    %v1714 = vpack.c.b16 %v1258, %v1250
    %v1715 = vpack.c.b16 %v1259, %v1251
    %v1716 = vpack.c.b16 %v1260, %v1252
    %v1717 = vpack.c.b16 %v1261, %v1253
    %v1718 = vpack.c.b16 %v1262, %v1254
    %v1719 = vpack.c.b16 %v1263, %v1255
    %v1720 = vpack.c.b16 %v1272, %v1264
    %v1721 = vpack.c.b16 %v1273, %v1265
    %v1722 = vpack.c.b16 %v1274, %v1266
    %v1723 = vpack.c.b16 %v1275, %v1267
    %v1724 = vpack.c.b16 %v1276, %v1268
    %v1725 = vpack.c.b16 %v1277, %v1269
    %v1726 = vpack.c.b16 %v1278, %v1270
    %v1727 = vpack.c.b16 %v1279, %v1271
    %v1728 = vpack.c.b16 %v1288, %v1280
    %v1729 = vpack.c.b16 %v1289, %v1281
    %v1730 = vpack.c.b16 %v1290, %v1282
    %v1731 = vpack.c.b16 %v1291, %v1283
    %v1732 = vpack.c.b16 %v1292, %v1284
    %v1733 = vpack.c.b16 %v1293, %v1285
    %v1734 = vpack.c.b16 %v1294, %v1286
    %v1735 = vpack.c.b16 %v1295, %v1287
    %v1736 = vpack.c.b16 %v1304, %v1296
    %v1737 = vpack.c.b16 %v1305, %v1297
    %v1738 = vpack.c.b16 %v1306, %v1298
    %v1739 = vpack.c.b16 %v1307, %v1299
    %v1740 = vpack.c.b16 %v1308, %v1300
    %v1741 = vpack.c.b16 %v1309, %v1301
    %v1742 = vpack.c.b16 %v1310, %v1302
    %v1743 = vpack.c.b16 %v1311, %v1303
    %v1744 = vpack.c.b16 %v1320, %v1312
    %v1745 = vpack.c.b16 %v1321, %v1313
    %v1746 = vpack.c.b16 %v1322, %v1314
    %v1747 = vpack.c.b16 %v1323, %v1315
    %v1748 = vpack.c.b16 %v1324, %v1316
    %v1749 = vpack.c.b16 %v1325, %v1317
    %v1750 = vpack.c.b16 %v1326, %v1318
    %v1751 = vpack.c.b16 %v1327, %v1319
    %v1752 = vpack.c.b16 %v1336, %v1328
    %v1753 = vpack.c.b16 %v1337, %v1329
    %v1754 = vpack.c.b16 %v1338, %v1330
    %v1755 = vpack.c.b16 %v1339, %v1331
    %v1756 = vpack.c.b16 %v1340, %v1332
    %v1757 = vpack.c.b16 %v1341, %v1333
    %v1758 = vpack.c.b16 %v1342, %v1334
    %v1759 = vpack.c.b16 %v1343, %v1335
    %v1760 = vpack.c.b16 %v1352, %v1344
    %v1761 = vpack.c.b16 %v1353, %v1345
    %v1762 = vpack.c.b16 %v1354, %v1346
    %v1763 = vpack.c.b16 %v1355, %v1347
    %v1764 = vpack.c.b16 %v1356, %v1348
    %v1765 = vpack.c.b16 %v1357, %v1349
    %v1766 = vpack.c.b16 %v1358, %v1350
    %v1767 = vpack.c.b16 %v1359, %v1351
    %v1768 = vpack.c.b16 %v1368, %v1360
    %v1769 = vpack.c.b16 %v1369, %v1361
    %v1770 = vpack.c.b16 %v1370, %v1362
    %v1771 = vpack.c.b16 %v1371, %v1363
    %v1772 = vpack.c.b16 %v1372, %v1364
    %v1773 = vpack.c.b16 %v1373, %v1365
    %v1774 = vpack.c.b16 %v1374, %v1366
    %v1775 = vpack.c.b16 %v1375, %v1367
    %v1776 = vpack.c.b16 %v1384, %v1376
    %v1777 = vpack.c.b16 %v1385, %v1377
    %v1778 = vpack.c.b16 %v1386, %v1378
    %v1779 = vpack.c.b16 %v1387, %v1379
    %v1780 = vpack.c.b16 %v1388, %v1380
    %v1781 = vpack.c.b16 %v1389, %v1381
    %v1782 = vpack.c.b16 %v1390, %v1382
    %v1783 = vpack.c.b16 %v1391, %v1383
    %v1784 = vpack.c.b16 %v1400, %v1392
    %v1785 = vpack.c.b16 %v1401, %v1393
    %v1786 = vpack.c.b16 %v1402, %v1394
    %v1787 = vpack.c.b16 %v1403, %v1395
    %v1788 = vpack.c.b16 %v1404, %v1396
    %v1789 = vpack.c.b16 %v1405, %v1397
    %v1790 = vpack.c.b16 %v1406, %v1398
    %v1791 = vpack.c.b16 %v1407, %v1399
    %v1792 = vpack.c.b16 %v1416, %v1408
    %v1793 = vpack.c.b16 %v1417, %v1409
    %v1794 = vpack.c.b16 %v1418, %v1410
    %v1795 = vpack.c.b16 %v1419, %v1411
    %v1796 = vpack.c.b16 %v1420, %v1412
    %v1797 = vpack.c.b16 %v1421, %v1413
    %v1798 = vpack.c.b16 %v1422, %v1414
    %v1799 = vpack.c.b16 %v1423, %v1415
    %v1800 = vpack.c.b16 %v1432, %v1424
    %v1801 = vpack.c.b16 %v1433, %v1425
    %v1802 = vpack.c.b16 %v1434, %v1426
    %v1803 = vpack.c.b16 %v1435, %v1427
    %v1804 = vpack.c.b16 %v1436, %v1428
    %v1805 = vpack.c.b16 %v1437, %v1429
    %v1806 = vpack.c.b16 %v1438, %v1430
    %v1807 = vpack.c.b16 %v1439, %v1431
    %v1808 = vpack.c.b16 %v1448, %v1440
    %v1809 = vpack.c.b16 %v1449, %v1441
    %v1810 = vpack.c.b16 %v1450, %v1442
    %v1811 = vpack.c.b16 %v1451, %v1443
    %v1812 = vpack.c.b16 %v1452, %v1444
    %v1813 = vpack.c.b16 %v1453, %v1445
    %v1814 = vpack.c.b16 %v1454, %v1446
    %v1815 = vpack.c.b16 %v1455, %v1447
    %v1816 = vpack.c.b16 %v1464, %v1456
    %v1817 = vpack.c.b16 %v1465, %v1457
    %v1818 = vpack.c.b16 %v1466, %v1458
    %v1819 = vpack.c.b16 %v1467, %v1459
    %v1820 = vpack.c.b16 %v1468, %v1460
    %v1821 = vpack.c.b16 %v1469, %v1461
    %v1822 = vpack.c.b16 %v1470, %v1462
    %v1823 = vpack.c.b16 %v1471, %v1463
    %v1824 = vpack.c.b16 %v1480, %v1472
    %v1825 = vpack.c.b16 %v1481, %v1473
    %v1826 = vpack.c.b16 %v1482, %v1474
    %v1827 = vpack.c.b16 %v1483, %v1475
    %v1828 = vpack.c.b16 %v1484, %v1476
    %v1829 = vpack.c.b16 %v1485, %v1477
    %v1830 = vpack.c.b16 %v1486, %v1478
    %v1831 = vpack.c.b16 %v1487, %v1479
    %v1832 = vpack.c.b16 %v1496, %v1488
    %v1833 = vpack.c.b16 %v1497, %v1489
    %v1834 = vpack.c.b16 %v1498, %v1490
    %v1835 = vpack.c.b16 %v1499, %v1491
    %v1836 = vpack.c.b16 %v1500, %v1492
    %v1837 = vpack.c.b16 %v1501, %v1493
    %v1838 = vpack.c.b16 %v1502, %v1494
    %v1839 = vpack.c.b16 %v1503, %v1495
    %v1840 = vpack.c.b16 %v1512, %v1504
    %v1841 = vpack.c.b16 %v1513, %v1505
    %v1842 = vpack.c.b16 %v1514, %v1506
    %v1843 = vpack.c.b16 %v1515, %v1507
    %v1844 = vpack.c.b16 %v1516, %v1508
    %v1845 = vpack.c.b16 %v1517, %v1509
    %v1846 = vpack.c.b16 %v1518, %v1510
    %v1847 = vpack.c.b16 %v1519, %v1511
    %v1848 = vpack.c.b16 %v1528, %v1520
    %v1849 = vpack.c.b16 %v1529, %v1521
    %v1850 = vpack.c.b16 %v1530, %v1522
    %v1851 = vpack.c.b16 %v1531, %v1523
    %v1852 = vpack.c.b16 %v1532, %v1524
    %v1853 = vpack.c.b16 %v1533, %v1525
    %v1854 = vpack.c.b16 %v1534, %v1526
    %v1855 = vpack.c.b16 %v1535, %v1527
    %2176 = vmatprep.subr.bf16.mxu0 %v1537
    %2177 = vmatpush1.bf16.msra.mxu0 %v1536
    %2178 = vmatprep.subr.bf16.mxu0 %v1545
    %2179 = vmatpush1.bf16.msra.mxu0 %v1544
    %2180 = vmatprep.subr.bf16.mxu0 %v1553
    %2181 = vmatpush1.bf16.msra.mxu0 %v1552
    %2182 = vmatprep.subr.bf16.mxu0 %v1561
    %2183 = vmatpush1.bf16.msra.mxu0 %v1560
    %2184 = vmatprep.subr.bf16.mxu0 %v1569
    %2185 = vmatpush1.bf16.msra.mxu0 %v1568
    %2186 = vmatprep.subr.bf16.mxu0 %v1577
    %2187 = vmatpush1.bf16.msra.mxu0 %v1576
    %2188 = vmatprep.subr.bf16.mxu0 %v1585
    %2189 = vmatpush1.bf16.msra.mxu0 %v1584
    %2190 = vmatprep.subr.bf16.mxu0 %v1593
    %2191 = vmatpush1.bf16.msra.mxu0 %v1592
    %2192 = vmatprep.subr.bf16.mxu0 %v1601
    %2193 = vmatpush1.bf16.msra.mxu0 %v1600
    %2194 = vmatprep.subr.bf16.mxu0 %v1609
    %2195 = vmatpush1.bf16.msra.mxu0 %v1608
    %2196 = vmatprep.subr.bf16.mxu0 %v1617
    %2197 = vmatpush1.bf16.msra.mxu0 %v1616
    %2198 = vmatprep.subr.bf16.mxu0 %v1625
    %2199 = vmatpush1.bf16.msra.mxu0 %v1624
    %2200 = vmatprep.subr.bf16.mxu0 %v1633
    %2201 = vmatpush1.bf16.msra.mxu0 %v1632
    %2202 = vmatprep.subr.bf16.mxu0 %v1641
    %2203 = vmatpush1.bf16.msra.mxu0 %v1640
    %2204 = vmatprep.subr.bf16.mxu0 %v1649
    %2205 = vmatpush1.bf16.msra.mxu0 %v1648
    %2206 = vmatprep.subr.bf16.mxu0 %v1657
    %2207 = vmatpush1.bf16.msra.mxu0 %v1656
    %2208 = vmatprep.mubr.bf16.mxu0 %v205
    %2209 = vmatmul.mubr.bf16.gmra.mrb[0].mxu0 %v204
    %v2210 = vpop.f32.mrb[0].mxu0
    %v2211 = vadd.f32 %v539, %v2210
    %v2212 = vpop.f32.mrb[0].mxu0
    %v2213 = vadd.f32 %v543, %v2212
    %v2214 = vpop.f32.mrb[0].mxu0
    %v2215 = vpop.f32.mrb[0].mxu0
    %2216 = vdwg.mxu0
    %2217 = vmatprep.subr.bf16.mxu0 %v1665
    %2218 = vmatpush1.bf16.msra.mxu0 %v1664
    %2219 = vmatprep.subr.bf16.mxu0 %v1673
    %2220 = vmatpush1.bf16.msra.mxu0 %v1672
    %2221 = vmatprep.subr.bf16.mxu0 %v1681
    %2222 = vmatpush1.bf16.msra.mxu0 %v1680
    %2223 = vmatprep.subr.bf16.mxu0 %v1689
    %2224 = vmatpush1.bf16.msra.mxu0 %v1688
    %2225 = vmatprep.subr.bf16.mxu0 %v1697
    %2226 = vmatpush1.bf16.msra.mxu0 %v1696
    %2227 = vmatprep.subr.bf16.mxu0 %v1705
    %2228 = vmatpush1.bf16.msra.mxu0 %v1704
    %2229 = vmatprep.subr.bf16.mxu0 %v1713
    %2230 = vmatpush1.bf16.msra.mxu0 %v1712
    %2231 = vmatprep.subr.bf16.mxu0 %v1721
    %2232 = vmatpush1.bf16.msra.mxu0 %v1720
    %2233 = vmatprep.subr.bf16.mxu0 %v1729
    %2234 = vmatpush1.bf16.msra.mxu0 %v1728
    %2235 = vmatprep.subr.bf16.mxu0 %v1737
    %2236 = vmatpush1.bf16.msra.mxu0 %v1736
    %2237 = vmatprep.subr.bf16.mxu0 %v1745
    %2238 = vmatpush1.bf16.msra.mxu0 %v1744
    %2239 = vmatprep.subr.bf16.mxu0 %v1753
    %2240 = vmatpush1.bf16.msra.mxu0 %v1752
    %2241 = vmatprep.subr.bf16.mxu0 %v1761
    %2242 = vmatpush1.bf16.msra.mxu0 %v1760
    %2243 = vmatprep.subr.bf16.mxu0 %v1769
    %2244 = vmatpush1.bf16.msra.mxu0 %v1768
    %2245 = vmatprep.subr.bf16.mxu0 %v1777
    %2246 = vmatpush1.bf16.msra.mxu0 %v1776
    %2247 = vmatprep.subr.bf16.mxu0 %v1785
    %2248 = vmatpush1.bf16.msra.mxu0 %v1784
    %2249 = vmatprep.mubr.bf16.mxu0 %v207
    %2250 = vmatmul.mubr.bf16.gmra.mrb[0].mxu0 %v206
    %v2251 = vpop.f32.mrb[0].mxu0
    %v2252 = vadd.f32 %v2211, %v2251
    %v2253 = vpop.f32.mrb[0].mxu0
    %v2254 = vadd.f32 %v2213, %v2253
    %v2255 = vpop.f32.mrb[0].mxu0
    %v2256 = vpop.f32.mrb[0].mxu0
    %2257 = vdwg.mxu0
    %2258 = vmatprep.subr.bf16.mxu0 %v1793
    %2259 = vmatpush1.bf16.msra.mxu0 %v1792
    %2260 = vmatprep.subr.bf16.mxu0 %v1801
    %2261 = vmatpush1.bf16.msra.mxu0 %v1800
    %2262 = vmatprep.subr.bf16.mxu0 %v1809
    %2263 = vmatpush1.bf16.msra.mxu0 %v1808
    %2264 = vmatprep.subr.bf16.mxu0 %v1817
    %2265 = vmatpush1.bf16.msra.mxu0 %v1816
    %2266 = vmatprep.subr.bf16.mxu0 %v1825
    %2267 = vmatpush1.bf16.msra.mxu0 %v1824
    %2268 = vmatprep.subr.bf16.mxu0 %v1833
    %2269 = vmatpush1.bf16.msra.mxu0 %v1832
    %2270 = vmatprep.subr.bf16.mxu0 %v1841
    %2271 = vmatpush1.bf16.msra.mxu0 %v1840
    %2272 = vmatprep.subr.bf16.mxu0 %v1849
    %2273 = vmatpush1.bf16.msra.mxu0 %v1848
    %2274 = vmatprep.subr.bf16.mxu0 0
    %2275 = vmatpush1.bf16.msra.mxu0 0
    %2276 = vmatprep.subr.bf16.mxu0 0
    %2277 = vmatpush1.bf16.msra.mxu0 0
    %2278 = vmatprep.subr.bf16.mxu0 0
    %2279 = vmatpush1.bf16.msra.mxu0 0
    %2280 = vmatprep.subr.bf16.mxu0 0
    %2281 = vmatpush1.bf16.msra.mxu0 0
    %2282 = vmatprep.subr.bf16.mxu0 0
    %2283 = vmatpush1.bf16.msra.mxu0 0
    %2284 = vmatprep.subr.bf16.mxu0 0
    %2285 = vmatpush1.bf16.msra.mxu0 0
    %2286 = vmatprep.subr.bf16.mxu0 0
    %2287 = vmatpush1.bf16.msra.mxu0 0
    %2288 = vmatprep.subr.bf16.mxu0 0
    %2289 = vmatpush1.bf16.msra.mxu0 0
    %2290 = vmatprep.mubr.bf16.mxu0 0
    %2291 = vmatmul.mubr.bf16.gmra.mrb[0].mxu0 %v208
    %v2292 = vpop.f32.mrb[0].mxu0
    %v2293 = vadd.f32 %v2252, %v2292
    %v2294 = vpop.f32.mrb[0].mxu0
    %v2295 = vadd.f32 %v2254, %v2294
    %v2296 = vpop.f32.mrb[0].mxu0
    %v2297 = vpop.f32.mrb[0].mxu0
    %2298 = vdwg.mxu0
    %2299 = vmatprep.subr.bf16.mxu0 %v1539
    %2300 = vmatpush1.bf16.msra.mxu0 %v1538
    %2301 = vmatprep.subr.bf16.mxu0 %v1547
    %2302 = vmatpush1.bf16.msra.mxu0 %v1546
    %2303 = vmatprep.subr.bf16.mxu0 %v1555
    %2304 = vmatpush1.bf16.msra.mxu0 %v1554
    %2305 = vmatprep.subr.bf16.mxu0 %v1563
    %2306 = vmatpush1.bf16.msra.mxu0 %v1562
    %2307 = vmatprep.subr.bf16.mxu0 %v1571
    %2308 = vmatpush1.bf16.msra.mxu0 %v1570
    %2309 = vmatprep.subr.bf16.mxu0 %v1579
    %2310 = vmatpush1.bf16.msra.mxu0 %v1578
    %2311 = vmatprep.subr.bf16.mxu0 %v1587
    %2312 = vmatpush1.bf16.msra.mxu0 %v1586
    %2313 = vmatprep.subr.bf16.mxu0 %v1595
    %2314 = vmatpush1.bf16.msra.mxu0 %v1594
    %2315 = vmatprep.subr.bf16.mxu0 %v1603
    %2316 = vmatpush1.bf16.msra.mxu0 %v1602
    %2317 = vmatprep.subr.bf16.mxu0 %v1611
    %2318 = vmatpush1.bf16.msra.mxu0 %v1610
    %2319 = vmatprep.subr.bf16.mxu0 %v1619
    %2320 = vmatpush1.bf16.msra.mxu0 %v1618
    %2321 = vmatprep.subr.bf16.mxu0 %v1627
    %2322 = vmatpush1.bf16.msra.mxu0 %v1626
    %2323 = vmatprep.subr.bf16.mxu0 %v1635
    %2324 = vmatpush1.bf16.msra.mxu0 %v1634
    %2325 = vmatprep.subr.bf16.mxu0 %v1643
    %2326 = vmatpush1.bf16.msra.mxu0 %v1642
    %2327 = vmatprep.subr.bf16.mxu0 %v1651
    %2328 = vmatpush1.bf16.msra.mxu0 %v1650
    %2329 = vmatprep.subr.bf16.mxu0 %v1659
    %2330 = vmatpush1.bf16.msra.mxu0 %v1658
    %2331 = vmatprep.mubr.bf16.mxu0 %v205
    %2332 = vmatmul.mubr.bf16.gmra.mrb[0].mxu0 %v204
    %v2333 = vpop.f32.mrb[0].mxu0
    %v2334 = vadd.f32 %v547, %v2333
    %v2335 = vpop.f32.mrb[0].mxu0
    %v2336 = vadd.f32 %v551, %v2335
    %v2337 = vpop.f32.mrb[0].mxu0
    %v2338 = vpop.f32.mrb[0].mxu0
    %2339 = vdwg.mxu0
    %2340 = vmatprep.subr.bf16.mxu0 %v1667
    %2341 = vmatpush1.bf16.msra.mxu0 %v1666
    %2342 = vmatprep.subr.bf16.mxu0 %v1675
    %2343 = vmatpush1.bf16.msra.mxu0 %v1674
    %2344 = vmatprep.subr.bf16.mxu0 %v1683
    %2345 = vmatpush1.bf16.msra.mxu0 %v1682
    %2346 = vmatprep.subr.bf16.mxu0 %v1691
    %2347 = vmatpush1.bf16.msra.mxu0 %v1690
    %2348 = vmatprep.subr.bf16.mxu0 %v1699
    %2349 = vmatpush1.bf16.msra.mxu0 %v1698
    %2350 = vmatprep.subr.bf16.mxu0 %v1707
    %2351 = vmatpush1.bf16.msra.mxu0 %v1706
    %2352 = vmatprep.subr.bf16.mxu0 %v1715
    %2353 = vmatpush1.bf16.msra.mxu0 %v1714
    %2354 = vmatprep.subr.bf16.mxu0 %v1723
    %2355 = vmatpush1.bf16.msra.mxu0 %v1722
    %2356 = vmatprep.subr.bf16.mxu0 %v1731
    %2357 = vmatpush1.bf16.msra.mxu0 %v1730
    %2358 = vmatprep.subr.bf16.mxu0 %v1739
    %2359 = vmatpush1.bf16.msra.mxu0 %v1738
    %2360 = vmatprep.subr.bf16.mxu0 %v1747
    %2361 = vmatpush1.bf16.msra.mxu0 %v1746
    %2362 = vmatprep.subr.bf16.mxu0 %v1755
    %2363 = vmatpush1.bf16.msra.mxu0 %v1754
    %2364 = vmatprep.subr.bf16.mxu0 %v1763
    %2365 = vmatpush1.bf16.msra.mxu0 %v1762
    %2366 = vmatprep.subr.bf16.mxu0 %v1771
    %2367 = vmatpush1.bf16.msra.mxu0 %v1770
    %2368 = vmatprep.subr.bf16.mxu0 %v1779
    %2369 = vmatpush1.bf16.msra.mxu0 %v1778
    %2370 = vmatprep.subr.bf16.mxu0 %v1787
    %2371 = vmatpush1.bf16.msra.mxu0 %v1786
    %2372 = vmatprep.mubr.bf16.mxu0 %v207
    %2373 = vmatmul.mubr.bf16.gmra.mrb[0].mxu0 %v206
    %v2374 = vpop.f32.mrb[0].mxu0
    %v2375 = vadd.f32 %v2334, %v2374
    %v2376 = vpop.f32.mrb[0].mxu0
    %v2377 = vadd.f32 %v2336, %v2376
    %v2378 = vpop.f32.mrb[0].mxu0
    %v2379 = vpop.f32.mrb[0].mxu0
    %2380 = vdwg.mxu0
    %2381 = vmatprep.subr.bf16.mxu0 %v1795
    %2382 = vmatpush1.bf16.msra.mxu0 %v1794
    %2383 = vmatprep.subr.bf16.mxu0 %v1803
    %2384 = vmatpush1.bf16.msra.mxu0 %v1802
    %2385 = vmatprep.subr.bf16.mxu0 %v1811
    %2386 = vmatpush1.bf16.msra.mxu0 %v1810
    %2387 = vmatprep.subr.bf16.mxu0 %v1819
    %2388 = vmatpush1.bf16.msra.mxu0 %v1818
    %2389 = vmatprep.subr.bf16.mxu0 %v1827
    %2390 = vmatpush1.bf16.msra.mxu0 %v1826
    %2391 = vmatprep.subr.bf16.mxu0 %v1835
    %2392 = vmatpush1.bf16.msra.mxu0 %v1834
    %2393 = vmatprep.subr.bf16.mxu0 %v1843
    %2394 = vmatpush1.bf16.msra.mxu0 %v1842
    %2395 = vmatprep.subr.bf16.mxu0 %v1851
    %2396 = vmatpush1.bf16.msra.mxu0 %v1850
    %2397 = vmatprep.subr.bf16.mxu0 0
    %2398 = vmatpush1.bf16.msra.mxu0 0
    %2399 = vmatprep.subr.bf16.mxu0 0
    %2400 = vmatpush1.bf16.msra.mxu0 0
    %2401 = vmatprep.subr.bf16.mxu0 0
    %2402 = vmatpush1.bf16.msra.mxu0 0
    %2403 = vmatprep.subr.bf16.mxu0 0
    %2404 = vmatpush1.bf16.msra.mxu0 0
    %2405 = vmatprep.subr.bf16.mxu0 0
    %2406 = vmatpush1.bf16.msra.mxu0 0
    %2407 = vmatprep.subr.bf16.mxu0 0
    %2408 = vmatpush1.bf16.msra.mxu0 0
    %2409 = vmatprep.subr.bf16.mxu0 0
    %2410 = vmatpush1.bf16.msra.mxu0 0
    %2411 = vmatprep.subr.bf16.mxu0 0
    %2412 = vmatpush1.bf16.msra.mxu0 0
    %2413 = vmatprep.mubr.bf16.mxu0 0
    %2414 = vmatmul.mubr.bf16.gmra.mrb[0].mxu0 %v208
    %v2415 = vpop.f32.mrb[0].mxu0
    %v2416 = vadd.f32 %v2375, %v2415
    %v2417 = vpop.f32.mrb[0].mxu0
    %v2418 = vadd.f32 %v2377, %v2417
    %v2419 = vpop.f32.mrb[0].mxu0
    %v2420 = vpop.f32.mrb[0].mxu0
    %2421 = vdwg.mxu0
    %2422 = vmatprep.subr.bf16.mxu0 %v1541
    %2423 = vmatpush1.bf16.msra.mxu0 %v1540
    %2424 = vmatprep.subr.bf16.mxu0 %v1549
    %2425 = vmatpush1.bf16.msra.mxu0 %v1548
    %2426 = vmatprep.subr.bf16.mxu0 %v1557
    %2427 = vmatpush1.bf16.msra.mxu0 %v1556
    %2428 = vmatprep.subr.bf16.mxu0 %v1565
    %2429 = vmatpush1.bf16.msra.mxu0 %v1564
    %2430 = vmatprep.subr.bf16.mxu0 %v1573
    %2431 = vmatpush1.bf16.msra.mxu0 %v1572
    %2432 = vmatprep.subr.bf16.mxu0 %v1581
    %2433 = vmatpush1.bf16.msra.mxu0 %v1580
    %2434 = vmatprep.subr.bf16.mxu0 %v1589
    %2435 = vmatpush1.bf16.msra.mxu0 %v1588
    %2436 = vmatprep.subr.bf16.mxu0 %v1597
    %2437 = vmatpush1.bf16.msra.mxu0 %v1596
    %2438 = vmatprep.subr.bf16.mxu0 %v1605
    %2439 = vmatpush1.bf16.msra.mxu0 %v1604
    %2440 = vmatprep.subr.bf16.mxu0 %v1613
    %2441 = vmatpush1.bf16.msra.mxu0 %v1612
    %2442 = vmatprep.subr.bf16.mxu0 %v1621
    %2443 = vmatpush1.bf16.msra.mxu0 %v1620
    %2444 = vmatprep.subr.bf16.mxu0 %v1629
    %2445 = vmatpush1.bf16.msra.mxu0 %v1628
    %2446 = vmatprep.subr.bf16.mxu0 %v1637
    %2447 = vmatpush1.bf16.msra.mxu0 %v1636
    %2448 = vmatprep.subr.bf16.mxu0 %v1645
    %2449 = vmatpush1.bf16.msra.mxu0 %v1644
    %2450 = vmatprep.subr.bf16.mxu0 %v1653
    %2451 = vmatpush1.bf16.msra.mxu0 %v1652
    %2452 = vmatprep.subr.bf16.mxu0 %v1661
    %2453 = vmatpush1.bf16.msra.mxu0 %v1660
    %2454 = vmatprep.mubr.bf16.mxu0 %v205
    %2455 = vmatmul.mubr.bf16.gmra.mrb[0].mxu0 %v204
    %v2456 = vpop.f32.mrb[0].mxu0
    %v2457 = vadd.f32 %v555, %v2456
    %v2458 = vpop.f32.mrb[0].mxu0
    %v2459 = vadd.f32 %v559, %v2458
    %v2460 = vpop.f32.mrb[0].mxu0
    %v2461 = vpop.f32.mrb[0].mxu0
    %2462 = vdwg.mxu0
    %2463 = vmatprep.subr.bf16.mxu0 %v1669
    %2464 = vmatpush1.bf16.msra.mxu0 %v1668
    %2465 = vmatprep.subr.bf16.mxu0 %v1677
    %2466 = vmatpush1.bf16.msra.mxu0 %v1676
    %2467 = vmatprep.subr.bf16.mxu0 %v1685
    %2468 = vmatpush1.bf16.msra.mxu0 %v1684
    %2469 = vmatprep.subr.bf16.mxu0 %v1693
    %2470 = vmatpush1.bf16.msra.mxu0 %v1692
    %2471 = vmatprep.subr.bf16.mxu0 %v1701
    %2472 = vmatpush1.bf16.msra.mxu0 %v1700
    %2473 = vmatprep.subr.bf16.mxu0 %v1709
    %2474 = vmatpush1.bf16.msra.mxu0 %v1708
    %2475 = vmatprep.subr.bf16.mxu0 %v1717
    %2476 = vmatpush1.bf16.msra.mxu0 %v1716
    %2477 = vmatprep.subr.bf16.mxu0 %v1725
    %2478 = vmatpush1.bf16.msra.mxu0 %v1724
    %2479 = vmatprep.subr.bf16.mxu0 %v1733
    %2480 = vmatpush1.bf16.msra.mxu0 %v1732
    %2481 = vmatprep.subr.bf16.mxu0 %v1741
    %2482 = vmatpush1.bf16.msra.mxu0 %v1740
    %2483 = vmatprep.subr.bf16.mxu0 %v1749
    %2484 = vmatpush1.bf16.msra.mxu0 %v1748
    %2485 = vmatprep.subr.bf16.mxu0 %v1757
    %2486 = vmatpush1.bf16.msra.mxu0 %v1756
    %2487 = vmatprep.subr.bf16.mxu0 %v1765
    %2488 = vmatpush1.bf16.msra.mxu0 %v1764
    %2489 = vmatprep.subr.bf16.mxu0 %v1773
    %2490 = vmatpush1.bf16.msra.mxu0 %v1772
    %2491 = vmatprep.subr.bf16.mxu0 %v1781
    %2492 = vmatpush1.bf16.msra.mxu0 %v1780
    %2493 = vmatprep.subr.bf16.mxu0 %v1789
    %2494 = vmatpush1.bf16.msra.mxu0 %v1788
    %2495 = vmatprep.mubr.bf16.mxu0 %v207
    %2496 = vmatmul.mubr.bf16.gmra.mrb[0].mxu0 %v206
    %v2497 = vpop.f32.mrb[0].mxu0
    %v2498 = vadd.f32 %v2457, %v2497
    %v2499 = vpop.f32.mrb[0].mxu0
    %v2500 = vadd.f32 %v2459, %v2499
    %v2501 = vpop.f32.mrb[0].mxu0
    %v2502 = vpop.f32.mrb[0].mxu0
    %2503 = vdwg.mxu0
    %2504 = vmatprep.subr.bf16.mxu0 %v1797
    %2505 = vmatpush1.bf16.msra.mxu0 %v1796
    %2506 = vmatprep.subr.bf16.mxu0 %v1805
    %2507 = vmatpush1.bf16.msra.mxu0 %v1804
    %2508 = vmatprep.subr.bf16.mxu0 %v1813
    %2509 = vmatpush1.bf16.msra.mxu0 %v1812
    %2510 = vmatprep.subr.bf16.mxu0 %v1821
    %2511 = vmatpush1.bf16.msra.mxu0 %v1820
    %2512 = vmatprep.subr.bf16.mxu0 %v1829
    %2513 = vmatpush1.bf16.msra.mxu0 %v1828
    %2514 = vmatprep.subr.bf16.mxu0 %v1837
    %2515 = vmatpush1.bf16.msra.mxu0 %v1836
    %2516 = vmatprep.subr.bf16.mxu0 %v1845
    %2517 = vmatpush1.bf16.msra.mxu0 %v1844
    %2518 = vmatprep.subr.bf16.mxu0 %v1853
    %2519 = vmatpush1.bf16.msra.mxu0 %v1852
    %2520 = vmatprep.subr.bf16.mxu0 0
    %2521 = vmatpush1.bf16.msra.mxu0 0
    %2522 = vmatprep.subr.bf16.mxu0 0
    %2523 = vmatpush1.bf16.msra.mxu0 0
    %2524 = vmatprep.subr.bf16.mxu0 0
    %2525 = vmatpush1.bf16.msra.mxu0 0
    %2526 = vmatprep.subr.bf16.mxu0 0
    %2527 = vmatpush1.bf16.msra.mxu0 0
    %2528 = vmatprep.subr.bf16.mxu0 0
    %2529 = vmatpush1.bf16.msra.mxu0 0
    %2530 = vmatprep.subr.bf16.mxu0 0
    %2531 = vmatpush1.bf16.msra.mxu0 0
    %2532 = vmatprep.subr.bf16.mxu0 0
    %2533 = vmatpush1.bf16.msra.mxu0 0
    %2534 = vmatprep.subr.bf16.mxu0 0
    %2535 = vmatpush1.bf16.msra.mxu0 0
    %2536 = vmatprep.mubr.bf16.mxu0 0
    %2537 = vmatmul.mubr.bf16.gmra.mrb[0].mxu0 %v208
    %v2538 = vpop.f32.mrb[0].mxu0
    %v2539 = vadd.f32 %v2498, %v2538
    %v2540 = vpop.f32.mrb[0].mxu0
    %v2541 = vadd.f32 %v2500, %v2540
    %v2542 = vpop.f32.mrb[0].mxu0
    %v2543 = vpop.f32.mrb[0].mxu0
    %2544 = vdwg.mxu0
    %2545 = vmatprep.subr.bf16.mxu0 %v1543
    %2546 = vmatpush1.bf16.msra.mxu0 %v1542
    %2547 = vmatprep.subr.bf16.mxu0 %v1551
    %2548 = vmatpush1.bf16.msra.mxu0 %v1550
    %2549 = vmatprep.subr.bf16.mxu0 %v1559
    %2550 = vmatpush1.bf16.msra.mxu0 %v1558
    %2551 = vmatprep.subr.bf16.mxu0 %v1567
    %2552 = vmatpush1.bf16.msra.mxu0 %v1566
    %2553 = vmatprep.subr.bf16.mxu0 %v1575
    %2554 = vmatpush1.bf16.msra.mxu0 %v1574
    %2555 = vmatprep.subr.bf16.mxu0 %v1583
    %2556 = vmatpush1.bf16.msra.mxu0 %v1582
    %2557 = vmatprep.subr.bf16.mxu0 %v1591
    %2558 = vmatpush1.bf16.msra.mxu0 %v1590
    %2559 = vmatprep.subr.bf16.mxu0 %v1599
    %2560 = vmatpush1.bf16.msra.mxu0 %v1598
    %2561 = vmatprep.subr.bf16.mxu0 %v1607
    %2562 = vmatpush1.bf16.msra.mxu0 %v1606
    %2563 = vmatprep.subr.bf16.mxu0 %v1615
    %2564 = vmatpush1.bf16.msra.mxu0 %v1614
    %2565 = vmatprep.subr.bf16.mxu0 %v1623
    %2566 = vmatpush1.bf16.msra.mxu0 %v1622
    %2567 = vmatprep.subr.bf16.mxu0 %v1631
    %2568 = vmatpush1.bf16.msra.mxu0 %v1630
    %2569 = vmatprep.subr.bf16.mxu0 %v1639
    %2570 = vmatpush1.bf16.msra.mxu0 %v1638
    %2571 = vmatprep.subr.bf16.mxu0 %v1647
    %2572 = vmatpush1.bf16.msra.mxu0 %v1646
    %2573 = vmatprep.subr.bf16.mxu0 %v1655
    %2574 = vmatpush1.bf16.msra.mxu0 %v1654
    %2575 = vmatprep.subr.bf16.mxu0 %v1663
    %2576 = vmatpush1.bf16.msra.mxu0 %v1662
    %2577 = vmatprep.mubr.bf16.mxu0 %v205
    %2578 = vmatmul.mubr.bf16.gmra.mrb[0].mxu0 %v204
    %v2579 = vpop.f32.mrb[0].mxu0
    %v2580 = vadd.f32 %v563, %v2579
    %v2581 = vpop.f32.mrb[0].mxu0
    %v2582 = vadd.f32 %v567, %v2581
    %v2583 = vpop.f32.mrb[0].mxu0
    %v2584 = vpop.f32.mrb[0].mxu0
    %2585 = vdwg.mxu0
    %2586 = vmatprep.subr.bf16.mxu0 %v1671
    %2587 = vmatpush1.bf16.msra.mxu0 %v1670
    %2588 = vmatprep.subr.bf16.mxu0 %v1679
    %2589 = vmatpush1.bf16.msra.mxu0 %v1678
    %2590 = vmatprep.subr.bf16.mxu0 %v1687
    %2591 = vmatpush1.bf16.msra.mxu0 %v1686
    %2592 = vmatprep.subr.bf16.mxu0 %v1695
    %2593 = vmatpush1.bf16.msra.mxu0 %v1694
    %2594 = vmatprep.subr.bf16.mxu0 %v1703
    %2595 = vmatpush1.bf16.msra.mxu0 %v1702
    %2596 = vmatprep.subr.bf16.mxu0 %v1711
    %2597 = vmatpush1.bf16.msra.mxu0 %v1710
    %2598 = vmatprep.subr.bf16.mxu0 %v1719
    %2599 = vmatpush1.bf16.msra.mxu0 %v1718
    %2600 = vmatprep.subr.bf16.mxu0 %v1727
    %2601 = vmatpush1.bf16.msra.mxu0 %v1726
    %2602 = vmatprep.subr.bf16.mxu0 %v1735
    %2603 = vmatpush1.bf16.msra.mxu0 %v1734
    %2604 = vmatprep.subr.bf16.mxu0 %v1743
    %2605 = vmatpush1.bf16.msra.mxu0 %v1742
    %2606 = vmatprep.subr.bf16.mxu0 %v1751
    %2607 = vmatpush1.bf16.msra.mxu0 %v1750
    %2608 = vmatprep.subr.bf16.mxu0 %v1759
    %2609 = vmatpush1.bf16.msra.mxu0 %v1758
    %2610 = vmatprep.subr.bf16.mxu0 %v1767
    %2611 = vmatpush1.bf16.msra.mxu0 %v1766
    %2612 = vmatprep.subr.bf16.mxu0 %v1775
    %2613 = vmatpush1.bf16.msra.mxu0 %v1774
    %2614 = vmatprep.subr.bf16.mxu0 %v1783
    %2615 = vmatpush1.bf16.msra.mxu0 %v1782
    %2616 = vmatprep.subr.bf16.mxu0 %v1791
    %2617 = vmatpush1.bf16.msra.mxu0 %v1790
    %2618 = vmatprep.mubr.bf16.mxu0 %v207
    %2619 = vmatmul.mubr.bf16.gmra.mrb[0].mxu0 %v206
    %v2620 = vpop.f32.mrb[0].mxu0
    %v2621 = vadd.f32 %v2580, %v2620
    %v2622 = vpop.f32.mrb[0].mxu0
    %v2623 = vadd.f32 %v2582, %v2622
    %v2624 = vpop.f32.mrb[0].mxu0
    %v2625 = vpop.f32.mrb[0].mxu0
    %2626 = vdwg.mxu0
    %2627 = vmatprep.subr.bf16.mxu0 %v1799
    %2628 = vmatpush1.bf16.msra.mxu0 %v1798
    %2629 = vmatprep.subr.bf16.mxu0 %v1807
    %2630 = vmatpush1.bf16.msra.mxu0 %v1806
    %2631 = vmatprep.subr.bf16.mxu0 %v1815
    %2632 = vmatpush1.bf16.msra.mxu0 %v1814
    %2633 = vmatprep.subr.bf16.mxu0 %v1823
    %2634 = vmatpush1.bf16.msra.mxu0 %v1822
    %2635 = vmatprep.subr.bf16.mxu0 %v1831
    %2636 = vmatpush1.bf16.msra.mxu0 %v1830
    %2637 = vmatprep.subr.bf16.mxu0 %v1839
    %2638 = vmatpush1.bf16.msra.mxu0 %v1838
    %2639 = vmatprep.subr.bf16.mxu0 %v1847
    %2640 = vmatpush1.bf16.msra.mxu0 %v1846
    %2641 = vmatprep.subr.bf16.mxu0 %v1855
    %2642 = vmatpush1.bf16.msra.mxu0 %v1854
    %2643 = vmatprep.subr.bf16.mxu0 0
    %2644 = vmatpush1.bf16.msra.mxu0 0
    %2645 = vmatprep.subr.bf16.mxu0 0
    %2646 = vmatpush1.bf16.msra.mxu0 0
    %2647 = vmatprep.subr.bf16.mxu0 0
    %2648 = vmatpush1.bf16.msra.mxu0 0
    %2649 = vmatprep.subr.bf16.mxu0 0
    %2650 = vmatpush1.bf16.msra.mxu0 0
    %2651 = vmatprep.subr.bf16.mxu0 0
    %2652 = vmatpush1.bf16.msra.mxu0 0
    %2653 = vmatprep.subr.bf16.mxu0 0
    %2654 = vmatpush1.bf16.msra.mxu0 0
    %2655 = vmatprep.subr.bf16.mxu0 0
    %2656 = vmatpush1.bf16.msra.mxu0 0
    %2657 = vmatprep.subr.bf16.mxu0 0
    %2658 = vmatpush1.bf16.msra.mxu0 0
    %2659 = vmatprep.mubr.bf16.mxu0 0
    %2660 = vmatmul.mubr.bf16.gmra.mrb[0].mxu0 %v208
    %v2661 = vpop.f32.mrb[0].mxu0
    %v2662 = vadd.f32 %v2621, %v2661
    %v2663 = vpop.f32.mrb[0].mxu0
    %v2664 = vadd.f32 %v2623, %v2663
    %v2665 = vpop.f32.mrb[0].mxu0
    %v2666 = vpop.f32.mrb[0].mxu0
    %2667 = vdwg.mxu0
    %v2673 = vrot.slane %v209, 4
    %v2674 = vrot.slane %v210, 4
    %v2675 = vrot.slane %v211, 4
    %v2676 = vrot.slane %v212, 4
    %v2677 = vrot.slane %v213, 4
    %2683 = vmatprep.subr.bf16.mxu0 %v1537
    %2684 = vmatpush1.bf16.msra.mxu0 %v1536
    %2685 = vmatprep.subr.bf16.mxu0 %v1545
    %2686 = vmatpush1.bf16.msra.mxu0 %v1544
    %2687 = vmatprep.subr.bf16.mxu0 %v1553
    %2688 = vmatpush1.bf16.msra.mxu0 %v1552
    %2689 = vmatprep.subr.bf16.mxu0 %v1561
    %2690 = vmatpush1.bf16.msra.mxu0 %v1560
    %2691 = vmatprep.subr.bf16.mxu0 %v1569
    %2692 = vmatpush1.bf16.msra.mxu0 %v1568
    %2693 = vmatprep.subr.bf16.mxu0 %v1577
    %2694 = vmatpush1.bf16.msra.mxu0 %v1576
    %2695 = vmatprep.subr.bf16.mxu0 %v1585
    %2696 = vmatpush1.bf16.msra.mxu0 %v1584
    %2697 = vmatprep.subr.bf16.mxu0 %v1593
    %2698 = vmatpush1.bf16.msra.mxu0 %v1592
    %2699 = vmatprep.subr.bf16.mxu0 %v1601
    %2700 = vmatpush1.bf16.msra.mxu0 %v1600
    %2701 = vmatprep.subr.bf16.mxu0 %v1609
    %2702 = vmatpush1.bf16.msra.mxu0 %v1608
    %2703 = vmatprep.subr.bf16.mxu0 %v1617
    %2704 = vmatpush1.bf16.msra.mxu0 %v1616
    %2705 = vmatprep.subr.bf16.mxu0 %v1625
    %2706 = vmatpush1.bf16.msra.mxu0 %v1624
    %2707 = vmatprep.subr.bf16.mxu0 %v1633
    %2708 = vmatpush1.bf16.msra.mxu0 %v1632
    %2709 = vmatprep.subr.bf16.mxu0 %v1641
    %2710 = vmatpush1.bf16.msra.mxu0 %v1640
    %2711 = vmatprep.subr.bf16.mxu0 %v1649
    %2712 = vmatpush1.bf16.msra.mxu0 %v1648
    %2713 = vmatprep.subr.bf16.mxu0 %v1657
    %2714 = vmatpush1.bf16.msra.mxu0 %v1656
    %2715 = vmatprep.mubr.bf16.mxu0 %v2674
    %2716 = vmatmul.mubr.bf16.gmra.mrb[0].mxu0 %v2673
    %v2717 = vpop.f32.mrb[0].mxu0
    %v2718 = vadd.f32 %v539, %v2717
    %v2719 = vpop.f32.mrb[0].mxu0
    %v2720 = vadd.f32 %v543, %v2719
    %v2721 = vpop.f32.mrb[0].mxu0
    %v2722 = vpop.f32.mrb[0].mxu0
    %2723 = vdwg.mxu0
    %2724 = vmatprep.subr.bf16.mxu0 %v1665
    %2725 = vmatpush1.bf16.msra.mxu0 %v1664
    %2726 = vmatprep.subr.bf16.mxu0 %v1673
    %2727 = vmatpush1.bf16.msra.mxu0 %v1672
    %2728 = vmatprep.subr.bf16.mxu0 %v1681
    %2729 = vmatpush1.bf16.msra.mxu0 %v1680
    %2730 = vmatprep.subr.bf16.mxu0 %v1689
    %2731 = vmatpush1.bf16.msra.mxu0 %v1688
    %2732 = vmatprep.subr.bf16.mxu0 %v1697
    %2733 = vmatpush1.bf16.msra.mxu0 %v1696
    %2734 = vmatprep.subr.bf16.mxu0 %v1705
    %2735 = vmatpush1.bf16.msra.mxu0 %v1704
    %2736 = vmatprep.subr.bf16.mxu0 %v1713
    %2737 = vmatpush1.bf16.msra.mxu0 %v1712
    %2738 = vmatprep.subr.bf16.mxu0 %v1721
    %2739 = vmatpush1.bf16.msra.mxu0 %v1720
    %2740 = vmatprep.subr.bf16.mxu0 %v1729
    %2741 = vmatpush1.bf16.msra.mxu0 %v1728
    %2742 = vmatprep.subr.bf16.mxu0 %v1737
    %2743 = vmatpush1.bf16.msra.mxu0 %v1736
    %2744 = vmatprep.subr.bf16.mxu0 %v1745
    %2745 = vmatpush1.bf16.msra.mxu0 %v1744
    %2746 = vmatprep.subr.bf16.mxu0 %v1753
    %2747 = vmatpush1.bf16.msra.mxu0 %v1752
    %2748 = vmatprep.subr.bf16.mxu0 %v1761
    %2749 = vmatpush1.bf16.msra.mxu0 %v1760
    %2750 = vmatprep.subr.bf16.mxu0 %v1769
    %2751 = vmatpush1.bf16.msra.mxu0 %v1768
    %2752 = vmatprep.subr.bf16.mxu0 %v1777
    %2753 = vmatpush1.bf16.msra.mxu0 %v1776
    %2754 = vmatprep.subr.bf16.mxu0 %v1785
    %2755 = vmatpush1.bf16.msra.mxu0 %v1784
    %2756 = vmatprep.mubr.bf16.mxu0 %v2676
    %2757 = vmatmul.mubr.bf16.gmra.mrb[0].mxu0 %v2675
    %v2758 = vpop.f32.mrb[0].mxu0
    %v2759 = vadd.f32 %v2718, %v2758
    %v2760 = vpop.f32.mrb[0].mxu0
    %v2761 = vadd.f32 %v2720, %v2760
    %v2762 = vpop.f32.mrb[0].mxu0
    %v2763 = vpop.f32.mrb[0].mxu0
    %2764 = vdwg.mxu0
    %2765 = vmatprep.subr.bf16.mxu0 %v1793
    %2766 = vmatpush1.bf16.msra.mxu0 %v1792
    %2767 = vmatprep.subr.bf16.mxu0 %v1801
    %2768 = vmatpush1.bf16.msra.mxu0 %v1800
    %2769 = vmatprep.subr.bf16.mxu0 %v1809
    %2770 = vmatpush1.bf16.msra.mxu0 %v1808
    %2771 = vmatprep.subr.bf16.mxu0 %v1817
    %2772 = vmatpush1.bf16.msra.mxu0 %v1816
    %2773 = vmatprep.subr.bf16.mxu0 %v1825
    %2774 = vmatpush1.bf16.msra.mxu0 %v1824
    %2775 = vmatprep.subr.bf16.mxu0 %v1833
    %2776 = vmatpush1.bf16.msra.mxu0 %v1832
    %2777 = vmatprep.subr.bf16.mxu0 %v1841
    %2778 = vmatpush1.bf16.msra.mxu0 %v1840
    %2779 = vmatprep.subr.bf16.mxu0 %v1849
    %2780 = vmatpush1.bf16.msra.mxu0 %v1848
    %2781 = vmatprep.subr.bf16.mxu0 0
    %2782 = vmatpush1.bf16.msra.mxu0 0
    %2783 = vmatprep.subr.bf16.mxu0 0
    %2784 = vmatpush1.bf16.msra.mxu0 0
    %2785 = vmatprep.subr.bf16.mxu0 0
    %2786 = vmatpush1.bf16.msra.mxu0 0
    %2787 = vmatprep.subr.bf16.mxu0 0
    %2788 = vmatpush1.bf16.msra.mxu0 0
    %2789 = vmatprep.subr.bf16.mxu0 0
    %2790 = vmatpush1.bf16.msra.mxu0 0
    %2791 = vmatprep.subr.bf16.mxu0 0
    %2792 = vmatpush1.bf16.msra.mxu0 0
    %2793 = vmatprep.subr.bf16.mxu0 0
    %2794 = vmatpush1.bf16.msra.mxu0 0
    %2795 = vmatprep.subr.bf16.mxu0 0
    %2796 = vmatpush1.bf16.msra.mxu0 0
    %2797 = vmatprep.mubr.bf16.mxu0 0
    %2798 = vmatmul.mubr.bf16.gmra.mrb[0].mxu0 %v2677
    %v2799 = vpop.f32.mrb[0].mxu0
    %v2800 = vadd.f32 %v2759, %v2799
    %v2801 = vpop.f32.mrb[0].mxu0
    %v2802 = vadd.f32 %v2761, %v2801
    %v2803 = vpop.f32.mrb[0].mxu0
    %v2804 = vpop.f32.mrb[0].mxu0
    %2805 = vdwg.mxu0
    %2806 = vmatprep.subr.bf16.mxu0 %v1539
    %2807 = vmatpush1.bf16.msra.mxu0 %v1538
    %2808 = vmatprep.subr.bf16.mxu0 %v1547
    %2809 = vmatpush1.bf16.msra.mxu0 %v1546
    %2810 = vmatprep.subr.bf16.mxu0 %v1555
    %2811 = vmatpush1.bf16.msra.mxu0 %v1554
    %2812 = vmatprep.subr.bf16.mxu0 %v1563
    %2813 = vmatpush1.bf16.msra.mxu0 %v1562
    %2814 = vmatprep.subr.bf16.mxu0 %v1571
    %2815 = vmatpush1.bf16.msra.mxu0 %v1570
    %2816 = vmatprep.subr.bf16.mxu0 %v1579
    %2817 = vmatpush1.bf16.msra.mxu0 %v1578
    %2818 = vmatprep.subr.bf16.mxu0 %v1587
    %2819 = vmatpush1.bf16.msra.mxu0 %v1586
    %2820 = vmatprep.subr.bf16.mxu0 %v1595
    %2821 = vmatpush1.bf16.msra.mxu0 %v1594
    %2822 = vmatprep.subr.bf16.mxu0 %v1603
    %2823 = vmatpush1.bf16.msra.mxu0 %v1602
    %2824 = vmatprep.subr.bf16.mxu0 %v1611
    %2825 = vmatpush1.bf16.msra.mxu0 %v1610
    %2826 = vmatprep.subr.bf16.mxu0 %v1619
    %2827 = vmatpush1.bf16.msra.mxu0 %v1618
    %2828 = vmatprep.subr.bf16.mxu0 %v1627
    %2829 = vmatpush1.bf16.msra.mxu0 %v1626
    %2830 = vmatprep.subr.bf16.mxu0 %v1635
    %2831 = vmatpush1.bf16.msra.mxu0 %v1634
    %2832 = vmatprep.subr.bf16.mxu0 %v1643
    %2833 = vmatpush1.bf16.msra.mxu0 %v1642
    %2834 = vmatprep.subr.bf16.mxu0 %v1651
    %2835 = vmatpush1.bf16.msra.mxu0 %v1650
    %2836 = vmatprep.subr.bf16.mxu0 %v1659
    %2837 = vmatpush1.bf16.msra.mxu0 %v1658
    %2838 = vmatprep.mubr.bf16.mxu0 %v2674
    %2839 = vmatmul.mubr.bf16.gmra.mrb[0].mxu0 %v2673
    %v2840 = vpop.f32.mrb[0].mxu0
    %v2841 = vadd.f32 %v547, %v2840
    %v2842 = vpop.f32.mrb[0].mxu0
    %v2843 = vadd.f32 %v551, %v2842
    %v2844 = vpop.f32.mrb[0].mxu0
    %v2845 = vpop.f32.mrb[0].mxu0
    %2846 = vdwg.mxu0
    %2847 = vmatprep.subr.bf16.mxu0 %v1667
    %2848 = vmatpush1.bf16.msra.mxu0 %v1666
    %2849 = vmatprep.subr.bf16.mxu0 %v1675
    %2850 = vmatpush1.bf16.msra.mxu0 %v1674
    %2851 = vmatprep.subr.bf16.mxu0 %v1683
    %2852 = vmatpush1.bf16.msra.mxu0 %v1682
    %2853 = vmatprep.subr.bf16.mxu0 %v1691
    %2854 = vmatpush1.bf16.msra.mxu0 %v1690
    %2855 = vmatprep.subr.bf16.mxu0 %v1699
    %2856 = vmatpush1.bf16.msra.mxu0 %v1698
    %2857 = vmatprep.subr.bf16.mxu0 %v1707
    %2858 = vmatpush1.bf16.msra.mxu0 %v1706
    %2859 = vmatprep.subr.bf16.mxu0 %v1715
    %2860 = vmatpush1.bf16.msra.mxu0 %v1714
    %2861 = vmatprep.subr.bf16.mxu0 %v1723
    %2862 = vmatpush1.bf16.msra.mxu0 %v1722
    %2863 = vmatprep.subr.bf16.mxu0 %v1731
    %2864 = vmatpush1.bf16.msra.mxu0 %v1730
    %2865 = vmatprep.subr.bf16.mxu0 %v1739
    %2866 = vmatpush1.bf16.msra.mxu0 %v1738
    %2867 = vmatprep.subr.bf16.mxu0 %v1747
    %2868 = vmatpush1.bf16.msra.mxu0 %v1746
    %2869 = vmatprep.subr.bf16.mxu0 %v1755
    %2870 = vmatpush1.bf16.msra.mxu0 %v1754
    %2871 = vmatprep.subr.bf16.mxu0 %v1763
    %2872 = vmatpush1.bf16.msra.mxu0 %v1762
    %2873 = vmatprep.subr.bf16.mxu0 %v1771
    %2874 = vmatpush1.bf16.msra.mxu0 %v1770
    %2875 = vmatprep.subr.bf16.mxu0 %v1779
    %2876 = vmatpush1.bf16.msra.mxu0 %v1778
    %2877 = vmatprep.subr.bf16.mxu0 %v1787
    %2878 = vmatpush1.bf16.msra.mxu0 %v1786
    %2879 = vmatprep.mubr.bf16.mxu0 %v2676
    %2880 = vmatmul.mubr.bf16.gmra.mrb[0].mxu0 %v2675
    %v2881 = vpop.f32.mrb[0].mxu0
    %v2882 = vadd.f32 %v2841, %v2881
    %v2883 = vpop.f32.mrb[0].mxu0
    %v2884 = vadd.f32 %v2843, %v2883
    %v2885 = vpop.f32.mrb[0].mxu0
    %v2886 = vpop.f32.mrb[0].mxu0
    %2887 = vdwg.mxu0
    %2888 = vmatprep.subr.bf16.mxu0 %v1795
    %2889 = vmatpush1.bf16.msra.mxu0 %v1794
    %2890 = vmatprep.subr.bf16.mxu0 %v1803
    %2891 = vmatpush1.bf16.msra.mxu0 %v1802
    %2892 = vmatprep.subr.bf16.mxu0 %v1811
    %2893 = vmatpush1.bf16.msra.mxu0 %v1810
    %2894 = vmatprep.subr.bf16.mxu0 %v1819
    %2895 = vmatpush1.bf16.msra.mxu0 %v1818
    %2896 = vmatprep.subr.bf16.mxu0 %v1827
    %2897 = vmatpush1.bf16.msra.mxu0 %v1826
    %2898 = vmatprep.subr.bf16.mxu0 %v1835
    %2899 = vmatpush1.bf16.msra.mxu0 %v1834
    %2900 = vmatprep.subr.bf16.mxu0 %v1843
    %2901 = vmatpush1.bf16.msra.mxu0 %v1842
    %2902 = vmatprep.subr.bf16.mxu0 %v1851
    %2903 = vmatpush1.bf16.msra.mxu0 %v1850
    %2904 = vmatprep.subr.bf16.mxu0 0
    %2905 = vmatpush1.bf16.msra.mxu0 0
    %2906 = vmatprep.subr.bf16.mxu0 0
    %2907 = vmatpush1.bf16.msra.mxu0 0
    %2908 = vmatprep.subr.bf16.mxu0 0
    %2909 = vmatpush1.bf16.msra.mxu0 0
    %2910 = vmatprep.subr.bf16.mxu0 0
    %2911 = vmatpush1.bf16.msra.mxu0 0
    %2912 = vmatprep.subr.bf16.mxu0 0
    %2913 = vmatpush1.bf16.msra.mxu0 0
    %2914 = vmatprep.subr.bf16.mxu0 0
    %2915 = vmatpush1.bf16.msra.mxu0 0
    %2916 = vmatprep.subr.bf16.mxu0 0
    %2917 = vmatpush1.bf16.msra.mxu0 0
    %2918 = vmatprep.subr.bf16.mxu0 0
    %2919 = vmatpush1.bf16.msra.mxu0 0
    %2920 = vmatprep.mubr.bf16.mxu0 0
    %2921 = vmatmul.mubr.bf16.gmra.mrb[0].mxu0 %v2677
    %v2922 = vpop.f32.mrb[0].mxu0
    %v2923 = vadd.f32 %v2882, %v2922
    %v2924 = vpop.f32.mrb[0].mxu0
    %v2925 = vadd.f32 %v2884, %v2924
    %v2926 = vpop.f32.mrb[0].mxu0
    %v2927 = vpop.f32.mrb[0].mxu0
    %2928 = vdwg.mxu0
    %2929 = vmatprep.subr.bf16.mxu0 %v1541
    %2930 = vmatpush1.bf16.msra.mxu0 %v1540
    %2931 = vmatprep.subr.bf16.mxu0 %v1549
    %2932 = vmatpush1.bf16.msra.mxu0 %v1548
    %2933 = vmatprep.subr.bf16.mxu0 %v1557
    %2934 = vmatpush1.bf16.msra.mxu0 %v1556
    %2935 = vmatprep.subr.bf16.mxu0 %v1565
    %2936 = vmatpush1.bf16.msra.mxu0 %v1564
    %2937 = vmatprep.subr.bf16.mxu0 %v1573
    %2938 = vmatpush1.bf16.msra.mxu0 %v1572
    %2939 = vmatprep.subr.bf16.mxu0 %v1581
    %2940 = vmatpush1.bf16.msra.mxu0 %v1580
    %2941 = vmatprep.subr.bf16.mxu0 %v1589
    %2942 = vmatpush1.bf16.msra.mxu0 %v1588
    %2943 = vmatprep.subr.bf16.mxu0 %v1597
    %2944 = vmatpush1.bf16.msra.mxu0 %v1596
    %2945 = vmatprep.subr.bf16.mxu0 %v1605
    %2946 = vmatpush1.bf16.msra.mxu0 %v1604
    %2947 = vmatprep.subr.bf16.mxu0 %v1613
    %2948 = vmatpush1.bf16.msra.mxu0 %v1612
    %2949 = vmatprep.subr.bf16.mxu0 %v1621
    %2950 = vmatpush1.bf16.msra.mxu0 %v1620
    %2951 = vmatprep.subr.bf16.mxu0 %v1629
    %2952 = vmatpush1.bf16.msra.mxu0 %v1628
    %2953 = vmatprep.subr.bf16.mxu0 %v1637
    %2954 = vmatpush1.bf16.msra.mxu0 %v1636
    %2955 = vmatprep.subr.bf16.mxu0 %v1645
    %2956 = vmatpush1.bf16.msra.mxu0 %v1644
    %2957 = vmatprep.subr.bf16.mxu0 %v1653
    %2958 = vmatpush1.bf16.msra.mxu0 %v1652
    %2959 = vmatprep.subr.bf16.mxu0 %v1661
    %2960 = vmatpush1.bf16.msra.mxu0 %v1660
    %2961 = vmatprep.mubr.bf16.mxu0 %v2674
    %2962 = vmatmul.mubr.bf16.gmra.mrb[0].mxu0 %v2673
    %v2963 = vpop.f32.mrb[0].mxu0
    %v2964 = vadd.f32 %v555, %v2963
    %v2965 = vpop.f32.mrb[0].mxu0
    %v2966 = vadd.f32 %v559, %v2965
    %v2967 = vpop.f32.mrb[0].mxu0
    %v2968 = vpop.f32.mrb[0].mxu0
    %2969 = vdwg.mxu0
    %2970 = vmatprep.subr.bf16.mxu0 %v1669
    %2971 = vmatpush1.bf16.msra.mxu0 %v1668
    %2972 = vmatprep.subr.bf16.mxu0 %v1677
    %2973 = vmatpush1.bf16.msra.mxu0 %v1676
    %2974 = vmatprep.subr.bf16.mxu0 %v1685
    %2975 = vmatpush1.bf16.msra.mxu0 %v1684
    %2976 = vmatprep.subr.bf16.mxu0 %v1693
    %2977 = vmatpush1.bf16.msra.mxu0 %v1692
    %2978 = vmatprep.subr.bf16.mxu0 %v1701
    %2979 = vmatpush1.bf16.msra.mxu0 %v1700
    %2980 = vmatprep.subr.bf16.mxu0 %v1709
    %2981 = vmatpush1.bf16.msra.mxu0 %v1708
    %2982 = vmatprep.subr.bf16.mxu0 %v1717
    %2983 = vmatpush1.bf16.msra.mxu0 %v1716
    %2984 = vmatprep.subr.bf16.mxu0 %v1725
    %2985 = vmatpush1.bf16.msra.mxu0 %v1724
    %2986 = vmatprep.subr.bf16.mxu0 %v1733
    %2987 = vmatpush1.bf16.msra.mxu0 %v1732
    %2988 = vmatprep.subr.bf16.mxu0 %v1741
    %2989 = vmatpush1.bf16.msra.mxu0 %v1740
    %2990 = vmatprep.subr.bf16.mxu0 %v1749
    %2991 = vmatpush1.bf16.msra.mxu0 %v1748
    %2992 = vmatprep.subr.bf16.mxu0 %v1757
    %2993 = vmatpush1.bf16.msra.mxu0 %v1756
    %2994 = vmatprep.subr.bf16.mxu0 %v1765
    %2995 = vmatpush1.bf16.msra.mxu0 %v1764
    %2996 = vmatprep.subr.bf16.mxu0 %v1773
    %2997 = vmatpush1.bf16.msra.mxu0 %v1772
    %2998 = vmatprep.subr.bf16.mxu0 %v1781
    %2999 = vmatpush1.bf16.msra.mxu0 %v1780
    %3000 = vmatprep.subr.bf16.mxu0 %v1789
    %3001 = vmatpush1.bf16.msra.mxu0 %v1788
    %3002 = vmatprep.mubr.bf16.mxu0 %v2676
    %3003 = vmatmul.mubr.bf16.gmra.mrb[0].mxu0 %v2675
    %v3004 = vpop.f32.mrb[0].mxu0
    %v3005 = vadd.f32 %v2964, %v3004
    %v3006 = vpop.f32.mrb[0].mxu0
    %v3007 = vadd.f32 %v2966, %v3006
    %v3008 = vpop.f32.mrb[0].mxu0
    %v3009 = vpop.f32.mrb[0].mxu0
    %3010 = vdwg.mxu0
    %3011 = vmatprep.subr.bf16.mxu0 %v1797
    %3012 = vmatpush1.bf16.msra.mxu0 %v1796
    %3013 = vmatprep.subr.bf16.mxu0 %v1805
    %3014 = vmatpush1.bf16.msra.mxu0 %v1804
    %3015 = vmatprep.subr.bf16.mxu0 %v1813
    %3016 = vmatpush1.bf16.msra.mxu0 %v1812
    %3017 = vmatprep.subr.bf16.mxu0 %v1821
    %3018 = vmatpush1.bf16.msra.mxu0 %v1820
    %3019 = vmatprep.subr.bf16.mxu0 %v1829
    %3020 = vmatpush1.bf16.msra.mxu0 %v1828
    %3021 = vmatprep.subr.bf16.mxu0 %v1837
    %3022 = vmatpush1.bf16.msra.mxu0 %v1836
    %3023 = vmatprep.subr.bf16.mxu0 %v1845
    %3024 = vmatpush1.bf16.msra.mxu0 %v1844
    %3025 = vmatprep.subr.bf16.mxu0 %v1853
    %3026 = vmatpush1.bf16.msra.mxu0 %v1852
    %3027 = vmatprep.subr.bf16.mxu0 0
    %3028 = vmatpush1.bf16.msra.mxu0 0
    %3029 = vmatprep.subr.bf16.mxu0 0
    %3030 = vmatpush1.bf16.msra.mxu0 0
    %3031 = vmatprep.subr.bf16.mxu0 0
    %3032 = vmatpush1.bf16.msra.mxu0 0
    %3033 = vmatprep.subr.bf16.mxu0 0
    %3034 = vmatpush1.bf16.msra.mxu0 0
    %3035 = vmatprep.subr.bf16.mxu0 0
    %3036 = vmatpush1.bf16.msra.mxu0 0
    %3037 = vmatprep.subr.bf16.mxu0 0
    %3038 = vmatpush1.bf16.msra.mxu0 0
    %3039 = vmatprep.subr.bf16.mxu0 0
    %3040 = vmatpush1.bf16.msra.mxu0 0
    %3041 = vmatprep.subr.bf16.mxu0 0
    %3042 = vmatpush1.bf16.msra.mxu0 0
    %3043 = vmatprep.mubr.bf16.mxu0 0
    %3044 = vmatmul.mubr.bf16.gmra.mrb[0].mxu0 %v2677
    %v3045 = vpop.f32.mrb[0].mxu0
    %v3046 = vadd.f32 %v3005, %v3045
    %v3047 = vpop.f32.mrb[0].mxu0
    %v3048 = vadd.f32 %v3007, %v3047
    %v3049 = vpop.f32.mrb[0].mxu0
    %v3050 = vpop.f32.mrb[0].mxu0
    %3051 = vdwg.mxu0
    %3052 = vmatprep.subr.bf16.mxu0 %v1543
    %3053 = vmatpush1.bf16.msra.mxu0 %v1542
    %3054 = vmatprep.subr.bf16.mxu0 %v1551
    %3055 = vmatpush1.bf16.msra.mxu0 %v1550
    %3056 = vmatprep.subr.bf16.mxu0 %v1559
    %3057 = vmatpush1.bf16.msra.mxu0 %v1558
    %3058 = vmatprep.subr.bf16.mxu0 %v1567
    %3059 = vmatpush1.bf16.msra.mxu0 %v1566
    %3060 = vmatprep.subr.bf16.mxu0 %v1575
    %3061 = vmatpush1.bf16.msra.mxu0 %v1574
    %3062 = vmatprep.subr.bf16.mxu0 %v1583
    %3063 = vmatpush1.bf16.msra.mxu0 %v1582
    %3064 = vmatprep.subr.bf16.mxu0 %v1591
    %3065 = vmatpush1.bf16.msra.mxu0 %v1590
    %3066 = vmatprep.subr.bf16.mxu0 %v1599
    %3067 = vmatpush1.bf16.msra.mxu0 %v1598
    %3068 = vmatprep.subr.bf16.mxu0 %v1607
    %3069 = vmatpush1.bf16.msra.mxu0 %v1606
    %3070 = vmatprep.subr.bf16.mxu0 %v1615
    %3071 = vmatpush1.bf16.msra.mxu0 %v1614
    %3072 = vmatprep.subr.bf16.mxu0 %v1623
    %3073 = vmatpush1.bf16.msra.mxu0 %v1622
    %3074 = vmatprep.subr.bf16.mxu0 %v1631
    %3075 = vmatpush1.bf16.msra.mxu0 %v1630
    %3076 = vmatprep.subr.bf16.mxu0 %v1639
    %3077 = vmatpush1.bf16.msra.mxu0 %v1638
    %3078 = vmatprep.subr.bf16.mxu0 %v1647
    %3079 = vmatpush1.bf16.msra.mxu0 %v1646
    %3080 = vmatprep.subr.bf16.mxu0 %v1655
    %3081 = vmatpush1.bf16.msra.mxu0 %v1654
    %3082 = vmatprep.subr.bf16.mxu0 %v1663
    %3083 = vmatpush1.bf16.msra.mxu0 %v1662
    %3084 = vmatprep.mubr.bf16.mxu0 %v2674
    %3085 = vmatmul.mubr.bf16.gmra.mrb[0].mxu0 %v2673
    %v3086 = vpop.f32.mrb[0].mxu0
    %v3087 = vadd.f32 %v563, %v3086
    %v3088 = vpop.f32.mrb[0].mxu0
    %v3089 = vadd.f32 %v567, %v3088
    %v3090 = vpop.f32.mrb[0].mxu0
    %v3091 = vpop.f32.mrb[0].mxu0
    %3092 = vdwg.mxu0
    %3093 = vmatprep.subr.bf16.mxu0 %v1671
    %3094 = vmatpush1.bf16.msra.mxu0 %v1670
    %3095 = vmatprep.subr.bf16.mxu0 %v1679
    %3096 = vmatpush1.bf16.msra.mxu0 %v1678
    %3097 = vmatprep.subr.bf16.mxu0 %v1687
    %3098 = vmatpush1.bf16.msra.mxu0 %v1686
    %3099 = vmatprep.subr.bf16.mxu0 %v1695
    %3100 = vmatpush1.bf16.msra.mxu0 %v1694
    %3101 = vmatprep.subr.bf16.mxu0 %v1703
    %3102 = vmatpush1.bf16.msra.mxu0 %v1702
    %3103 = vmatprep.subr.bf16.mxu0 %v1711
    %3104 = vmatpush1.bf16.msra.mxu0 %v1710
    %3105 = vmatprep.subr.bf16.mxu0 %v1719
    %3106 = vmatpush1.bf16.msra.mxu0 %v1718
    %3107 = vmatprep.subr.bf16.mxu0 %v1727
    %3108 = vmatpush1.bf16.msra.mxu0 %v1726
    %3109 = vmatprep.subr.bf16.mxu0 %v1735
    %3110 = vmatpush1.bf16.msra.mxu0 %v1734
    %3111 = vmatprep.subr.bf16.mxu0 %v1743
    %3112 = vmatpush1.bf16.msra.mxu0 %v1742
    %3113 = vmatprep.subr.bf16.mxu0 %v1751
    %3114 = vmatpush1.bf16.msra.mxu0 %v1750
    %3115 = vmatprep.subr.bf16.mxu0 %v1759
    %3116 = vmatpush1.bf16.msra.mxu0 %v1758
    %3117 = vmatprep.subr.bf16.mxu0 %v1767
    %3118 = vmatpush1.bf16.msra.mxu0 %v1766
    %3119 = vmatprep.subr.bf16.mxu0 %v1775
    %3120 = vmatpush1.bf16.msra.mxu0 %v1774
    %3121 = vmatprep.subr.bf16.mxu0 %v1783
    %3122 = vmatpush1.bf16.msra.mxu0 %v1782
    %3123 = vmatprep.subr.bf16.mxu0 %v1791
    %3124 = vmatpush1.bf16.msra.mxu0 %v1790
    %3125 = vmatprep.mubr.bf16.mxu0 %v2676
    %3126 = vmatmul.mubr.bf16.gmra.mrb[0].mxu0 %v2675
    %v3127 = vpop.f32.mrb[0].mxu0
    %v3128 = vadd.f32 %v3087, %v3127
    %v3129 = vpop.f32.mrb[0].mxu0
    %v3130 = vadd.f32 %v3089, %v3129
    %v3131 = vpop.f32.mrb[0].mxu0
    %v3132 = vpop.f32.mrb[0].mxu0
    %3133 = vdwg.mxu0
    %3134 = vmatprep.subr.bf16.mxu0 %v1799
    %3135 = vmatpush1.bf16.msra.mxu0 %v1798
    %3136 = vmatprep.subr.bf16.mxu0 %v1807
    %3137 = vmatpush1.bf16.msra.mxu0 %v1806
    %3138 = vmatprep.subr.bf16.mxu0 %v1815
    %3139 = vmatpush1.bf16.msra.mxu0 %v1814
    %3140 = vmatprep.subr.bf16.mxu0 %v1823
    %3141 = vmatpush1.bf16.msra.mxu0 %v1822
    %3142 = vmatprep.subr.bf16.mxu0 %v1831
    %3143 = vmatpush1.bf16.msra.mxu0 %v1830
    %3144 = vmatprep.subr.bf16.mxu0 %v1839
    %3145 = vmatpush1.bf16.msra.mxu0 %v1838
    %3146 = vmatprep.subr.bf16.mxu0 %v1847
    %3147 = vmatpush1.bf16.msra.mxu0 %v1846
    %3148 = vmatprep.subr.bf16.mxu0 %v1855
    %3149 = vmatpush1.bf16.msra.mxu0 %v1854
    %3150 = vmatprep.subr.bf16.mxu0 0
    %3151 = vmatpush1.bf16.msra.mxu0 0
    %3152 = vmatprep.subr.bf16.mxu0 0
    %3153 = vmatpush1.bf16.msra.mxu0 0
    %3154 = vmatprep.subr.bf16.mxu0 0
    %3155 = vmatpush1.bf16.msra.mxu0 0
    %3156 = vmatprep.subr.bf16.mxu0 0
    %3157 = vmatpush1.bf16.msra.mxu0 0
    %3158 = vmatprep.subr.bf16.mxu0 0
    %3159 = vmatpush1.bf16.msra.mxu0 0
    %3160 = vmatprep.subr.bf16.mxu0 0
    %3161 = vmatpush1.bf16.msra.mxu0 0
    %3162 = vmatprep.subr.bf16.mxu0 0
    %3163 = vmatpush1.bf16.msra.mxu0 0
    %3164 = vmatprep.subr.bf16.mxu0 0
    %3165 = vmatpush1.bf16.msra.mxu0 0
    %3166 = vmatprep.mubr.bf16.mxu0 0
    %3167 = vmatmul.mubr.bf16.gmra.mrb[0].mxu0 %v2677
    %v3168 = vpop.f32.mrb[0].mxu0
    %v3169 = vadd.f32 %v3128, %v3168
    %v3170 = vpop.f32.mrb[0].mxu0
    %v3171 = vadd.f32 %v3130, %v3170
    %v3172 = vpop.f32.mrb[0].mxu0
    %v3173 = vpop.f32.mrb[0].mxu0
    %3174 = vdwg.mxu0
    %v3175 = vmax.f32 %v2293, 0.0
    %v3176 = vmax.f32 %v2295, 0.0
    %v3177 = vmax.f32 %v2416, 0.0
    %v3178 = vmax.f32 %v2418, 0.0
    %v3179 = vmax.f32 %v2539, 0.0
    %v3180 = vmax.f32 %v2541, 0.0
    %v3181 = vmax.f32 %v2662, 0.0
    %v3182 = vmax.f32 %v2664, 0.0
    %v3183 = vpack.c.bf16 %v3175, %v3175
    %v3184 = vpack.c.bf16 %v3176, %v3176
    %v3185 = vpack.c.bf16 %v3177, %v3177
    %v3186 = vpack.c.bf16 %v3178, %v3178
    %v3187 = vpack.c.bf16 %v3179, %v3179
    %v3188 = vpack.c.bf16 %v3180, %v3180
    %v3189 = vpack.c.bf16 %v3181, %v3181
    %v3190 = vpack.c.bf16 %v3182, %v3182
    %v3191 = vmax.f32 %v2800, 0.0
    %v3192 = vmax.f32 %v2802, 0.0
    %v3193 = vmax.f32 %v2923, 0.0
    %v3194 = vmax.f32 %v2925, 0.0
    %v3195 = vmax.f32 %v3046, 0.0
    %v3196 = vmax.f32 %v3048, 0.0
    %v3197 = vmax.f32 %v3169, 0.0
    %v3198 = vmax.f32 %v3171, 0.0
    %v3199 = vpack.c.bf16 %v3191, %v3191
    %v3200 = vpack.c.bf16 %v3192, %v3192
    %v3201 = vpack.c.bf16 %v3193, %v3193
    %v3202 = vpack.c.bf16 %v3194, %v3194
    %v3203 = vpack.c.bf16 %v3195, %v3195
    %v3204 = vpack.c.bf16 %v3196, %v3196
    %v3205 = vpack.c.bf16 %v3197, %v3197
    %v3206 = vpack.c.bf16 %v3198, %v3198
    %v3207 = vld [vmem:[#allocation7] sm:$0xff]
    %v3208 = vld [vmem:[#allocation7 + $0x8] sm:$0xff]
    %v3209 = vld [vmem:[#allocation7 + $0x10] sm:$0xff]
    %v3210 = vld [vmem:[#allocation7 + $0x18] sm:$0xff]
    %v3211 = vld [vmem:[#allocation7 + $0x20] sm:$0xff]
    %v3212 = vld [vmem:[#allocation7 + $0x28] sm:$0xff]
    %v3213 = vld [vmem:[#allocation7 + $0x30] sm:$0xff]
    %v3214 = vld [vmem:[#allocation7 + $0x38] sm:$0xff]
    %v3215 = vld [vmem:[#allocation7 + $0x40] sm:$0xff]
    %v3216 = vld [vmem:[#allocation7 + $0x48] sm:$0xff]
    %v3217 = vld [vmem:[#allocation7 + $0x50] sm:$0xff]
    %v3218 = vld [vmem:[#allocation7 + $0x58] sm:$0xff]
    %v3219 = vld [vmem:[#allocation7 + $0x60] sm:$0xff]
    %v3220 = vld [vmem:[#allocation7 + $0x68] sm:$0xff]
    %v3221 = vld [vmem:[#allocation7 + $0x70] sm:$0xff]
    %v3222 = vld [vmem:[#allocation7 + $0x78] sm:$0xff]
    %v3223 = vld [vmem:[#allocation7 + $0x80] sm:$0xff]
    %v3224 = vld [vmem:[#allocation7 + $0x88] sm:$0xff]
    %v3225 = vld [vmem:[#allocation7 + $0x90] sm:$0xff]
    %v3226 = vld [vmem:[#allocation7 + $0x98] sm:$0xff]
    %v3227 = vld [vmem:[#allocation7 + $0xa0] sm:$0xff]
    %v3228 = vld [vmem:[#allocation7 + $0xa8] sm:$0xff]
    %v3229 = vld [vmem:[#allocation7 + $0xb0] sm:$0xff]
    %v3230 = vld [vmem:[#allocation7 + $0xb8] sm:$0xff]
    %v3231 = vld [vmem:[#allocation7 + $0xc0] sm:$0xff]
    %v3232 = vld [vmem:[#allocation7 + $0xc8] sm:$0xff]
    %v3233 = vld [vmem:[#allocation7 + $0xd0] sm:$0xff]
    %v3234 = vld [vmem:[#allocation7 + $0xd8] sm:$0xff]
    %v3235 = vld [vmem:[#allocation7 + $0xe0] sm:$0xff]
    %v3236 = vld [vmem:[#allocation7 + $0xe8] sm:$0xff]
    %v3237 = vld [vmem:[#allocation7 + $0xf0] sm:$0xff]
    %v3238 = vld [vmem:[#allocation7 + $0xf8] sm:$0xff]
    %v3239 = vld [vmem:[#allocation7 + $0x100] sm:$0xff]
    %v3240 = vld [vmem:[#allocation7 + $0x108] sm:$0xff]
    %v3241 = vld [vmem:[#allocation7 + $0x110] sm:$0xff]
    %v3242 = vld [vmem:[#allocation7 + $0x118] sm:$0xff]
    %v3243 = vld [vmem:[#allocation7 + $0x120] sm:$0xff]
    %v3244 = vld [vmem:[#allocation7 + $0x128] sm:$0xff]
    %v3245 = vld [vmem:[#allocation7 + $0x130] sm:$0xff]
    %v3246 = vld [vmem:[#allocation7 + $0x138] sm:$0xff]
    %v3247 = vld [vmem:[#allocation7 + $0x140] sm:$0xff]
    %v3248 = vld [vmem:[#allocation7 + $0x148] sm:$0xff]
    %v3249 = vld [vmem:[#allocation7 + $0x150] sm:$0xff]
    %v3250 = vld [vmem:[#allocation7 + $0x158] sm:$0xff]
    %v3251 = vld [vmem:[#allocation7 + $0x160] sm:$0xff]
    %v3252 = vld [vmem:[#allocation7 + $0x168] sm:$0xff]
    %v3253 = vld [vmem:[#allocation7 + $0x170] sm:$0xff]
    %v3254 = vld [vmem:[#allocation7 + $0x178] sm:$0xff]
    %v3255 = vld [vmem:[#allocation7 + $0x180] sm:$0xff]
    %v3256 = vld [vmem:[#allocation7 + $0x188] sm:$0xff]
    %v3257 = vld [vmem:[#allocation7 + $0x190] sm:$0xff]
    %v3258 = vld [vmem:[#allocation7 + $0x198] sm:$0xff]
    %v3259 = vld [vmem:[#allocation7 + $0x1a0] sm:$0xff]
    %v3260 = vld [vmem:[#allocation7 + $0x1a8] sm:$0xff]
    %v3261 = vld [vmem:[#allocation7 + $0x1b0] sm:$0xff]
    %v3262 = vld [vmem:[#allocation7 + $0x1b8] sm:$0xff]
    %v3263 = vld [vmem:[#allocation7 + $0x1c0] sm:$0xff]
    %v3264 = vld [vmem:[#allocation7 + $0x1c8] sm:$0xff]
    %v3265 = vld [vmem:[#allocation7 + $0x1d0] sm:$0xff]
    %v3266 = vld [vmem:[#allocation7 + $0x1d8] sm:$0xff]
    %v3267 = vld [vmem:[#allocation7 + $0x1e0] sm:$0xff]
    %v3268 = vld [vmem:[#allocation7 + $0x1e8] sm:$0xff]
    %v3269 = vld [vmem:[#allocation7 + $0x1f0] sm:$0xff]
    %v3270 = vld [vmem:[#allocation7 + $0x1f8] sm:$0xff]
    %v3271 = vld [vmem:[#allocation7 + $0x200] sm:$0xff]
    %v3272 = vld [vmem:[#allocation7 + $0x208] sm:$0xff]
    %v3273 = vld [vmem:[#allocation7 + $0x210] sm:$0xff]
    %v3274 = vld [vmem:[#allocation7 + $0x218] sm:$0xff]
    %v3275 = vld [vmem:[#allocation7 + $0x220] sm:$0xff]
    %v3276 = vld [vmem:[#allocation7 + $0x228] sm:$0xff]
    %v3277 = vld [vmem:[#allocation7 + $0x230] sm:$0xff]
    %v3278 = vld [vmem:[#allocation7 + $0x238] sm:$0xff]
    %v3279 = vld [vmem:[#allocation7 + $0x240] sm:$0xff]
    %v3280 = vld [vmem:[#allocation7 + $0x248] sm:$0xff]
    %v3281 = vld [vmem:[#allocation7 + $0x250] sm:$0xff]
    %v3282 = vld [vmem:[#allocation7 + $0x258] sm:$0xff]
    %v3283 = vld [vmem:[#allocation7 + $0x260] sm:$0xff]
    %v3284 = vld [vmem:[#allocation7 + $0x268] sm:$0xff]
    %v3285 = vld [vmem:[#allocation7 + $0x270] sm:$0xff]
    %v3286 = vld [vmem:[#allocation7 + $0x278] sm:$0xff]
    %v3287 = vld [vmem:[#allocation7 + $0x280] sm:$0xff]
    %v3288 = vld [vmem:[#allocation7 + $0x288] sm:$0xff]
    %v3289 = vld [vmem:[#allocation7 + $0x290] sm:$0xff]
    %v3290 = vld [vmem:[#allocation7 + $0x298] sm:$0xff]
    %v3291 = vld [vmem:[#allocation7 + $0x2a0] sm:$0xff]
    %v3292 = vld [vmem:[#allocation7 + $0x2a8] sm:$0xff]
    %v3293 = vld [vmem:[#allocation7 + $0x2b0] sm:$0xff]
    %v3294 = vld [vmem:[#allocation7 + $0x2b8] sm:$0xff]
    %v3295 = vld [vmem:[#allocation7 + $0x2c0] sm:$0xff]
    %v3296 = vld [vmem:[#allocation7 + $0x2c8] sm:$0xff]
    %v3297 = vld [vmem:[#allocation7 + $0x2d0] sm:$0xff]
    %v3298 = vld [vmem:[#allocation7 + $0x2d8] sm:$0xff]
    %v3299 = vld [vmem:[#allocation7 + $0x2e0] sm:$0xff]
    %v3300 = vld [vmem:[#allocation7 + $0x2e8] sm:$0xff]
    %v3301 = vld [vmem:[#allocation7 + $0x2f0] sm:$0xff]
    %v3302 = vld [vmem:[#allocation7 + $0x2f8] sm:$0xff]
    %v3303 = vld [vmem:[#allocation7 + $0x300] sm:$0xff]
    %v3304 = vld [vmem:[#allocation7 + $0x308] sm:$0xff]
    %v3305 = vld [vmem:[#allocation7 + $0x310] sm:$0xff]
    %v3306 = vld [vmem:[#allocation7 + $0x318] sm:$0xff]
    %v3307 = vld [vmem:[#allocation7 + $0x320] sm:$0xff]
    %v3308 = vld [vmem:[#allocation7 + $0x328] sm:$0xff]
    %v3309 = vld [vmem:[#allocation7 + $0x330] sm:$0xff]
    %v3310 = vld [vmem:[#allocation7 + $0x338] sm:$0xff]
    %v3311 = vld [vmem:[#allocation7 + $0x340] sm:$0xff]
    %v3312 = vld [vmem:[#allocation7 + $0x348] sm:$0xff]
    %v3313 = vld [vmem:[#allocation7 + $0x350] sm:$0xff]
    %v3314 = vld [vmem:[#allocation7 + $0x358] sm:$0xff]
    %v3315 = vld [vmem:[#allocation7 + $0x360] sm:$0xff]
    %v3316 = vld [vmem:[#allocation7 + $0x368] sm:$0xff]
    %v3317 = vld [vmem:[#allocation7 + $0x370] sm:$0xff]
    %v3318 = vld [vmem:[#allocation7 + $0x378] sm:$0xff]
    %v3319 = vld [vmem:[#allocation7 + $0x380] sm:$0xff]
    %v3320 = vld [vmem:[#allocation7 + $0x388] sm:$0xff]
    %v3321 = vld [vmem:[#allocation7 + $0x390] sm:$0xff]
    %v3322 = vld [vmem:[#allocation7 + $0x398] sm:$0xff]
    %v3323 = vld [vmem:[#allocation7 + $0x3a0] sm:$0xff]
    %v3324 = vld [vmem:[#allocation7 + $0x3a8] sm:$0xff]
    %v3325 = vld [vmem:[#allocation7 + $0x3b0] sm:$0xff]
    %v3326 = vld [vmem:[#allocation7 + $0x3b8] sm:$0xff]
    %v3327 = vld [vmem:[#allocation7 + $0x3c0] sm:$0xff]
    %v3328 = vld [vmem:[#allocation7 + $0x3c8] sm:$0xff]
    %v3329 = vld [vmem:[#allocation7 + $0x3d0] sm:$0xff]
    %v3330 = vld [vmem:[#allocation7 + $0x3d8] sm:$0xff]
    %v3331 = vld [vmem:[#allocation7 + $0x3e0] sm:$0xff]
    %v3332 = vld [vmem:[#allocation7 + $0x3e8] sm:$0xff]
    %v3333 = vld [vmem:[#allocation7 + $0x3f0] sm:$0xff]
    %v3334 = vld [vmem:[#allocation7 + $0x3f8] sm:$0xff]
    %v3335 = vld [vmem:[#allocation7 + $0x400] sm:$0xff]
    %v3336 = vld [vmem:[#allocation7 + $0x408] sm:$0xff]
    %v3337 = vld [vmem:[#allocation7 + $0x410] sm:$0xff]
    %v3338 = vld [vmem:[#allocation7 + $0x418] sm:$0xff]
    %v3339 = vld [vmem:[#allocation7 + $0x420] sm:$0xff]
    %v3340 = vld [vmem:[#allocation7 + $0x428] sm:$0xff]
    %v3341 = vld [vmem:[#allocation7 + $0x430] sm:$0xff]
    %v3342 = vld [vmem:[#allocation7 + $0x438] sm:$0xff]
    %v3343 = vld [vmem:[#allocation7 + $0x440] sm:$0xff]
    %v3344 = vld [vmem:[#allocation7 + $0x448] sm:$0xff]
    %v3345 = vld [vmem:[#allocation7 + $0x450] sm:$0xff]
    %v3346 = vld [vmem:[#allocation7 + $0x458] sm:$0xff]
    %v3347 = vld [vmem:[#allocation7 + $0x460] sm:$0xff]
    %v3348 = vld [vmem:[#allocation7 + $0x468] sm:$0xff]
    %v3349 = vld [vmem:[#allocation7 + $0x470] sm:$0xff]
    %v3350 = vld [vmem:[#allocation7 + $0x478] sm:$0xff]
    %v3351 = vld [vmem:[#allocation7 + $0x480] sm:$0xff]
    %v3352 = vld [vmem:[#allocation7 + $0x488] sm:$0xff]
    %v3353 = vld [vmem:[#allocation7 + $0x490] sm:$0xff]
    %v3354 = vld [vmem:[#allocation7 + $0x498] sm:$0xff]
    %v3355 = vld [vmem:[#allocation7 + $0x4a0] sm:$0xff]
    %v3356 = vld [vmem:[#allocation7 + $0x4a8] sm:$0xff]
    %v3357 = vld [vmem:[#allocation7 + $0x4b0] sm:$0xff]
    %v3358 = vld [vmem:[#allocation7 + $0x4b8] sm:$0xff]
    %v3359 = vld [vmem:[#allocation7 + $0x4c0] sm:$0xff]
    %v3360 = vld [vmem:[#allocation7 + $0x4c8] sm:$0xff]
    %v3361 = vld [vmem:[#allocation7 + $0x4d0] sm:$0xff]
    %v3362 = vld [vmem:[#allocation7 + $0x4d8] sm:$0xff]
    %v3363 = vld [vmem:[#allocation7 + $0x4e0] sm:$0xff]
    %v3364 = vld [vmem:[#allocation7 + $0x4e8] sm:$0xff]
    %v3365 = vld [vmem:[#allocation7 + $0x4f0] sm:$0xff]
    %v3366 = vld [vmem:[#allocation7 + $0x4f8] sm:$0xff]
    %v3367 = vld [vmem:[#allocation7 + $0x500] sm:$0xff]
    %v3368 = vld [vmem:[#allocation7 + $0x508] sm:$0xff]
    %v3369 = vld [vmem:[#allocation7 + $0x510] sm:$0xff]
    %v3370 = vld [vmem:[#allocation7 + $0x518] sm:$0xff]
    %v3371 = vld [vmem:[#allocation7 + $0x520] sm:$0xff]
    %v3372 = vld [vmem:[#allocation7 + $0x528] sm:$0xff]
    %v3373 = vld [vmem:[#allocation7 + $0x530] sm:$0xff]
    %v3374 = vld [vmem:[#allocation7 + $0x538] sm:$0xff]
    %v3375 = vld [vmem:[#allocation7 + $0x540] sm:$0xff]
    %v3376 = vld [vmem:[#allocation7 + $0x548] sm:$0xff]
    %v3377 = vld [vmem:[#allocation7 + $0x550] sm:$0xff]
    %v3378 = vld [vmem:[#allocation7 + $0x558] sm:$0xff]
    %v3379 = vld [vmem:[#allocation7 + $0x560] sm:$0xff]
    %v3380 = vld [vmem:[#allocation7 + $0x568] sm:$0xff]
    %v3381 = vld [vmem:[#allocation7 + $0x570] sm:$0xff]
    %v3382 = vld [vmem:[#allocation7 + $0x578] sm:$0xff]
    %v3383 = vld [vmem:[#allocation7 + $0x580] sm:$0xff]
    %v3384 = vld [vmem:[#allocation7 + $0x588] sm:$0xff]
    %v3385 = vld [vmem:[#allocation7 + $0x590] sm:$0xff]
    %v3386 = vld [vmem:[#allocation7 + $0x598] sm:$0xff]
    %v3387 = vld [vmem:[#allocation7 + $0x5a0] sm:$0xff]
    %v3388 = vld [vmem:[#allocation7 + $0x5a8] sm:$0xff]
    %v3389 = vld [vmem:[#allocation7 + $0x5b0] sm:$0xff]
    %v3390 = vld [vmem:[#allocation7 + $0x5b8] sm:$0xff]
    %v3391 = vld [vmem:[#allocation7 + $0x5c0] sm:$0xff]
    %v3392 = vld [vmem:[#allocation7 + $0x5c8] sm:$0xff]
    %v3393 = vld [vmem:[#allocation7 + $0x5d0] sm:$0xff]
    %v3394 = vld [vmem:[#allocation7 + $0x5d8] sm:$0xff]
    %v3395 = vld [vmem:[#allocation7 + $0x5e0] sm:$0xff]
    %v3396 = vld [vmem:[#allocation7 + $0x5e8] sm:$0xff]
    %v3397 = vld [vmem:[#allocation7 + $0x5f0] sm:$0xff]
    %v3398 = vld [vmem:[#allocation7 + $0x5f8] sm:$0xff]
    %v3399 = vld [vmem:[#allocation7 + $0x600] sm:$0xff]
    %v3400 = vld [vmem:[#allocation7 + $0x608] sm:$0xff]
    %v3401 = vld [vmem:[#allocation7 + $0x610] sm:$0xff]
    %v3402 = vld [vmem:[#allocation7 + $0x618] sm:$0xff]
    %v3403 = vld [vmem:[#allocation7 + $0x620] sm:$0xff]
    %v3404 = vld [vmem:[#allocation7 + $0x628] sm:$0xff]
    %v3405 = vld [vmem:[#allocation7 + $0x630] sm:$0xff]
    %v3406 = vld [vmem:[#allocation7 + $0x638] sm:$0xff]
    %v3407 = vld [vmem:[#allocation7 + $0x640] sm:$0xff]
    %v3408 = vld [vmem:[#allocation7 + $0x648] sm:$0xff]
    %v3409 = vld [vmem:[#allocation7 + $0x650] sm:$0xff]
    %v3410 = vld [vmem:[#allocation7 + $0x658] sm:$0xff]
    %v3411 = vld [vmem:[#allocation7 + $0x660] sm:$0xff]
    %v3412 = vld [vmem:[#allocation7 + $0x668] sm:$0xff]
    %v3413 = vld [vmem:[#allocation7 + $0x670] sm:$0xff]
    %v3414 = vld [vmem:[#allocation7 + $0x678] sm:$0xff]
    %v3415 = vld [vmem:[#allocation7 + $0x680] sm:$0xff]
    %v3416 = vld [vmem:[#allocation7 + $0x688] sm:$0xff]
    %v3417 = vld [vmem:[#allocation7 + $0x690] sm:$0xff]
    %v3418 = vld [vmem:[#allocation7 + $0x698] sm:$0xff]
    %v3419 = vld [vmem:[#allocation7 + $0x6a0] sm:$0xff]
    %v3420 = vld [vmem:[#allocation7 + $0x6a8] sm:$0xff]
    %v3421 = vld [vmem:[#allocation7 + $0x6b0] sm:$0xff]
    %v3422 = vld [vmem:[#allocation7 + $0x6b8] sm:$0xff]
    %v3423 = vld [vmem:[#allocation7 + $0x6c0] sm:$0xff]
    %v3424 = vld [vmem:[#allocation7 + $0x6c8] sm:$0xff]
    %v3425 = vld [vmem:[#allocation7 + $0x6d0] sm:$0xff]
    %v3426 = vld [vmem:[#allocation7 + $0x6d8] sm:$0xff]
    %v3427 = vld [vmem:[#allocation7 + $0x6e0] sm:$0xff]
    %v3428 = vld [vmem:[#allocation7 + $0x6e8] sm:$0xff]
    %v3429 = vld [vmem:[#allocation7 + $0x6f0] sm:$0xff]
    %v3430 = vld [vmem:[#allocation7 + $0x6f8] sm:$0xff]
    %v3431 = vld [vmem:[#allocation7 + $0x700] sm:$0xff]
    %v3432 = vld [vmem:[#allocation7 + $0x708] sm:$0xff]
    %v3433 = vld [vmem:[#allocation7 + $0x710] sm:$0xff]
    %v3434 = vld [vmem:[#allocation7 + $0x718] sm:$0xff]
    %v3435 = vld [vmem:[#allocation7 + $0x720] sm:$0xff]
    %v3436 = vld [vmem:[#allocation7 + $0x728] sm:$0xff]
    %v3437 = vld [vmem:[#allocation7 + $0x730] sm:$0xff]
    %v3438 = vld [vmem:[#allocation7 + $0x738] sm:$0xff]
    %v3439 = vld [vmem:[#allocation7 + $0x740] sm:$0xff]
    %v3440 = vld [vmem:[#allocation7 + $0x748] sm:$0xff]
    %v3441 = vld [vmem:[#allocation7 + $0x750] sm:$0xff]
    %v3442 = vld [vmem:[#allocation7 + $0x758] sm:$0xff]
    %v3443 = vld [vmem:[#allocation7 + $0x760] sm:$0xff]
    %v3444 = vld [vmem:[#allocation7 + $0x768] sm:$0xff]
    %v3445 = vld [vmem:[#allocation7 + $0x770] sm:$0xff]
    %v3446 = vld [vmem:[#allocation7 + $0x778] sm:$0xff]
    %v3447 = vld [vmem:[#allocation7 + $0x780] sm:$0xff]
    %v3448 = vld [vmem:[#allocation7 + $0x788] sm:$0xff]
    %v3449 = vld [vmem:[#allocation7 + $0x790] sm:$0xff]
    %v3450 = vld [vmem:[#allocation7 + $0x798] sm:$0xff]
    %v3451 = vld [vmem:[#allocation7 + $0x7a0] sm:$0xff]
    %v3452 = vld [vmem:[#allocation7 + $0x7a8] sm:$0xff]
    %v3453 = vld [vmem:[#allocation7 + $0x7b0] sm:$0xff]
    %v3454 = vld [vmem:[#allocation7 + $0x7b8] sm:$0xff]
    %v3455 = vld [vmem:[#allocation7 + $0x7c0] sm:$0xff]
    %v3456 = vld [vmem:[#allocation7 + $0x7c8] sm:$0xff]
    %v3457 = vld [vmem:[#allocation7 + $0x7d0] sm:$0xff]
    %v3458 = vld [vmem:[#allocation7 + $0x7d8] sm:$0xff]
    %v3459 = vld [vmem:[#allocation7 + $0x7e0] sm:$0xff]
    %v3460 = vld [vmem:[#allocation7 + $0x7e8] sm:$0xff]
    %v3461 = vld [vmem:[#allocation7 + $0x7f0] sm:$0xff]
    %v3462 = vld [vmem:[#allocation7 + $0x7f8] sm:$0xff]
    %v3463 = vld [vmem:[#allocation8] sm:$0xf]
    %v3465 = vlaneseq
    %v3466 = vshrl.u32 %v3465, 7
    %v3467 = vsub.s32 0, %v3466
    %v3468 = vrot.slane %v3463, %v3467
    %v3469 = vlaneseq
    %v3470 = vshrl.u32 %v3469, 7
    %v3471 = vsub.s32 1, %v3470
    %v3472 = vrot.slane %v3463, %v3471
    %v3473 = vlaneseq
    %v3474 = vshrl.u32 %v3473, 7
    %v3475 = vsub.s32 2, %v3474
    %v3476 = vrot.slane %v3463, %v3475
    %v3477 = vlaneseq
    %v3478 = vshrl.u32 %v3477, 7
    %v3479 = vsub.s32 3, %v3478
    %v3480 = vrot.slane %v3463, %v3479
    %v3741 = vunpack.c.l.b16 %v3207
    %v3742 = vunpack.c.h.b16 %v3207
    %v3743 = vunpack.c.l.b16 %v3208
    %v3744 = vunpack.c.h.b16 %v3208
    %v3745 = vunpack.c.l.b16 %v3209
    %v3746 = vunpack.c.h.b16 %v3209
    %v3747 = vunpack.c.l.b16 %v3210
    %v3748 = vunpack.c.h.b16 %v3210
    %v3749 = vunpack.c.l.b16 %v3211
    %v3750 = vunpack.c.h.b16 %v3211
    %v3751 = vunpack.c.l.b16 %v3212
    %v3752 = vunpack.c.h.b16 %v3212
    %v3753 = vunpack.c.l.b16 %v3213
    %v3754 = vunpack.c.h.b16 %v3213
    %v3755 = vunpack.c.l.b16 %v3214
    %v3756 = vunpack.c.h.b16 %v3214
    %v3757 = vunpack.c.l.b16 %v3215
    %v3758 = vunpack.c.h.b16 %v3215
    %v3759 = vunpack.c.l.b16 %v3216
    %v3760 = vunpack.c.h.b16 %v3216
    %v3761 = vunpack.c.l.b16 %v3217
    %v3762 = vunpack.c.h.b16 %v3217
    %v3763 = vunpack.c.l.b16 %v3218
    %v3764 = vunpack.c.h.b16 %v3218
    %v3765 = vunpack.c.l.b16 %v3219
    %v3766 = vunpack.c.h.b16 %v3219
    %v3767 = vunpack.c.l.b16 %v3220
    %v3768 = vunpack.c.h.b16 %v3220
    %v3769 = vunpack.c.l.b16 %v3221
    %v3770 = vunpack.c.h.b16 %v3221
    %v3771 = vunpack.c.l.b16 %v3222
    %v3772 = vunpack.c.h.b16 %v3222
    %v3773 = vunpack.c.l.b16 %v3223
    %v3774 = vunpack.c.h.b16 %v3223
    %v3775 = vunpack.c.l.b16 %v3224
    %v3776 = vunpack.c.h.b16 %v3224
    %v3777 = vunpack.c.l.b16 %v3225
    %v3778 = vunpack.c.h.b16 %v3225
    %v3779 = vunpack.c.l.b16 %v3226
    %v3780 = vunpack.c.h.b16 %v3226
    %v3781 = vunpack.c.l.b16 %v3227
    %v3782 = vunpack.c.h.b16 %v3227
    %v3783 = vunpack.c.l.b16 %v3228
    %v3784 = vunpack.c.h.b16 %v3228
    %v3785 = vunpack.c.l.b16 %v3229
    %v3786 = vunpack.c.h.b16 %v3229
    %v3787 = vunpack.c.l.b16 %v3230
    %v3788 = vunpack.c.h.b16 %v3230
    %v3789 = vunpack.c.l.b16 %v3231
    %v3790 = vunpack.c.h.b16 %v3231
    %v3791 = vunpack.c.l.b16 %v3232
    %v3792 = vunpack.c.h.b16 %v3232
    %v3793 = vunpack.c.l.b16 %v3233
    %v3794 = vunpack.c.h.b16 %v3233
    %v3795 = vunpack.c.l.b16 %v3234
    %v3796 = vunpack.c.h.b16 %v3234
    %v3797 = vunpack.c.l.b16 %v3235
    %v3798 = vunpack.c.h.b16 %v3235
    %v3799 = vunpack.c.l.b16 %v3236
    %v3800 = vunpack.c.h.b16 %v3236
    %v3801 = vunpack.c.l.b16 %v3237
    %v3802 = vunpack.c.h.b16 %v3237
    %v3803 = vunpack.c.l.b16 %v3238
    %v3804 = vunpack.c.h.b16 %v3238
    %v3805 = vunpack.c.l.b16 %v3239
    %v3806 = vunpack.c.h.b16 %v3239
    %v3807 = vunpack.c.l.b16 %v3240
    %v3808 = vunpack.c.h.b16 %v3240
    %v3809 = vunpack.c.l.b16 %v3241
    %v3810 = vunpack.c.h.b16 %v3241
    %v3811 = vunpack.c.l.b16 %v3242
    %v3812 = vunpack.c.h.b16 %v3242
    %v3813 = vunpack.c.l.b16 %v3243
    %v3814 = vunpack.c.h.b16 %v3243
    %v3815 = vunpack.c.l.b16 %v3244
    %v3816 = vunpack.c.h.b16 %v3244
    %v3817 = vunpack.c.l.b16 %v3245
    %v3818 = vunpack.c.h.b16 %v3245
    %v3819 = vunpack.c.l.b16 %v3246
    %v3820 = vunpack.c.h.b16 %v3246
    %v3821 = vunpack.c.l.b16 %v3247
    %v3822 = vunpack.c.h.b16 %v3247
    %v3823 = vunpack.c.l.b16 %v3248
    %v3824 = vunpack.c.h.b16 %v3248
    %v3825 = vunpack.c.l.b16 %v3249
    %v3826 = vunpack.c.h.b16 %v3249
    %v3827 = vunpack.c.l.b16 %v3250
    %v3828 = vunpack.c.h.b16 %v3250
    %v3829 = vunpack.c.l.b16 %v3251
    %v3830 = vunpack.c.h.b16 %v3251
    %v3831 = vunpack.c.l.b16 %v3252
    %v3832 = vunpack.c.h.b16 %v3252
    %v3833 = vunpack.c.l.b16 %v3253
    %v3834 = vunpack.c.h.b16 %v3253
    %v3835 = vunpack.c.l.b16 %v3254
    %v3836 = vunpack.c.h.b16 %v3254
    %v3837 = vunpack.c.l.b16 %v3255
    %v3838 = vunpack.c.h.b16 %v3255
    %v3839 = vunpack.c.l.b16 %v3256
    %v3840 = vunpack.c.h.b16 %v3256
    %v3841 = vunpack.c.l.b16 %v3257
    %v3842 = vunpack.c.h.b16 %v3257
    %v3843 = vunpack.c.l.b16 %v3258
    %v3844 = vunpack.c.h.b16 %v3258
    %v3845 = vunpack.c.l.b16 %v3259
    %v3846 = vunpack.c.h.b16 %v3259
    %v3847 = vunpack.c.l.b16 %v3260
    %v3848 = vunpack.c.h.b16 %v3260
    %v3849 = vunpack.c.l.b16 %v3261
    %v3850 = vunpack.c.h.b16 %v3261
    %v3851 = vunpack.c.l.b16 %v3262
    %v3852 = vunpack.c.h.b16 %v3262
    %v3853 = vunpack.c.l.b16 %v3263
    %v3854 = vunpack.c.h.b16 %v3263
    %v3855 = vunpack.c.l.b16 %v3264
    %v3856 = vunpack.c.h.b16 %v3264
    %v3857 = vunpack.c.l.b16 %v3265
    %v3858 = vunpack.c.h.b16 %v3265
    %v3859 = vunpack.c.l.b16 %v3266
    %v3860 = vunpack.c.h.b16 %v3266
    %v3861 = vunpack.c.l.b16 %v3267
    %v3862 = vunpack.c.h.b16 %v3267
    %v3863 = vunpack.c.l.b16 %v3268
    %v3864 = vunpack.c.h.b16 %v3268
    %v3865 = vunpack.c.l.b16 %v3269
    %v3866 = vunpack.c.h.b16 %v3269
    %v3867 = vunpack.c.l.b16 %v3270
    %v3868 = vunpack.c.h.b16 %v3270
    %v3869 = vunpack.c.l.b16 %v3271
    %v3870 = vunpack.c.h.b16 %v3271
    %v3871 = vunpack.c.l.b16 %v3272
    %v3872 = vunpack.c.h.b16 %v3272
    %v3873 = vunpack.c.l.b16 %v3273
    %v3874 = vunpack.c.h.b16 %v3273
    %v3875 = vunpack.c.l.b16 %v3274
    %v3876 = vunpack.c.h.b16 %v3274
    %v3877 = vunpack.c.l.b16 %v3275
    %v3878 = vunpack.c.h.b16 %v3275
    %v3879 = vunpack.c.l.b16 %v3276
    %v3880 = vunpack.c.h.b16 %v3276
    %v3881 = vunpack.c.l.b16 %v3277
    %v3882 = vunpack.c.h.b16 %v3277
    %v3883 = vunpack.c.l.b16 %v3278
    %v3884 = vunpack.c.h.b16 %v3278
    %v3885 = vunpack.c.l.b16 %v3279
    %v3886 = vunpack.c.h.b16 %v3279
    %v3887 = vunpack.c.l.b16 %v3280
    %v3888 = vunpack.c.h.b16 %v3280
    %v3889 = vunpack.c.l.b16 %v3281
    %v3890 = vunpack.c.h.b16 %v3281
    %v3891 = vunpack.c.l.b16 %v3282
    %v3892 = vunpack.c.h.b16 %v3282
    %v3893 = vunpack.c.l.b16 %v3283
    %v3894 = vunpack.c.h.b16 %v3283
    %v3895 = vunpack.c.l.b16 %v3284
    %v3896 = vunpack.c.h.b16 %v3284
    %v3897 = vunpack.c.l.b16 %v3285
    %v3898 = vunpack.c.h.b16 %v3285
    %v3899 = vunpack.c.l.b16 %v3286
    %v3900 = vunpack.c.h.b16 %v3286
    %v3901 = vunpack.c.l.b16 %v3287
    %v3902 = vunpack.c.h.b16 %v3287
    %v3903 = vunpack.c.l.b16 %v3288
    %v3904 = vunpack.c.h.b16 %v3288
    %v3905 = vunpack.c.l.b16 %v3289
    %v3906 = vunpack.c.h.b16 %v3289
    %v3907 = vunpack.c.l.b16 %v3290
    %v3908 = vunpack.c.h.b16 %v3290
    %v3909 = vunpack.c.l.b16 %v3291
    %v3910 = vunpack.c.h.b16 %v3291
    %v3911 = vunpack.c.l.b16 %v3292
    %v3912 = vunpack.c.h.b16 %v3292
    %v3913 = vunpack.c.l.b16 %v3293
    %v3914 = vunpack.c.h.b16 %v3293
    %v3915 = vunpack.c.l.b16 %v3294
    %v3916 = vunpack.c.h.b16 %v3294
    %v3917 = vunpack.c.l.b16 %v3295
    %v3918 = vunpack.c.h.b16 %v3295
    %v3919 = vunpack.c.l.b16 %v3296
    %v3920 = vunpack.c.h.b16 %v3296
    %v3921 = vunpack.c.l.b16 %v3297
    %v3922 = vunpack.c.h.b16 %v3297
    %v3923 = vunpack.c.l.b16 %v3298
    %v3924 = vunpack.c.h.b16 %v3298
    %v3925 = vunpack.c.l.b16 %v3299
    %v3926 = vunpack.c.h.b16 %v3299
    %v3927 = vunpack.c.l.b16 %v3300
    %v3928 = vunpack.c.h.b16 %v3300
    %v3929 = vunpack.c.l.b16 %v3301
    %v3930 = vunpack.c.h.b16 %v3301
    %v3931 = vunpack.c.l.b16 %v3302
    %v3932 = vunpack.c.h.b16 %v3302
    %v3933 = vunpack.c.l.b16 %v3303
    %v3934 = vunpack.c.h.b16 %v3303
    %v3935 = vunpack.c.l.b16 %v3304
    %v3936 = vunpack.c.h.b16 %v3304
    %v3937 = vunpack.c.l.b16 %v3305
    %v3938 = vunpack.c.h.b16 %v3305
    %v3939 = vunpack.c.l.b16 %v3306
    %v3940 = vunpack.c.h.b16 %v3306
    %v3941 = vunpack.c.l.b16 %v3307
    %v3942 = vunpack.c.h.b16 %v3307
    %v3943 = vunpack.c.l.b16 %v3308
    %v3944 = vunpack.c.h.b16 %v3308
    %v3945 = vunpack.c.l.b16 %v3309
    %v3946 = vunpack.c.h.b16 %v3309
    %v3947 = vunpack.c.l.b16 %v3310
    %v3948 = vunpack.c.h.b16 %v3310
    %v3949 = vunpack.c.l.b16 %v3311
    %v3950 = vunpack.c.h.b16 %v3311
    %v3951 = vunpack.c.l.b16 %v3312
    %v3952 = vunpack.c.h.b16 %v3312
    %v3953 = vunpack.c.l.b16 %v3313
    %v3954 = vunpack.c.h.b16 %v3313
    %v3955 = vunpack.c.l.b16 %v3314
    %v3956 = vunpack.c.h.b16 %v3314
    %v3957 = vunpack.c.l.b16 %v3315
    %v3958 = vunpack.c.h.b16 %v3315
    %v3959 = vunpack.c.l.b16 %v3316
    %v3960 = vunpack.c.h.b16 %v3316
    %v3961 = vunpack.c.l.b16 %v3317
    %v3962 = vunpack.c.h.b16 %v3317
    %v3963 = vunpack.c.l.b16 %v3318
    %v3964 = vunpack.c.h.b16 %v3318
    %v3965 = vunpack.c.l.b16 %v3319
    %v3966 = vunpack.c.h.b16 %v3319
    %v3967 = vunpack.c.l.b16 %v3320
    %v3968 = vunpack.c.h.b16 %v3320
    %v3969 = vunpack.c.l.b16 %v3321
    %v3970 = vunpack.c.h.b16 %v3321
    %v3971 = vunpack.c.l.b16 %v3322
    %v3972 = vunpack.c.h.b16 %v3322
    %v3973 = vunpack.c.l.b16 %v3323
    %v3974 = vunpack.c.h.b16 %v3323
    %v3975 = vunpack.c.l.b16 %v3324
    %v3976 = vunpack.c.h.b16 %v3324
    %v3977 = vunpack.c.l.b16 %v3325
    %v3978 = vunpack.c.h.b16 %v3325
    %v3979 = vunpack.c.l.b16 %v3326
    %v3980 = vunpack.c.h.b16 %v3326
    %v3981 = vunpack.c.l.b16 %v3327
    %v3982 = vunpack.c.h.b16 %v3327
    %v3983 = vunpack.c.l.b16 %v3328
    %v3984 = vunpack.c.h.b16 %v3328
    %v3985 = vunpack.c.l.b16 %v3329
    %v3986 = vunpack.c.h.b16 %v3329
    %v3987 = vunpack.c.l.b16 %v3330
    %v3988 = vunpack.c.h.b16 %v3330
    %v3989 = vunpack.c.l.b16 %v3331
    %v3990 = vunpack.c.h.b16 %v3331
    %v3991 = vunpack.c.l.b16 %v3332
    %v3992 = vunpack.c.h.b16 %v3332
    %v3993 = vunpack.c.l.b16 %v3333
    %v3994 = vunpack.c.h.b16 %v3333
    %v3995 = vunpack.c.l.b16 %v3334
    %v3996 = vunpack.c.h.b16 %v3334
    %v3997 = vunpack.c.l.b16 %v3335
    %v3998 = vunpack.c.h.b16 %v3335
    %v3999 = vunpack.c.l.b16 %v3336
    %v4000 = vunpack.c.h.b16 %v3336
    %v4001 = vunpack.c.l.b16 %v3337
    %v4002 = vunpack.c.h.b16 %v3337
    %v4003 = vunpack.c.l.b16 %v3338
    %v4004 = vunpack.c.h.b16 %v3338
    %v4005 = vunpack.c.l.b16 %v3339
    %v4006 = vunpack.c.h.b16 %v3339
    %v4007 = vunpack.c.l.b16 %v3340
    %v4008 = vunpack.c.h.b16 %v3340
    %v4009 = vunpack.c.l.b16 %v3341
    %v4010 = vunpack.c.h.b16 %v3341
    %v4011 = vunpack.c.l.b16 %v3342
    %v4012 = vunpack.c.h.b16 %v3342
    %v4013 = vunpack.c.l.b16 %v3343
    %v4014 = vunpack.c.h.b16 %v3343
    %v4015 = vunpack.c.l.b16 %v3344
    %v4016 = vunpack.c.h.b16 %v3344
    %v4017 = vunpack.c.l.b16 %v3345
    %v4018 = vunpack.c.h.b16 %v3345
    %v4019 = vunpack.c.l.b16 %v3346
    %v4020 = vunpack.c.h.b16 %v3346
    %v4021 = vunpack.c.l.b16 %v3347
    %v4022 = vunpack.c.h.b16 %v3347
    %v4023 = vunpack.c.l.b16 %v3348
    %v4024 = vunpack.c.h.b16 %v3348
    %v4025 = vunpack.c.l.b16 %v3349
    %v4026 = vunpack.c.h.b16 %v3349
    %v4027 = vunpack.c.l.b16 %v3350
    %v4028 = vunpack.c.h.b16 %v3350
    %v4029 = vunpack.c.l.b16 %v3351
    %v4030 = vunpack.c.h.b16 %v3351
    %v4031 = vunpack.c.l.b16 %v3352
    %v4032 = vunpack.c.h.b16 %v3352
    %v4033 = vunpack.c.l.b16 %v3353
    %v4034 = vunpack.c.h.b16 %v3353
    %v4035 = vunpack.c.l.b16 %v3354
    %v4036 = vunpack.c.h.b16 %v3354
    %v4037 = vunpack.c.l.b16 %v3355
    %v4038 = vunpack.c.h.b16 %v3355
    %v4039 = vunpack.c.l.b16 %v3356
    %v4040 = vunpack.c.h.b16 %v3356
    %v4041 = vunpack.c.l.b16 %v3357
    %v4042 = vunpack.c.h.b16 %v3357
    %v4043 = vunpack.c.l.b16 %v3358
    %v4044 = vunpack.c.h.b16 %v3358
    %v4045 = vunpack.c.l.b16 %v3359
    %v4046 = vunpack.c.h.b16 %v3359
    %v4047 = vunpack.c.l.b16 %v3360
    %v4048 = vunpack.c.h.b16 %v3360
    %v4049 = vunpack.c.l.b16 %v3361
    %v4050 = vunpack.c.h.b16 %v3361
    %v4051 = vunpack.c.l.b16 %v3362
    %v4052 = vunpack.c.h.b16 %v3362
    %v4053 = vunpack.c.l.b16 %v3363
    %v4054 = vunpack.c.h.b16 %v3363
    %v4055 = vunpack.c.l.b16 %v3364
    %v4056 = vunpack.c.h.b16 %v3364
    %v4057 = vunpack.c.l.b16 %v3365
    %v4058 = vunpack.c.h.b16 %v3365
    %v4059 = vunpack.c.l.b16 %v3366
    %v4060 = vunpack.c.h.b16 %v3366
    %v4061 = vunpack.c.l.b16 %v3367
    %v4062 = vunpack.c.h.b16 %v3367
    %v4063 = vunpack.c.l.b16 %v3368
    %v4064 = vunpack.c.h.b16 %v3368
    %v4065 = vunpack.c.l.b16 %v3369
    %v4066 = vunpack.c.h.b16 %v3369
    %v4067 = vunpack.c.l.b16 %v3370
    %v4068 = vunpack.c.h.b16 %v3370
    %v4069 = vunpack.c.l.b16 %v3371
    %v4070 = vunpack.c.h.b16 %v3371
    %v4071 = vunpack.c.l.b16 %v3372
    %v4072 = vunpack.c.h.b16 %v3372
    %v4073 = vunpack.c.l.b16 %v3373
    %v4074 = vunpack.c.h.b16 %v3373
    %v4075 = vunpack.c.l.b16 %v3374
    %v4076 = vunpack.c.h.b16 %v3374
    %v4077 = vunpack.c.l.b16 %v3375
    %v4078 = vunpack.c.h.b16 %v3375
    %v4079 = vunpack.c.l.b16 %v3376
    %v4080 = vunpack.c.h.b16 %v3376
    %v4081 = vunpack.c.l.b16 %v3377
    %v4082 = vunpack.c.h.b16 %v3377
    %v4083 = vunpack.c.l.b16 %v3378
    %v4084 = vunpack.c.h.b16 %v3378
    %v4085 = vunpack.c.l.b16 %v3379
    %v4086 = vunpack.c.h.b16 %v3379
    %v4087 = vunpack.c.l.b16 %v3380
    %v4088 = vunpack.c.h.b16 %v3380
    %v4089 = vunpack.c.l.b16 %v3381
    %v4090 = vunpack.c.h.b16 %v3381
    %v4091 = vunpack.c.l.b16 %v3382
    %v4092 = vunpack.c.h.b16 %v3382
    %v4093 = vunpack.c.l.b16 %v3383
    %v4094 = vunpack.c.h.b16 %v3383
    %v4095 = vunpack.c.l.b16 %v3384
    %v4096 = vunpack.c.h.b16 %v3384
    %v4097 = vunpack.c.l.b16 %v3385
    %v4098 = vunpack.c.h.b16 %v3385
    %v4099 = vunpack.c.l.b16 %v3386
    %v4100 = vunpack.c.h.b16 %v3386
    %v4101 = vunpack.c.l.b16 %v3387
    %v4102 = vunpack.c.h.b16 %v3387
    %v4103 = vunpack.c.l.b16 %v3388
    %v4104 = vunpack.c.h.b16 %v3388
    %v4105 = vunpack.c.l.b16 %v3389
    %v4106 = vunpack.c.h.b16 %v3389
    %v4107 = vunpack.c.l.b16 %v3390
    %v4108 = vunpack.c.h.b16 %v3390
    %v4109 = vunpack.c.l.b16 %v3391
    %v4110 = vunpack.c.h.b16 %v3391
    %v4111 = vunpack.c.l.b16 %v3392
    %v4112 = vunpack.c.h.b16 %v3392
    %v4113 = vunpack.c.l.b16 %v3393
    %v4114 = vunpack.c.h.b16 %v3393
    %v4115 = vunpack.c.l.b16 %v3394
    %v4116 = vunpack.c.h.b16 %v3394
    %v4117 = vunpack.c.l.b16 %v3395
    %v4118 = vunpack.c.h.b16 %v3395
    %v4119 = vunpack.c.l.b16 %v3396
    %v4120 = vunpack.c.h.b16 %v3396
    %v4121 = vunpack.c.l.b16 %v3397
    %v4122 = vunpack.c.h.b16 %v3397
    %v4123 = vunpack.c.l.b16 %v3398
    %v4124 = vunpack.c.h.b16 %v3398
    %v4125 = vunpack.c.l.b16 %v3399
    %v4126 = vunpack.c.h.b16 %v3399
    %v4127 = vunpack.c.l.b16 %v3400
    %v4128 = vunpack.c.h.b16 %v3400
    %v4129 = vunpack.c.l.b16 %v3401
    %v4130 = vunpack.c.h.b16 %v3401
    %v4131 = vunpack.c.l.b16 %v3402
    %v4132 = vunpack.c.h.b16 %v3402
    %v4133 = vunpack.c.l.b16 %v3403
    %v4134 = vunpack.c.h.b16 %v3403
    %v4135 = vunpack.c.l.b16 %v3404
    %v4136 = vunpack.c.h.b16 %v3404
    %v4137 = vunpack.c.l.b16 %v3405
    %v4138 = vunpack.c.h.b16 %v3405
    %v4139 = vunpack.c.l.b16 %v3406
    %v4140 = vunpack.c.h.b16 %v3406
    %v4141 = vunpack.c.l.b16 %v3407
    %v4142 = vunpack.c.h.b16 %v3407
    %v4143 = vunpack.c.l.b16 %v3408
    %v4144 = vunpack.c.h.b16 %v3408
    %v4145 = vunpack.c.l.b16 %v3409
    %v4146 = vunpack.c.h.b16 %v3409
    %v4147 = vunpack.c.l.b16 %v3410
    %v4148 = vunpack.c.h.b16 %v3410
    %v4149 = vunpack.c.l.b16 %v3411
    %v4150 = vunpack.c.h.b16 %v3411
    %v4151 = vunpack.c.l.b16 %v3412
    %v4152 = vunpack.c.h.b16 %v3412
    %v4153 = vunpack.c.l.b16 %v3413
    %v4154 = vunpack.c.h.b16 %v3413
    %v4155 = vunpack.c.l.b16 %v3414
    %v4156 = vunpack.c.h.b16 %v3414
    %v4157 = vunpack.c.l.b16 %v3415
    %v4158 = vunpack.c.h.b16 %v3415
    %v4159 = vunpack.c.l.b16 %v3416
    %v4160 = vunpack.c.h.b16 %v3416
    %v4161 = vunpack.c.l.b16 %v3417
    %v4162 = vunpack.c.h.b16 %v3417
    %v4163 = vunpack.c.l.b16 %v3418
    %v4164 = vunpack.c.h.b16 %v3418
    %v4165 = vunpack.c.l.b16 %v3419
    %v4166 = vunpack.c.h.b16 %v3419
    %v4167 = vunpack.c.l.b16 %v3420
    %v4168 = vunpack.c.h.b16 %v3420
    %v4169 = vunpack.c.l.b16 %v3421
    %v4170 = vunpack.c.h.b16 %v3421
    %v4171 = vunpack.c.l.b16 %v3422
    %v4172 = vunpack.c.h.b16 %v3422
    %v4173 = vunpack.c.l.b16 %v3423
    %v4174 = vunpack.c.h.b16 %v3423
    %v4175 = vunpack.c.l.b16 %v3424
    %v4176 = vunpack.c.h.b16 %v3424
    %v4177 = vunpack.c.l.b16 %v3425
    %v4178 = vunpack.c.h.b16 %v3425
    %v4179 = vunpack.c.l.b16 %v3426
    %v4180 = vunpack.c.h.b16 %v3426
    %v4181 = vunpack.c.l.b16 %v3427
    %v4182 = vunpack.c.h.b16 %v3427
    %v4183 = vunpack.c.l.b16 %v3428
    %v4184 = vunpack.c.h.b16 %v3428
    %v4185 = vunpack.c.l.b16 %v3429
    %v4186 = vunpack.c.h.b16 %v3429
    %v4187 = vunpack.c.l.b16 %v3430
    %v4188 = vunpack.c.h.b16 %v3430
    %v4189 = vunpack.c.l.b16 %v3431
    %v4190 = vunpack.c.h.b16 %v3431
    %v4191 = vunpack.c.l.b16 %v3432
    %v4192 = vunpack.c.h.b16 %v3432
    %v4193 = vunpack.c.l.b16 %v3433
    %v4194 = vunpack.c.h.b16 %v3433
    %v4195 = vunpack.c.l.b16 %v3434
    %v4196 = vunpack.c.h.b16 %v3434
    %v4197 = vunpack.c.l.b16 %v3435
    %v4198 = vunpack.c.h.b16 %v3435
    %v4199 = vunpack.c.l.b16 %v3436
    %v4200 = vunpack.c.h.b16 %v3436
    %v4201 = vunpack.c.l.b16 %v3437
    %v4202 = vunpack.c.h.b16 %v3437
    %v4203 = vunpack.c.l.b16 %v3438
    %v4204 = vunpack.c.h.b16 %v3438
    %v4205 = vunpack.c.l.b16 %v3439
    %v4206 = vunpack.c.h.b16 %v3439
    %v4207 = vunpack.c.l.b16 %v3440
    %v4208 = vunpack.c.h.b16 %v3440
    %v4209 = vunpack.c.l.b16 %v3441
    %v4210 = vunpack.c.h.b16 %v3441
    %v4211 = vunpack.c.l.b16 %v3442
    %v4212 = vunpack.c.h.b16 %v3442
    %v4213 = vunpack.c.l.b16 %v3443
    %v4214 = vunpack.c.h.b16 %v3443
    %v4215 = vunpack.c.l.b16 %v3444
    %v4216 = vunpack.c.h.b16 %v3444
    %v4217 = vunpack.c.l.b16 %v3445
    %v4218 = vunpack.c.h.b16 %v3445
    %v4219 = vunpack.c.l.b16 %v3446
    %v4220 = vunpack.c.h.b16 %v3446
    %v4221 = vunpack.c.l.b16 %v3447
    %v4222 = vunpack.c.h.b16 %v3447
    %v4223 = vunpack.c.l.b16 %v3448
    %v4224 = vunpack.c.h.b16 %v3448
    %v4225 = vunpack.c.l.b16 %v3449
    %v4226 = vunpack.c.h.b16 %v3449
    %v4227 = vunpack.c.l.b16 %v3450
    %v4228 = vunpack.c.h.b16 %v3450
    %v4229 = vunpack.c.l.b16 %v3451
    %v4230 = vunpack.c.h.b16 %v3451
    %v4231 = vunpack.c.l.b16 %v3452
    %v4232 = vunpack.c.h.b16 %v3452
    %v4233 = vunpack.c.l.b16 %v3453
    %v4234 = vunpack.c.h.b16 %v3453
    %v4235 = vunpack.c.l.b16 %v3454
    %v4236 = vunpack.c.h.b16 %v3454
    %v4237 = vunpack.c.l.b16 %v3455
    %v4238 = vunpack.c.h.b16 %v3455
    %v4239 = vunpack.c.l.b16 %v3456
    %v4240 = vunpack.c.h.b16 %v3456
    %v4241 = vunpack.c.l.b16 %v3457
    %v4242 = vunpack.c.h.b16 %v3457
    %v4243 = vunpack.c.l.b16 %v3458
    %v4244 = vunpack.c.h.b16 %v3458
    %v4245 = vunpack.c.l.b16 %v3459
    %v4246 = vunpack.c.h.b16 %v3459
    %v4247 = vunpack.c.l.b16 %v3460
    %v4248 = vunpack.c.h.b16 %v3460
    %v4249 = vunpack.c.l.b16 %v3461
    %v4250 = vunpack.c.h.b16 %v3461
    %v4251 = vunpack.c.l.b16 %v3462
    %v4252 = vunpack.c.h.b16 %v3462
    %v4253 = vpack.c.b16 %v3745, %v3741
    %v4254 = vpack.c.b16 %v3746, %v3742
    %v4255 = vpack.c.b16 %v3747, %v3743
    %v4256 = vpack.c.b16 %v3748, %v3744
    %v4257 = vpack.c.b16 %v3753, %v3749
    %v4258 = vpack.c.b16 %v3754, %v3750
    %v4259 = vpack.c.b16 %v3755, %v3751
    %v4260 = vpack.c.b16 %v3756, %v3752
    %v4261 = vpack.c.b16 %v3761, %v3757
    %v4262 = vpack.c.b16 %v3762, %v3758
    %v4263 = vpack.c.b16 %v3763, %v3759
    %v4264 = vpack.c.b16 %v3764, %v3760
    %v4265 = vpack.c.b16 %v3769, %v3765
    %v4266 = vpack.c.b16 %v3770, %v3766
    %v4267 = vpack.c.b16 %v3771, %v3767
    %v4268 = vpack.c.b16 %v3772, %v3768
    %v4269 = vpack.c.b16 %v3777, %v3773
    %v4270 = vpack.c.b16 %v3778, %v3774
    %v4271 = vpack.c.b16 %v3779, %v3775
    %v4272 = vpack.c.b16 %v3780, %v3776
    %v4273 = vpack.c.b16 %v3785, %v3781
    %v4274 = vpack.c.b16 %v3786, %v3782
    %v4275 = vpack.c.b16 %v3787, %v3783
    %v4276 = vpack.c.b16 %v3788, %v3784
    %v4277 = vpack.c.b16 %v3793, %v3789
    %v4278 = vpack.c.b16 %v3794, %v3790
    %v4279 = vpack.c.b16 %v3795, %v3791
    %v4280 = vpack.c.b16 %v3796, %v3792
    %v4281 = vpack.c.b16 %v3801, %v3797
    %v4282 = vpack.c.b16 %v3802, %v3798
    %v4283 = vpack.c.b16 %v3803, %v3799
    %v4284 = vpack.c.b16 %v3804, %v3800
    %v4285 = vpack.c.b16 %v3809, %v3805
    %v4286 = vpack.c.b16 %v3810, %v3806
    %v4287 = vpack.c.b16 %v3811, %v3807
    %v4288 = vpack.c.b16 %v3812, %v3808
    %v4289 = vpack.c.b16 %v3817, %v3813
    %v4290 = vpack.c.b16 %v3818, %v3814
    %v4291 = vpack.c.b16 %v3819, %v3815
    %v4292 = vpack.c.b16 %v3820, %v3816
    %v4293 = vpack.c.b16 %v3825, %v3821
    %v4294 = vpack.c.b16 %v3826, %v3822
    %v4295 = vpack.c.b16 %v3827, %v3823
    %v4296 = vpack.c.b16 %v3828, %v3824
    %v4297 = vpack.c.b16 %v3833, %v3829
    %v4298 = vpack.c.b16 %v3834, %v3830
    %v4299 = vpack.c.b16 %v3835, %v3831
    %v4300 = vpack.c.b16 %v3836, %v3832
    %v4301 = vpack.c.b16 %v3841, %v3837
    %v4302 = vpack.c.b16 %v3842, %v3838
    %v4303 = vpack.c.b16 %v3843, %v3839
    %v4304 = vpack.c.b16 %v3844, %v3840
    %v4305 = vpack.c.b16 %v3849, %v3845
    %v4306 = vpack.c.b16 %v3850, %v3846
    %v4307 = vpack.c.b16 %v3851, %v3847
    %v4308 = vpack.c.b16 %v3852, %v3848
    %v4309 = vpack.c.b16 %v3857, %v3853
    %v4310 = vpack.c.b16 %v3858, %v3854
    %v4311 = vpack.c.b16 %v3859, %v3855
    %v4312 = vpack.c.b16 %v3860, %v3856
    %v4313 = vpack.c.b16 %v3865, %v3861
    %v4314 = vpack.c.b16 %v3866, %v3862
    %v4315 = vpack.c.b16 %v3867, %v3863
    %v4316 = vpack.c.b16 %v3868, %v3864
    %v4317 = vpack.c.b16 %v3873, %v3869
    %v4318 = vpack.c.b16 %v3874, %v3870
    %v4319 = vpack.c.b16 %v3875, %v3871
    %v4320 = vpack.c.b16 %v3876, %v3872
    %v4321 = vpack.c.b16 %v3881, %v3877
    %v4322 = vpack.c.b16 %v3882, %v3878
    %v4323 = vpack.c.b16 %v3883, %v3879
    %v4324 = vpack.c.b16 %v3884, %v3880
    %v4325 = vpack.c.b16 %v3889, %v3885
    %v4326 = vpack.c.b16 %v3890, %v3886
    %v4327 = vpack.c.b16 %v3891, %v3887
    %v4328 = vpack.c.b16 %v3892, %v3888
    %v4329 = vpack.c.b16 %v3897, %v3893
    %v4330 = vpack.c.b16 %v3898, %v3894
    %v4331 = vpack.c.b16 %v3899, %v3895
    %v4332 = vpack.c.b16 %v3900, %v3896
    %v4333 = vpack.c.b16 %v3905, %v3901
    %v4334 = vpack.c.b16 %v3906, %v3902
    %v4335 = vpack.c.b16 %v3907, %v3903
    %v4336 = vpack.c.b16 %v3908, %v3904
    %v4337 = vpack.c.b16 %v3913, %v3909
    %v4338 = vpack.c.b16 %v3914, %v3910
    %v4339 = vpack.c.b16 %v3915, %v3911
    %v4340 = vpack.c.b16 %v3916, %v3912
    %v4341 = vpack.c.b16 %v3921, %v3917
    %v4342 = vpack.c.b16 %v3922, %v3918
    %v4343 = vpack.c.b16 %v3923, %v3919
    %v4344 = vpack.c.b16 %v3924, %v3920
    %v4345 = vpack.c.b16 %v3929, %v3925
    %v4346 = vpack.c.b16 %v3930, %v3926
    %v4347 = vpack.c.b16 %v3931, %v3927
    %v4348 = vpack.c.b16 %v3932, %v3928
    %v4349 = vpack.c.b16 %v3937, %v3933
    %v4350 = vpack.c.b16 %v3938, %v3934
    %v4351 = vpack.c.b16 %v3939, %v3935
    %v4352 = vpack.c.b16 %v3940, %v3936
    %v4353 = vpack.c.b16 %v3945, %v3941
    %v4354 = vpack.c.b16 %v3946, %v3942
    %v4355 = vpack.c.b16 %v3947, %v3943
    %v4356 = vpack.c.b16 %v3948, %v3944
    %v4357 = vpack.c.b16 %v3953, %v3949
    %v4358 = vpack.c.b16 %v3954, %v3950
    %v4359 = vpack.c.b16 %v3955, %v3951
    %v4360 = vpack.c.b16 %v3956, %v3952
    %v4361 = vpack.c.b16 %v3961, %v3957
    %v4362 = vpack.c.b16 %v3962, %v3958
    %v4363 = vpack.c.b16 %v3963, %v3959
    %v4364 = vpack.c.b16 %v3964, %v3960
    %v4365 = vpack.c.b16 %v3969, %v3965
    %v4366 = vpack.c.b16 %v3970, %v3966
    %v4367 = vpack.c.b16 %v3971, %v3967
    %v4368 = vpack.c.b16 %v3972, %v3968
    %v4369 = vpack.c.b16 %v3977, %v3973
    %v4370 = vpack.c.b16 %v3978, %v3974
    %v4371 = vpack.c.b16 %v3979, %v3975
    %v4372 = vpack.c.b16 %v3980, %v3976
    %v4373 = vpack.c.b16 %v3985, %v3981
    %v4374 = vpack.c.b16 %v3986, %v3982
    %v4375 = vpack.c.b16 %v3987, %v3983
    %v4376 = vpack.c.b16 %v3988, %v3984
    %v4377 = vpack.c.b16 %v3993, %v3989
    %v4378 = vpack.c.b16 %v3994, %v3990
    %v4379 = vpack.c.b16 %v3995, %v3991
    %v4380 = vpack.c.b16 %v3996, %v3992
    %v4381 = vpack.c.b16 %v4001, %v3997
    %v4382 = vpack.c.b16 %v4002, %v3998
    %v4383 = vpack.c.b16 %v4003, %v3999
    %v4384 = vpack.c.b16 %v4004, %v4000
    %v4385 = vpack.c.b16 %v4009, %v4005
    %v4386 = vpack.c.b16 %v4010, %v4006
    %v4387 = vpack.c.b16 %v4011, %v4007
    %v4388 = vpack.c.b16 %v4012, %v4008
    %v4389 = vpack.c.b16 %v4017, %v4013
    %v4390 = vpack.c.b16 %v4018, %v4014
    %v4391 = vpack.c.b16 %v4019, %v4015
    %v4392 = vpack.c.b16 %v4020, %v4016
    %v4393 = vpack.c.b16 %v4025, %v4021
    %v4394 = vpack.c.b16 %v4026, %v4022
    %v4395 = vpack.c.b16 %v4027, %v4023
    %v4396 = vpack.c.b16 %v4028, %v4024
    %v4397 = vpack.c.b16 %v4033, %v4029
    %v4398 = vpack.c.b16 %v4034, %v4030
    %v4399 = vpack.c.b16 %v4035, %v4031
    %v4400 = vpack.c.b16 %v4036, %v4032
    %v4401 = vpack.c.b16 %v4041, %v4037
    %v4402 = vpack.c.b16 %v4042, %v4038
    %v4403 = vpack.c.b16 %v4043, %v4039
    %v4404 = vpack.c.b16 %v4044, %v4040
    %v4405 = vpack.c.b16 %v4049, %v4045
    %v4406 = vpack.c.b16 %v4050, %v4046
    %v4407 = vpack.c.b16 %v4051, %v4047
    %v4408 = vpack.c.b16 %v4052, %v4048
    %v4409 = vpack.c.b16 %v4057, %v4053
    %v4410 = vpack.c.b16 %v4058, %v4054
    %v4411 = vpack.c.b16 %v4059, %v4055
    %v4412 = vpack.c.b16 %v4060, %v4056
    %v4413 = vpack.c.b16 %v4065, %v4061
    %v4414 = vpack.c.b16 %v4066, %v4062
    %v4415 = vpack.c.b16 %v4067, %v4063
    %v4416 = vpack.c.b16 %v4068, %v4064
    %v4417 = vpack.c.b16 %v4073, %v4069
    %v4418 = vpack.c.b16 %v4074, %v4070
    %v4419 = vpack.c.b16 %v4075, %v4071
    %v4420 = vpack.c.b16 %v4076, %v4072
    %v4421 = vpack.c.b16 %v4081, %v4077
    %v4422 = vpack.c.b16 %v4082, %v4078
    %v4423 = vpack.c.b16 %v4083, %v4079
    %v4424 = vpack.c.b16 %v4084, %v4080
    %v4425 = vpack.c.b16 %v4089, %v4085
    %v4426 = vpack.c.b16 %v4090, %v4086
    %v4427 = vpack.c.b16 %v4091, %v4087
    %v4428 = vpack.c.b16 %v4092, %v4088
    %v4429 = vpack.c.b16 %v4097, %v4093
    %v4430 = vpack.c.b16 %v4098, %v4094
    %v4431 = vpack.c.b16 %v4099, %v4095
    %v4432 = vpack.c.b16 %v4100, %v4096
    %v4433 = vpack.c.b16 %v4105, %v4101
    %v4434 = vpack.c.b16 %v4106, %v4102
    %v4435 = vpack.c.b16 %v4107, %v4103
    %v4436 = vpack.c.b16 %v4108, %v4104
    %v4437 = vpack.c.b16 %v4113, %v4109
    %v4438 = vpack.c.b16 %v4114, %v4110
    %v4439 = vpack.c.b16 %v4115, %v4111
    %v4440 = vpack.c.b16 %v4116, %v4112
    %v4441 = vpack.c.b16 %v4121, %v4117
    %v4442 = vpack.c.b16 %v4122, %v4118
    %v4443 = vpack.c.b16 %v4123, %v4119
    %v4444 = vpack.c.b16 %v4124, %v4120
    %v4445 = vpack.c.b16 %v4129, %v4125
    %v4446 = vpack.c.b16 %v4130, %v4126
    %v4447 = vpack.c.b16 %v4131, %v4127
    %v4448 = vpack.c.b16 %v4132, %v4128
    %v4449 = vpack.c.b16 %v4137, %v4133
    %v4450 = vpack.c.b16 %v4138, %v4134
    %v4451 = vpack.c.b16 %v4139, %v4135
    %v4452 = vpack.c.b16 %v4140, %v4136
    %v4453 = vpack.c.b16 %v4145, %v4141
    %v4454 = vpack.c.b16 %v4146, %v4142
    %v4455 = vpack.c.b16 %v4147, %v4143
    %v4456 = vpack.c.b16 %v4148, %v4144
    %v4457 = vpack.c.b16 %v4153, %v4149
    %v4458 = vpack.c.b16 %v4154, %v4150
    %v4459 = vpack.c.b16 %v4155, %v4151
    %v4460 = vpack.c.b16 %v4156, %v4152
    %v4461 = vpack.c.b16 %v4161, %v4157
    %v4462 = vpack.c.b16 %v4162, %v4158
    %v4463 = vpack.c.b16 %v4163, %v4159
    %v4464 = vpack.c.b16 %v4164, %v4160
    %v4465 = vpack.c.b16 %v4169, %v4165
    %v4466 = vpack.c.b16 %v4170, %v4166
    %v4467 = vpack.c.b16 %v4171, %v4167
    %v4468 = vpack.c.b16 %v4172, %v4168
    %v4469 = vpack.c.b16 %v4177, %v4173
    %v4470 = vpack.c.b16 %v4178, %v4174
    %v4471 = vpack.c.b16 %v4179, %v4175
    %v4472 = vpack.c.b16 %v4180, %v4176
    %v4473 = vpack.c.b16 %v4185, %v4181
    %v4474 = vpack.c.b16 %v4186, %v4182
    %v4475 = vpack.c.b16 %v4187, %v4183
    %v4476 = vpack.c.b16 %v4188, %v4184
    %v4477 = vpack.c.b16 %v4193, %v4189
    %v4478 = vpack.c.b16 %v4194, %v4190
    %v4479 = vpack.c.b16 %v4195, %v4191
    %v4480 = vpack.c.b16 %v4196, %v4192
    %v4481 = vpack.c.b16 %v4201, %v4197
    %v4482 = vpack.c.b16 %v4202, %v4198
    %v4483 = vpack.c.b16 %v4203, %v4199
    %v4484 = vpack.c.b16 %v4204, %v4200
    %v4485 = vpack.c.b16 %v4209, %v4205
    %v4486 = vpack.c.b16 %v4210, %v4206
    %v4487 = vpack.c.b16 %v4211, %v4207
    %v4488 = vpack.c.b16 %v4212, %v4208
    %v4489 = vpack.c.b16 %v4217, %v4213
    %v4490 = vpack.c.b16 %v4218, %v4214
    %v4491 = vpack.c.b16 %v4219, %v4215
    %v4492 = vpack.c.b16 %v4220, %v4216
    %v4493 = vpack.c.b16 %v4225, %v4221
    %v4494 = vpack.c.b16 %v4226, %v4222
    %v4495 = vpack.c.b16 %v4227, %v4223
    %v4496 = vpack.c.b16 %v4228, %v4224
    %v4497 = vpack.c.b16 %v4233, %v4229
    %v4498 = vpack.c.b16 %v4234, %v4230
    %v4499 = vpack.c.b16 %v4235, %v4231
    %v4500 = vpack.c.b16 %v4236, %v4232
    %v4501 = vpack.c.b16 %v4241, %v4237
    %v4502 = vpack.c.b16 %v4242, %v4238
    %v4503 = vpack.c.b16 %v4243, %v4239
    %v4504 = vpack.c.b16 %v4244, %v4240
    %v4505 = vpack.c.b16 %v4249, %v4245
    %v4506 = vpack.c.b16 %v4250, %v4246
    %v4507 = vpack.c.b16 %v4251, %v4247
    %v4508 = vpack.c.b16 %v4252, %v4248
    %4765 = vmatprep.subr.bf16.mxu0 %v4254
    %4766 = vmatpush1.bf16.msra.mxu0 %v4253
    %4767 = vmatprep.subr.bf16.mxu0 %v4258
    %4768 = vmatpush1.bf16.msra.mxu0 %v4257
    %4769 = vmatprep.subr.bf16.mxu0 %v4262
    %4770 = vmatpush1.bf16.msra.mxu0 %v4261
    %4771 = vmatprep.subr.bf16.mxu0 %v4266
    %4772 = vmatpush1.bf16.msra.mxu0 %v4265
    %4773 = vmatprep.subr.bf16.mxu0 %v4270
    %4774 = vmatpush1.bf16.msra.mxu0 %v4269
    %4775 = vmatprep.subr.bf16.mxu0 %v4274
    %4776 = vmatpush1.bf16.msra.mxu0 %v4273
    %4777 = vmatprep.subr.bf16.mxu0 %v4278
    %4778 = vmatpush1.bf16.msra.mxu0 %v4277
    %4779 = vmatprep.subr.bf16.mxu0 %v4282
    %4780 = vmatpush1.bf16.msra.mxu0 %v4281
    %4781 = vmatprep.subr.bf16.mxu0 %v4286
    %4782 = vmatpush1.bf16.msra.mxu0 %v4285
    %4783 = vmatprep.subr.bf16.mxu0 %v4290
    %4784 = vmatpush1.bf16.msra.mxu0 %v4289
    %4785 = vmatprep.subr.bf16.mxu0 %v4294
    %4786 = vmatpush1.bf16.msra.mxu0 %v4293
    %4787 = vmatprep.subr.bf16.mxu0 %v4298
    %4788 = vmatpush1.bf16.msra.mxu0 %v4297
    %4789 = vmatprep.subr.bf16.mxu0 %v4302
    %4790 = vmatpush1.bf16.msra.mxu0 %v4301
    %4791 = vmatprep.subr.bf16.mxu0 %v4306
    %4792 = vmatpush1.bf16.msra.mxu0 %v4305
    %4793 = vmatprep.subr.bf16.mxu0 %v4310
    %4794 = vmatpush1.bf16.msra.mxu0 %v4309
    %4795 = vmatprep.subr.bf16.mxu0 %v4314
    %4796 = vmatpush1.bf16.msra.mxu0 %v4313
    %4797 = vmatprep.mubr.bf16.mxu0 %v3184
    %4798 = vmatmul.mubr.bf16.gmra.mrb[0].mxu0 %v3183
    %v4799 = vpop.f32.mrb[0].mxu0
    %v4800 = vadd.f32 %v3468, %v4799
    %v4801 = vpop.f32.mrb[0].mxu0
    %v4802 = vadd.f32 %v3472, %v4801
    %v4803 = vpop.f32.mrb[0].mxu0
    %v4804 = vpop.f32.mrb[0].mxu0
    %4805 = vdwg.mxu0
    %4806 = vmatprep.subr.bf16.mxu0 %v4318
    %4807 = vmatpush1.bf16.msra.mxu0 %v4317
    %4808 = vmatprep.subr.bf16.mxu0 %v4322
    %4809 = vmatpush1.bf16.msra.mxu0 %v4321
    %4810 = vmatprep.subr.bf16.mxu0 %v4326
    %4811 = vmatpush1.bf16.msra.mxu0 %v4325
    %4812 = vmatprep.subr.bf16.mxu0 %v4330
    %4813 = vmatpush1.bf16.msra.mxu0 %v4329
    %4814 = vmatprep.subr.bf16.mxu0 %v4334
    %4815 = vmatpush1.bf16.msra.mxu0 %v4333
    %4816 = vmatprep.subr.bf16.mxu0 %v4338
    %4817 = vmatpush1.bf16.msra.mxu0 %v4337
    %4818 = vmatprep.subr.bf16.mxu0 %v4342
    %4819 = vmatpush1.bf16.msra.mxu0 %v4341
    %4820 = vmatprep.subr.bf16.mxu0 %v4346
    %4821 = vmatpush1.bf16.msra.mxu0 %v4345
    %4822 = vmatprep.subr.bf16.mxu0 %v4350
    %4823 = vmatpush1.bf16.msra.mxu0 %v4349
    %4824 = vmatprep.subr.bf16.mxu0 %v4354
    %4825 = vmatpush1.bf16.msra.mxu0 %v4353
    %4826 = vmatprep.subr.bf16.mxu0 %v4358
    %4827 = vmatpush1.bf16.msra.mxu0 %v4357
    %4828 = vmatprep.subr.bf16.mxu0 %v4362
    %4829 = vmatpush1.bf16.msra.mxu0 %v4361
    %4830 = vmatprep.subr.bf16.mxu0 %v4366
    %4831 = vmatpush1.bf16.msra.mxu0 %v4365
    %4832 = vmatprep.subr.bf16.mxu0 %v4370
    %4833 = vmatpush1.bf16.msra.mxu0 %v4369
    %4834 = vmatprep.subr.bf16.mxu0 %v4374
    %4835 = vmatpush1.bf16.msra.mxu0 %v4373
    %4836 = vmatprep.subr.bf16.mxu0 %v4378
    %4837 = vmatpush1.bf16.msra.mxu0 %v4377
    %4838 = vmatprep.mubr.bf16.mxu0 %v3186
    %4839 = vmatmul.mubr.bf16.gmra.mrb[0].mxu0 %v3185
    %v4840 = vpop.f32.mrb[0].mxu0
    %v4841 = vadd.f32 %v4800, %v4840
    %v4842 = vpop.f32.mrb[0].mxu0
    %v4843 = vadd.f32 %v4802, %v4842
    %v4844 = vpop.f32.mrb[0].mxu0
    %v4845 = vpop.f32.mrb[0].mxu0
    %4846 = vdwg.mxu0
    %4847 = vmatprep.subr.bf16.mxu0 %v4382
    %4848 = vmatpush1.bf16.msra.mxu0 %v4381
    %4849 = vmatprep.subr.bf16.mxu0 %v4386
    %4850 = vmatpush1.bf16.msra.mxu0 %v4385
    %4851 = vmatprep.subr.bf16.mxu0 %v4390
    %4852 = vmatpush1.bf16.msra.mxu0 %v4389
    %4853 = vmatprep.subr.bf16.mxu0 %v4394
    %4854 = vmatpush1.bf16.msra.mxu0 %v4393
    %4855 = vmatprep.subr.bf16.mxu0 %v4398
    %4856 = vmatpush1.bf16.msra.mxu0 %v4397
    %4857 = vmatprep.subr.bf16.mxu0 %v4402
    %4858 = vmatpush1.bf16.msra.mxu0 %v4401
    %4859 = vmatprep.subr.bf16.mxu0 %v4406
    %4860 = vmatpush1.bf16.msra.mxu0 %v4405
    %4861 = vmatprep.subr.bf16.mxu0 %v4410
    %4862 = vmatpush1.bf16.msra.mxu0 %v4409
    %4863 = vmatprep.subr.bf16.mxu0 %v4414
    %4864 = vmatpush1.bf16.msra.mxu0 %v4413
    %4865 = vmatprep.subr.bf16.mxu0 %v4418
    %4866 = vmatpush1.bf16.msra.mxu0 %v4417
    %4867 = vmatprep.subr.bf16.mxu0 %v4422
    %4868 = vmatpush1.bf16.msra.mxu0 %v4421
    %4869 = vmatprep.subr.bf16.mxu0 %v4426
    %4870 = vmatpush1.bf16.msra.mxu0 %v4425
    %4871 = vmatprep.subr.bf16.mxu0 %v4430
    %4872 = vmatpush1.bf16.msra.mxu0 %v4429
    %4873 = vmatprep.subr.bf16.mxu0 %v4434
    %4874 = vmatpush1.bf16.msra.mxu0 %v4433
    %4875 = vmatprep.subr.bf16.mxu0 %v4438
    %4876 = vmatpush1.bf16.msra.mxu0 %v4437
    %4877 = vmatprep.subr.bf16.mxu0 %v4442
    %4878 = vmatpush1.bf16.msra.mxu0 %v4441
    %4879 = vmatprep.mubr.bf16.mxu0 %v3188
    %4880 = vmatmul.mubr.bf16.gmra.mrb[0].mxu0 %v3187
    %v4881 = vpop.f32.mrb[0].mxu0
    %v4882 = vadd.f32 %v4841, %v4881
    %v4883 = vpop.f32.mrb[0].mxu0
    %v4884 = vadd.f32 %v4843, %v4883
    %v4885 = vpop.f32.mrb[0].mxu0
    %v4886 = vpop.f32.mrb[0].mxu0
    %4887 = vdwg.mxu0
    %4888 = vmatprep.subr.bf16.mxu0 %v4446
    %4889 = vmatpush1.bf16.msra.mxu0 %v4445
    %4890 = vmatprep.subr.bf16.mxu0 %v4450
    %4891 = vmatpush1.bf16.msra.mxu0 %v4449
    %4892 = vmatprep.subr.bf16.mxu0 %v4454
    %4893 = vmatpush1.bf16.msra.mxu0 %v4453
    %4894 = vmatprep.subr.bf16.mxu0 %v4458
    %4895 = vmatpush1.bf16.msra.mxu0 %v4457
    %4896 = vmatprep.subr.bf16.mxu0 %v4462
    %4897 = vmatpush1.bf16.msra.mxu0 %v4461
    %4898 = vmatprep.subr.bf16.mxu0 %v4466
    %4899 = vmatpush1.bf16.msra.mxu0 %v4465
    %4900 = vmatprep.subr.bf16.mxu0 %v4470
    %4901 = vmatpush1.bf16.msra.mxu0 %v4469
    %4902 = vmatprep.subr.bf16.mxu0 %v4474
    %4903 = vmatpush1.bf16.msra.mxu0 %v4473
    %4904 = vmatprep.subr.bf16.mxu0 %v4478
    %4905 = vmatpush1.bf16.msra.mxu0 %v4477
    %4906 = vmatprep.subr.bf16.mxu0 %v4482
    %4907 = vmatpush1.bf16.msra.mxu0 %v4481
    %4908 = vmatprep.subr.bf16.mxu0 %v4486
    %4909 = vmatpush1.bf16.msra.mxu0 %v4485
    %4910 = vmatprep.subr.bf16.mxu0 %v4490
    %4911 = vmatpush1.bf16.msra.mxu0 %v4489
    %4912 = vmatprep.subr.bf16.mxu0 %v4494
    %4913 = vmatpush1.bf16.msra.mxu0 %v4493
    %4914 = vmatprep.subr.bf16.mxu0 %v4498
    %4915 = vmatpush1.bf16.msra.mxu0 %v4497
    %4916 = vmatprep.subr.bf16.mxu0 %v4502
    %4917 = vmatpush1.bf16.msra.mxu0 %v4501
    %4918 = vmatprep.subr.bf16.mxu0 %v4506
    %4919 = vmatpush1.bf16.msra.mxu0 %v4505
    %4920 = vmatprep.mubr.bf16.mxu0 %v3190
    %4921 = vmatmul.mubr.bf16.gmra.mrb[0].mxu0 %v3189
    %v4922 = vpop.f32.mrb[0].mxu0
    %v4923 = vadd.f32 %v4882, %v4922
    %v4924 = vpop.f32.mrb[0].mxu0
    %v4925 = vadd.f32 %v4884, %v4924
    %v4926 = vpop.f32.mrb[0].mxu0
    %v4927 = vpop.f32.mrb[0].mxu0
    %4928 = vdwg.mxu0
    %4929 = vmatprep.subr.bf16.mxu0 %v4256
    %4930 = vmatpush1.bf16.msra.mxu0 %v4255
    %4931 = vmatprep.subr.bf16.mxu0 %v4260
    %4932 = vmatpush1.bf16.msra.mxu0 %v4259
    %4933 = vmatprep.subr.bf16.mxu0 %v4264
    %4934 = vmatpush1.bf16.msra.mxu0 %v4263
    %4935 = vmatprep.subr.bf16.mxu0 %v4268
    %4936 = vmatpush1.bf16.msra.mxu0 %v4267
    %4937 = vmatprep.subr.bf16.mxu0 %v4272
    %4938 = vmatpush1.bf16.msra.mxu0 %v4271
    %4939 = vmatprep.subr.bf16.mxu0 %v4276
    %4940 = vmatpush1.bf16.msra.mxu0 %v4275
    %4941 = vmatprep.subr.bf16.mxu0 %v4280
    %4942 = vmatpush1.bf16.msra.mxu0 %v4279
    %4943 = vmatprep.subr.bf16.mxu0 %v4284
    %4944 = vmatpush1.bf16.msra.mxu0 %v4283
    %4945 = vmatprep.subr.bf16.mxu0 %v4288
    %4946 = vmatpush1.bf16.msra.mxu0 %v4287
    %4947 = vmatprep.subr.bf16.mxu0 %v4292
    %4948 = vmatpush1.bf16.msra.mxu0 %v4291
    %4949 = vmatprep.subr.bf16.mxu0 %v4296
    %4950 = vmatpush1.bf16.msra.mxu0 %v4295
    %4951 = vmatprep.subr.bf16.mxu0 %v4300
    %4952 = vmatpush1.bf16.msra.mxu0 %v4299
    %4953 = vmatprep.subr.bf16.mxu0 %v4304
    %4954 = vmatpush1.bf16.msra.mxu0 %v4303
    %4955 = vmatprep.subr.bf16.mxu0 %v4308
    %4956 = vmatpush1.bf16.msra.mxu0 %v4307
    %4957 = vmatprep.subr.bf16.mxu0 %v4312
    %4958 = vmatpush1.bf16.msra.mxu0 %v4311
    %4959 = vmatprep.subr.bf16.mxu0 %v4316
    %4960 = vmatpush1.bf16.msra.mxu0 %v4315
    %4961 = vmatprep.mubr.bf16.mxu0 %v3184
    %4962 = vmatmul.mubr.bf16.gmra.mrb[0].mxu0 %v3183
    %v4963 = vpop.f32.mrb[0].mxu0
    %v4964 = vadd.f32 %v3476, %v4963
    %v4965 = vpop.f32.mrb[0].mxu0
    %v4966 = vadd.f32 %v3480, %v4965
    %v4967 = vpop.f32.mrb[0].mxu0
    %v4968 = vpop.f32.mrb[0].mxu0
    %4969 = vdwg.mxu0
    %4970 = vmatprep.subr.bf16.mxu0 %v4320
    %4971 = vmatpush1.bf16.msra.mxu0 %v4319
    %4972 = vmatprep.subr.bf16.mxu0 %v4324
    %4973 = vmatpush1.bf16.msra.mxu0 %v4323
    %4974 = vmatprep.subr.bf16.mxu0 %v4328
    %4975 = vmatpush1.bf16.msra.mxu0 %v4327
    %4976 = vmatprep.subr.bf16.mxu0 %v4332
    %4977 = vmatpush1.bf16.msra.mxu0 %v4331
    %4978 = vmatprep.subr.bf16.mxu0 %v4336
    %4979 = vmatpush1.bf16.msra.mxu0 %v4335
    %4980 = vmatprep.subr.bf16.mxu0 %v4340
    %4981 = vmatpush1.bf16.msra.mxu0 %v4339
    %4982 = vmatprep.subr.bf16.mxu0 %v4344
    %4983 = vmatpush1.bf16.msra.mxu0 %v4343
    %4984 = vmatprep.subr.bf16.mxu0 %v4348
    %4985 = vmatpush1.bf16.msra.mxu0 %v4347
    %4986 = vmatprep.subr.bf16.mxu0 %v4352
    %4987 = vmatpush1.bf16.msra.mxu0 %v4351
    %4988 = vmatprep.subr.bf16.mxu0 %v4356
    %4989 = vmatpush1.bf16.msra.mxu0 %v4355
    %4990 = vmatprep.subr.bf16.mxu0 %v4360
    %4991 = vmatpush1.bf16.msra.mxu0 %v4359
    %4992 = vmatprep.subr.bf16.mxu0 %v4364
    %4993 = vmatpush1.bf16.msra.mxu0 %v4363
    %4994 = vmatprep.subr.bf16.mxu0 %v4368
    %4995 = vmatpush1.bf16.msra.mxu0 %v4367
    %4996 = vmatprep.subr.bf16.mxu0 %v4372
    %4997 = vmatpush1.bf16.msra.mxu0 %v4371
    %4998 = vmatprep.subr.bf16.mxu0 %v4376
    %4999 = vmatpush1.bf16.msra.mxu0 %v4375
    %5000 = vmatprep.subr.bf16.mxu0 %v4380
    %5001 = vmatpush1.bf16.msra.mxu0 %v4379
    %5002 = vmatprep.mubr.bf16.mxu0 %v3186
    %5003 = vmatmul.mubr.bf16.gmra.mrb[0].mxu0 %v3185
    %v5004 = vpop.f32.mrb[0].mxu0
    %v5005 = vadd.f32 %v4964, %v5004
    %v5006 = vpop.f32.mrb[0].mxu0
    %v5007 = vadd.f32 %v4966, %v5006
    %v5008 = vpop.f32.mrb[0].mxu0
    %v5009 = vpop.f32.mrb[0].mxu0
    %5010 = vdwg.mxu0
    %5011 = vmatprep.subr.bf16.mxu0 %v4384
    %5012 = vmatpush1.bf16.msra.mxu0 %v4383
    %5013 = vmatprep.subr.bf16.mxu0 %v4388
    %5014 = vmatpush1.bf16.msra.mxu0 %v4387
    %5015 = vmatprep.subr.bf16.mxu0 %v4392
    %5016 = vmatpush1.bf16.msra.mxu0 %v4391
    %5017 = vmatprep.subr.bf16.mxu0 %v4396
    %5018 = vmatpush1.bf16.msra.mxu0 %v4395
    %5019 = vmatprep.subr.bf16.mxu0 %v4400
    %5020 = vmatpush1.bf16.msra.mxu0 %v4399
    %5021 = vmatprep.subr.bf16.mxu0 %v4404
    %5022 = vmatpush1.bf16.msra.mxu0 %v4403
    %5023 = vmatprep.subr.bf16.mxu0 %v4408
    %5024 = vmatpush1.bf16.msra.mxu0 %v4407
    %5025 = vmatprep.subr.bf16.mxu0 %v4412
    %5026 = vmatpush1.bf16.msra.mxu0 %v4411
    %5027 = vmatprep.subr.bf16.mxu0 %v4416
    %5028 = vmatpush1.bf16.msra.mxu0 %v4415
    %5029 = vmatprep.subr.bf16.mxu0 %v4420
    %5030 = vmatpush1.bf16.msra.mxu0 %v4419
    %5031 = vmatprep.subr.bf16.mxu0 %v4424
    %5032 = vmatpush1.bf16.msra.mxu0 %v4423
    %5033 = vmatprep.subr.bf16.mxu0 %v4428
    %5034 = vmatpush1.bf16.msra.mxu0 %v4427
    %5035 = vmatprep.subr.bf16.mxu0 %v4432
    %5036 = vmatpush1.bf16.msra.mxu0 %v4431
    %5037 = vmatprep.subr.bf16.mxu0 %v4436
    %5038 = vmatpush1.bf16.msra.mxu0 %v4435
    %5039 = vmatprep.subr.bf16.mxu0 %v4440
    %5040 = vmatpush1.bf16.msra.mxu0 %v4439
    %5041 = vmatprep.subr.bf16.mxu0 %v4444
    %5042 = vmatpush1.bf16.msra.mxu0 %v4443
    %5043 = vmatprep.mubr.bf16.mxu0 %v3188
    %5044 = vmatmul.mubr.bf16.gmra.mrb[0].mxu0 %v3187
    %v5045 = vpop.f32.mrb[0].mxu0
    %v5046 = vadd.f32 %v5005, %v5045
    %v5047 = vpop.f32.mrb[0].mxu0
    %v5048 = vadd.f32 %v5007, %v5047
    %v5049 = vpop.f32.mrb[0].mxu0
    %v5050 = vpop.f32.mrb[0].mxu0
    %5051 = vdwg.mxu0
    %5052 = vmatprep.subr.bf16.mxu0 %v4448
    %5053 = vmatpush1.bf16.msra.mxu0 %v4447
    %5054 = vmatprep.subr.bf16.mxu0 %v4452
    %5055 = vmatpush1.bf16.msra.mxu0 %v4451
    %5056 = vmatprep.subr.bf16.mxu0 %v4456
    %5057 = vmatpush1.bf16.msra.mxu0 %v4455
    %5058 = vmatprep.subr.bf16.mxu0 %v4460
    %5059 = vmatpush1.bf16.msra.mxu0 %v4459
    %5060 = vmatprep.subr.bf16.mxu0 %v4464
    %5061 = vmatpush1.bf16.msra.mxu0 %v4463
    %5062 = vmatprep.subr.bf16.mxu0 %v4468
    %5063 = vmatpush1.bf16.msra.mxu0 %v4467
    %5064 = vmatprep.subr.bf16.mxu0 %v4472
    %5065 = vmatpush1.bf16.msra.mxu0 %v4471
    %5066 = vmatprep.subr.bf16.mxu0 %v4476
    %5067 = vmatpush1.bf16.msra.mxu0 %v4475
    %5068 = vmatprep.subr.bf16.mxu0 %v4480
    %5069 = vmatpush1.bf16.msra.mxu0 %v4479
    %5070 = vmatprep.subr.bf16.mxu0 %v4484
    %5071 = vmatpush1.bf16.msra.mxu0 %v4483
    %5072 = vmatprep.subr.bf16.mxu0 %v4488
    %5073 = vmatpush1.bf16.msra.mxu0 %v4487
    %5074 = vmatprep.subr.bf16.mxu0 %v4492
    %5075 = vmatpush1.bf16.msra.mxu0 %v4491
    %5076 = vmatprep.subr.bf16.mxu0 %v4496
    %5077 = vmatpush1.bf16.msra.mxu0 %v4495
    %5078 = vmatprep.subr.bf16.mxu0 %v4500
    %5079 = vmatpush1.bf16.msra.mxu0 %v4499
    %5080 = vmatprep.subr.bf16.mxu0 %v4504
    %5081 = vmatpush1.bf16.msra.mxu0 %v4503
    %5082 = vmatprep.subr.bf16.mxu0 %v4508
    %5083 = vmatpush1.bf16.msra.mxu0 %v4507
    %5084 = vmatprep.mubr.bf16.mxu0 %v3190
    %5085 = vmatmul.mubr.bf16.gmra.mrb[0].mxu0 %v3189
    %v5086 = vpop.f32.mrb[0].mxu0
    %v5087 = vadd.f32 %v5046, %v5086
    %v5088 = vpop.f32.mrb[0].mxu0
    %v5089 = vadd.f32 %v5048, %v5088
    %v5090 = vpop.f32.mrb[0].mxu0
    %v5091 = vpop.f32.mrb[0].mxu0
    %5092 = vdwg.mxu0
    %5093 = vmatprep.subr.bf16.mxu0 %v4254
    %5094 = vmatpush1.bf16.msra.mxu0 %v4253
    %5095 = vmatprep.subr.bf16.mxu0 %v4258
    %5096 = vmatpush1.bf16.msra.mxu0 %v4257
    %5097 = vmatprep.subr.bf16.mxu0 %v4262
    %5098 = vmatpush1.bf16.msra.mxu0 %v4261
    %5099 = vmatprep.subr.bf16.mxu0 %v4266
    %5100 = vmatpush1.bf16.msra.mxu0 %v4265
    %5101 = vmatprep.subr.bf16.mxu0 %v4270
    %5102 = vmatpush1.bf16.msra.mxu0 %v4269
    %5103 = vmatprep.subr.bf16.mxu0 %v4274
    %5104 = vmatpush1.bf16.msra.mxu0 %v4273
    %5105 = vmatprep.subr.bf16.mxu0 %v4278
    %5106 = vmatpush1.bf16.msra.mxu0 %v4277
    %5107 = vmatprep.subr.bf16.mxu0 %v4282
    %5108 = vmatpush1.bf16.msra.mxu0 %v4281
    %5109 = vmatprep.subr.bf16.mxu0 %v4286
    %5110 = vmatpush1.bf16.msra.mxu0 %v4285
    %5111 = vmatprep.subr.bf16.mxu0 %v4290
    %5112 = vmatpush1.bf16.msra.mxu0 %v4289
    %5113 = vmatprep.subr.bf16.mxu0 %v4294
    %5114 = vmatpush1.bf16.msra.mxu0 %v4293
    %5115 = vmatprep.subr.bf16.mxu0 %v4298
    %5116 = vmatpush1.bf16.msra.mxu0 %v4297
    %5117 = vmatprep.subr.bf16.mxu0 %v4302
    %5118 = vmatpush1.bf16.msra.mxu0 %v4301
    %5119 = vmatprep.subr.bf16.mxu0 %v4306
    %5120 = vmatpush1.bf16.msra.mxu0 %v4305
    %5121 = vmatprep.subr.bf16.mxu0 %v4310
    %5122 = vmatpush1.bf16.msra.mxu0 %v4309
    %5123 = vmatprep.subr.bf16.mxu0 %v4314
    %5124 = vmatpush1.bf16.msra.mxu0 %v4313
    %5125 = vmatprep.mubr.bf16.mxu0 %v3200
    %5126 = vmatmul.mubr.bf16.gmra.mrb[0].mxu0 %v3199
    %v5127 = vpop.f32.mrb[0].mxu0
    %v5128 = vadd.f32 %v3468, %v5127
    %v5129 = vpop.f32.mrb[0].mxu0
    %v5130 = vadd.f32 %v3472, %v5129
    %v5131 = vpop.f32.mrb[0].mxu0
    %v5132 = vpop.f32.mrb[0].mxu0
    %5133 = vdwg.mxu0
    %5134 = vmatprep.subr.bf16.mxu0 %v4318
    %5135 = vmatpush1.bf16.msra.mxu0 %v4317
    %5136 = vmatprep.subr.bf16.mxu0 %v4322
    %5137 = vmatpush1.bf16.msra.mxu0 %v4321
    %5138 = vmatprep.subr.bf16.mxu0 %v4326
    %5139 = vmatpush1.bf16.msra.mxu0 %v4325
    %5140 = vmatprep.subr.bf16.mxu0 %v4330
    %5141 = vmatpush1.bf16.msra.mxu0 %v4329
    %5142 = vmatprep.subr.bf16.mxu0 %v4334
    %5143 = vmatpush1.bf16.msra.mxu0 %v4333
    %5144 = vmatprep.subr.bf16.mxu0 %v4338
    %5145 = vmatpush1.bf16.msra.mxu0 %v4337
    %5146 = vmatprep.subr.bf16.mxu0 %v4342
    %5147 = vmatpush1.bf16.msra.mxu0 %v4341
    %5148 = vmatprep.subr.bf16.mxu0 %v4346
    %5149 = vmatpush1.bf16.msra.mxu0 %v4345
    %5150 = vmatprep.subr.bf16.mxu0 %v4350
    %5151 = vmatpush1.bf16.msra.mxu0 %v4349
    %5152 = vmatprep.subr.bf16.mxu0 %v4354
    %5153 = vmatpush1.bf16.msra.mxu0 %v4353
    %5154 = vmatprep.subr.bf16.mxu0 %v4358
    %5155 = vmatpush1.bf16.msra.mxu0 %v4357
    %5156 = vmatprep.subr.bf16.mxu0 %v4362
    %5157 = vmatpush1.bf16.msra.mxu0 %v4361
    %5158 = vmatprep.subr.bf16.mxu0 %v4366
    %5159 = vmatpush1.bf16.msra.mxu0 %v4365
    %5160 = vmatprep.subr.bf16.mxu0 %v4370
    %5161 = vmatpush1.bf16.msra.mxu0 %v4369
    %5162 = vmatprep.subr.bf16.mxu0 %v4374
    %5163 = vmatpush1.bf16.msra.mxu0 %v4373
    %5164 = vmatprep.subr.bf16.mxu0 %v4378
    %5165 = vmatpush1.bf16.msra.mxu0 %v4377
    %5166 = vmatprep.mubr.bf16.mxu0 %v3202
    %5167 = vmatmul.mubr.bf16.gmra.mrb[0].mxu0 %v3201
    %v5168 = vpop.f32.mrb[0].mxu0
    %v5169 = vadd.f32 %v5128, %v5168
    %v5170 = vpop.f32.mrb[0].mxu0
    %v5171 = vadd.f32 %v5130, %v5170
    %v5172 = vpop.f32.mrb[0].mxu0
    %v5173 = vpop.f32.mrb[0].mxu0
    %5174 = vdwg.mxu0
    %5175 = vmatprep.subr.bf16.mxu0 %v4382
    %5176 = vmatpush1.bf16.msra.mxu0 %v4381
    %5177 = vmatprep.subr.bf16.mxu0 %v4386
    %5178 = vmatpush1.bf16.msra.mxu0 %v4385
    %5179 = vmatprep.subr.bf16.mxu0 %v4390
    %5180 = vmatpush1.bf16.msra.mxu0 %v4389
    %5181 = vmatprep.subr.bf16.mxu0 %v4394
    %5182 = vmatpush1.bf16.msra.mxu0 %v4393
    %5183 = vmatprep.subr.bf16.mxu0 %v4398
    %5184 = vmatpush1.bf16.msra.mxu0 %v4397
    %5185 = vmatprep.subr.bf16.mxu0 %v4402
    %5186 = vmatpush1.bf16.msra.mxu0 %v4401
    %5187 = vmatprep.subr.bf16.mxu0 %v4406
    %5188 = vmatpush1.bf16.msra.mxu0 %v4405
    %5189 = vmatprep.subr.bf16.mxu0 %v4410
    %5190 = vmatpush1.bf16.msra.mxu0 %v4409
    %5191 = vmatprep.subr.bf16.mxu0 %v4414
    %5192 = vmatpush1.bf16.msra.mxu0 %v4413
    %5193 = vmatprep.subr.bf16.mxu0 %v4418
    %5194 = vmatpush1.bf16.msra.mxu0 %v4417
    %5195 = vmatprep.subr.bf16.mxu0 %v4422
    %5196 = vmatpush1.bf16.msra.mxu0 %v4421
    %5197 = vmatprep.subr.bf16.mxu0 %v4426
    %5198 = vmatpush1.bf16.msra.mxu0 %v4425
    %5199 = vmatprep.subr.bf16.mxu0 %v4430
    %5200 = vmatpush1.bf16.msra.mxu0 %v4429
    %5201 = vmatprep.subr.bf16.mxu0 %v4434
    %5202 = vmatpush1.bf16.msra.mxu0 %v4433
    %5203 = vmatprep.subr.bf16.mxu0 %v4438
    %5204 = vmatpush1.bf16.msra.mxu0 %v4437
    %5205 = vmatprep.subr.bf16.mxu0 %v4442
    %5206 = vmatpush1.bf16.msra.mxu0 %v4441
    %5207 = vmatprep.mubr.bf16.mxu0 %v3204
    %5208 = vmatmul.mubr.bf16.gmra.mrb[0].mxu0 %v3203
    %v5209 = vpop.f32.mrb[0].mxu0
    %v5210 = vadd.f32 %v5169, %v5209
    %v5211 = vpop.f32.mrb[0].mxu0
    %v5212 = vadd.f32 %v5171, %v5211
    %v5213 = vpop.f32.mrb[0].mxu0
    %v5214 = vpop.f32.mrb[0].mxu0
    %5215 = vdwg.mxu0
    %5216 = vmatprep.subr.bf16.mxu0 %v4446
    %5217 = vmatpush1.bf16.msra.mxu0 %v4445
    %5218 = vmatprep.subr.bf16.mxu0 %v4450
    %5219 = vmatpush1.bf16.msra.mxu0 %v4449
    %5220 = vmatprep.subr.bf16.mxu0 %v4454
    %5221 = vmatpush1.bf16.msra.mxu0 %v4453
    %5222 = vmatprep.subr.bf16.mxu0 %v4458
    %5223 = vmatpush1.bf16.msra.mxu0 %v4457
    %5224 = vmatprep.subr.bf16.mxu0 %v4462
    %5225 = vmatpush1.bf16.msra.mxu0 %v4461
    %5226 = vmatprep.subr.bf16.mxu0 %v4466
    %5227 = vmatpush1.bf16.msra.mxu0 %v4465
    %5228 = vmatprep.subr.bf16.mxu0 %v4470
    %5229 = vmatpush1.bf16.msra.mxu0 %v4469
    %5230 = vmatprep.subr.bf16.mxu0 %v4474
    %5231 = vmatpush1.bf16.msra.mxu0 %v4473
    %5232 = vmatprep.subr.bf16.mxu0 %v4478
    %5233 = vmatpush1.bf16.msra.mxu0 %v4477
    %5234 = vmatprep.subr.bf16.mxu0 %v4482
    %5235 = vmatpush1.bf16.msra.mxu0 %v4481
    %5236 = vmatprep.subr.bf16.mxu0 %v4486
    %5237 = vmatpush1.bf16.msra.mxu0 %v4485
    %5238 = vmatprep.subr.bf16.mxu0 %v4490
    %5239 = vmatpush1.bf16.msra.mxu0 %v4489
    %5240 = vmatprep.subr.bf16.mxu0 %v4494
    %5241 = vmatpush1.bf16.msra.mxu0 %v4493
    %5242 = vmatprep.subr.bf16.mxu0 %v4498
    %5243 = vmatpush1.bf16.msra.mxu0 %v4497
    %5244 = vmatprep.subr.bf16.mxu0 %v4502
    %5245 = vmatpush1.bf16.msra.mxu0 %v4501
    %5246 = vmatprep.subr.bf16.mxu0 %v4506
    %5247 = vmatpush1.bf16.msra.mxu0 %v4505
    %5248 = vmatprep.mubr.bf16.mxu0 %v3206
    %5249 = vmatmul.mubr.bf16.gmra.mrb[0].mxu0 %v3205
    %v5250 = vpop.f32.mrb[0].mxu0
    %v5251 = vadd.f32 %v5210, %v5250
    %v5252 = vpop.f32.mrb[0].mxu0
    %v5253 = vadd.f32 %v5212, %v5252
    %v5254 = vpop.f32.mrb[0].mxu0
    %v5255 = vpop.f32.mrb[0].mxu0
    %5256 = vdwg.mxu0
    %5257 = vmatprep.subr.bf16.mxu0 %v4256
    %5258 = vmatpush1.bf16.msra.mxu0 %v4255
    %5259 = vmatprep.subr.bf16.mxu0 %v4260
    %5260 = vmatpush1.bf16.msra.mxu0 %v4259
    %5261 = vmatprep.subr.bf16.mxu0 %v4264
    %5262 = vmatpush1.bf16.msra.mxu0 %v4263
    %5263 = vmatprep.subr.bf16.mxu0 %v4268
    %5264 = vmatpush1.bf16.msra.mxu0 %v4267
    %5265 = vmatprep.subr.bf16.mxu0 %v4272
    %5266 = vmatpush1.bf16.msra.mxu0 %v4271
    %5267 = vmatprep.subr.bf16.mxu0 %v4276
    %5268 = vmatpush1.bf16.msra.mxu0 %v4275
    %5269 = vmatprep.subr.bf16.mxu0 %v4280
    %5270 = vmatpush1.bf16.msra.mxu0 %v4279
    %5271 = vmatprep.subr.bf16.mxu0 %v4284
    %5272 = vmatpush1.bf16.msra.mxu0 %v4283
    %5273 = vmatprep.subr.bf16.mxu0 %v4288
    %5274 = vmatpush1.bf16.msra.mxu0 %v4287
    %5275 = vmatprep.subr.bf16.mxu0 %v4292
    %5276 = vmatpush1.bf16.msra.mxu0 %v4291
    %5277 = vmatprep.subr.bf16.mxu0 %v4296
    %5278 = vmatpush1.bf16.msra.mxu0 %v4295
    %5279 = vmatprep.subr.bf16.mxu0 %v4300
    %5280 = vmatpush1.bf16.msra.mxu0 %v4299
    %5281 = vmatprep.subr.bf16.mxu0 %v4304
    %5282 = vmatpush1.bf16.msra.mxu0 %v4303
    %5283 = vmatprep.subr.bf16.mxu0 %v4308
    %5284 = vmatpush1.bf16.msra.mxu0 %v4307
    %5285 = vmatprep.subr.bf16.mxu0 %v4312
    %5286 = vmatpush1.bf16.msra.mxu0 %v4311
    %5287 = vmatprep.subr.bf16.mxu0 %v4316
    %5288 = vmatpush1.bf16.msra.mxu0 %v4315
    %5289 = vmatprep.mubr.bf16.mxu0 %v3200
    %5290 = vmatmul.mubr.bf16.gmra.mrb[0].mxu0 %v3199
    %v5291 = vpop.f32.mrb[0].mxu0
    %v5292 = vadd.f32 %v3476, %v5291
    %v5293 = vpop.f32.mrb[0].mxu0
    %v5294 = vadd.f32 %v3480, %v5293
    %v5295 = vpop.f32.mrb[0].mxu0
    %v5296 = vpop.f32.mrb[0].mxu0
    %5297 = vdwg.mxu0
    %5298 = vmatprep.subr.bf16.mxu0 %v4320
    %5299 = vmatpush1.bf16.msra.mxu0 %v4319
    %5300 = vmatprep.subr.bf16.mxu0 %v4324
    %5301 = vmatpush1.bf16.msra.mxu0 %v4323
    %5302 = vmatprep.subr.bf16.mxu0 %v4328
    %5303 = vmatpush1.bf16.msra.mxu0 %v4327
    %5304 = vmatprep.subr.bf16.mxu0 %v4332
    %5305 = vmatpush1.bf16.msra.mxu0 %v4331
    %5306 = vmatprep.subr.bf16.mxu0 %v4336
    %5307 = vmatpush1.bf16.msra.mxu0 %v4335
    %5308 = vmatprep.subr.bf16.mxu0 %v4340
    %5309 = vmatpush1.bf16.msra.mxu0 %v4339
    %5310 = vmatprep.subr.bf16.mxu0 %v4344
    %5311 = vmatpush1.bf16.msra.mxu0 %v4343
    %5312 = vmatprep.subr.bf16.mxu0 %v4348
    %5313 = vmatpush1.bf16.msra.mxu0 %v4347
    %5314 = vmatprep.subr.bf16.mxu0 %v4352
    %5315 = vmatpush1.bf16.msra.mxu0 %v4351
    %5316 = vmatprep.subr.bf16.mxu0 %v4356
    %5317 = vmatpush1.bf16.msra.mxu0 %v4355
    %5318 = vmatprep.subr.bf16.mxu0 %v4360
    %5319 = vmatpush1.bf16.msra.mxu0 %v4359
    %5320 = vmatprep.subr.bf16.mxu0 %v4364
    %5321 = vmatpush1.bf16.msra.mxu0 %v4363
    %5322 = vmatprep.subr.bf16.mxu0 %v4368
    %5323 = vmatpush1.bf16.msra.mxu0 %v4367
    %5324 = vmatprep.subr.bf16.mxu0 %v4372
    %5325 = vmatpush1.bf16.msra.mxu0 %v4371
    %5326 = vmatprep.subr.bf16.mxu0 %v4376
    %5327 = vmatpush1.bf16.msra.mxu0 %v4375
    %5328 = vmatprep.subr.bf16.mxu0 %v4380
    %5329 = vmatpush1.bf16.msra.mxu0 %v4379
    %5330 = vmatprep.mubr.bf16.mxu0 %v3202
    %5331 = vmatmul.mubr.bf16.gmra.mrb[0].mxu0 %v3201
    %v5332 = vpop.f32.mrb[0].mxu0
    %v5333 = vadd.f32 %v5292, %v5332
    %v5334 = vpop.f32.mrb[0].mxu0
    %v5335 = vadd.f32 %v5294, %v5334
    %v5336 = vpop.f32.mrb[0].mxu0
    %v5337 = vpop.f32.mrb[0].mxu0
    %5338 = vdwg.mxu0
    %5339 = vmatprep.subr.bf16.mxu0 %v4384
    %5340 = vmatpush1.bf16.msra.mxu0 %v4383
    %5341 = vmatprep.subr.bf16.mxu0 %v4388
    %5342 = vmatpush1.bf16.msra.mxu0 %v4387
    %5343 = vmatprep.subr.bf16.mxu0 %v4392
    %5344 = vmatpush1.bf16.msra.mxu0 %v4391
    %5345 = vmatprep.subr.bf16.mxu0 %v4396
    %5346 = vmatpush1.bf16.msra.mxu0 %v4395
    %5347 = vmatprep.subr.bf16.mxu0 %v4400
    %5348 = vmatpush1.bf16.msra.mxu0 %v4399
    %5349 = vmatprep.subr.bf16.mxu0 %v4404
    %5350 = vmatpush1.bf16.msra.mxu0 %v4403
    %5351 = vmatprep.subr.bf16.mxu0 %v4408
    %5352 = vmatpush1.bf16.msra.mxu0 %v4407
    %5353 = vmatprep.subr.bf16.mxu0 %v4412
    %5354 = vmatpush1.bf16.msra.mxu0 %v4411
    %5355 = vmatprep.subr.bf16.mxu0 %v4416
    %5356 = vmatpush1.bf16.msra.mxu0 %v4415
    %5357 = vmatprep.subr.bf16.mxu0 %v4420
    %5358 = vmatpush1.bf16.msra.mxu0 %v4419
    %5359 = vmatprep.subr.bf16.mxu0 %v4424
    %5360 = vmatpush1.bf16.msra.mxu0 %v4423
    %5361 = vmatprep.subr.bf16.mxu0 %v4428
    %5362 = vmatpush1.bf16.msra.mxu0 %v4427
    %5363 = vmatprep.subr.bf16.mxu0 %v4432
    %5364 = vmatpush1.bf16.msra.mxu0 %v4431
    %5365 = vmatprep.subr.bf16.mxu0 %v4436
    %5366 = vmatpush1.bf16.msra.mxu0 %v4435
    %5367 = vmatprep.subr.bf16.mxu0 %v4440
    %5368 = vmatpush1.bf16.msra.mxu0 %v4439
    %5369 = vmatprep.subr.bf16.mxu0 %v4444
    %5370 = vmatpush1.bf16.msra.mxu0 %v4443
    %5371 = vmatprep.mubr.bf16.mxu0 %v3204
    %5372 = vmatmul.mubr.bf16.gmra.mrb[0].mxu0 %v3203
    %v5373 = vpop.f32.mrb[0].mxu0
    %v5374 = vadd.f32 %v5333, %v5373
    %v5375 = vpop.f32.mrb[0].mxu0
    %v5376 = vadd.f32 %v5335, %v5375
    %v5377 = vpop.f32.mrb[0].mxu0
    %v5378 = vpop.f32.mrb[0].mxu0
    %5379 = vdwg.mxu0
    %5380 = vmatprep.subr.bf16.mxu0 %v4448
    %5381 = vmatpush1.bf16.msra.mxu0 %v4447
    %5382 = vmatprep.subr.bf16.mxu0 %v4452
    %5383 = vmatpush1.bf16.msra.mxu0 %v4451
    %5384 = vmatprep.subr.bf16.mxu0 %v4456
    %5385 = vmatpush1.bf16.msra.mxu0 %v4455
    %5386 = vmatprep.subr.bf16.mxu0 %v4460
    %5387 = vmatpush1.bf16.msra.mxu0 %v4459
    %5388 = vmatprep.subr.bf16.mxu0 %v4464
    %5389 = vmatpush1.bf16.msra.mxu0 %v4463
    %5390 = vmatprep.subr.bf16.mxu0 %v4468
    %5391 = vmatpush1.bf16.msra.mxu0 %v4467
    %5392 = vmatprep.subr.bf16.mxu0 %v4472
    %5393 = vmatpush1.bf16.msra.mxu0 %v4471
    %5394 = vmatprep.subr.bf16.mxu0 %v4476
    %5395 = vmatpush1.bf16.msra.mxu0 %v4475
    %5396 = vmatprep.subr.bf16.mxu0 %v4480
    %5397 = vmatpush1.bf16.msra.mxu0 %v4479
    %5398 = vmatprep.subr.bf16.mxu0 %v4484
    %5399 = vmatpush1.bf16.msra.mxu0 %v4483
    %5400 = vmatprep.subr.bf16.mxu0 %v4488
    %5401 = vmatpush1.bf16.msra.mxu0 %v4487
    %5402 = vmatprep.subr.bf16.mxu0 %v4492
    %5403 = vmatpush1.bf16.msra.mxu0 %v4491
    %5404 = vmatprep.subr.bf16.mxu0 %v4496
    %5405 = vmatpush1.bf16.msra.mxu0 %v4495
    %5406 = vmatprep.subr.bf16.mxu0 %v4500
    %5407 = vmatpush1.bf16.msra.mxu0 %v4499
    %5408 = vmatprep.subr.bf16.mxu0 %v4504
    %5409 = vmatpush1.bf16.msra.mxu0 %v4503
    %5410 = vmatprep.subr.bf16.mxu0 %v4508
    %5411 = vmatpush1.bf16.msra.mxu0 %v4507
    %5412 = vmatprep.mubr.bf16.mxu0 %v3206
    %5413 = vmatmul.mubr.bf16.gmra.mrb[0].mxu0 %v3205
    %v5414 = vpop.f32.mrb[0].mxu0
    %v5415 = vadd.f32 %v5374, %v5414
    %v5416 = vpop.f32.mrb[0].mxu0
    %v5417 = vadd.f32 %v5376, %v5416
    %v5418 = vpop.f32.mrb[0].mxu0
    %v5419 = vpop.f32.mrb[0].mxu0
    %5420 = vdwg.mxu0
    %v5421 = vmax.f32 %v4923, 0.0
    %v5422 = vmax.f32 %v4925, 0.0
    %v5423 = vmax.f32 %v5087, 0.0
    %v5424 = vmax.f32 %v5089, 0.0
    %v5425 = vpack.c.bf16 %v5421, %v5421
    %v5426 = vpack.c.bf16 %v5422, %v5422
    %v5427 = vpack.c.bf16 %v5423, %v5423
    %v5428 = vpack.c.bf16 %v5424, %v5424
    %v5429 = vmax.f32 %v5251, 0.0
    %v5430 = vmax.f32 %v5253, 0.0
    %v5431 = vmax.f32 %v5415, 0.0
    %v5432 = vmax.f32 %v5417, 0.0
    %v5433 = vpack.c.bf16 %v5429, %v5429
    %v5434 = vpack.c.bf16 %v5430, %v5430
    %v5435 = vpack.c.bf16 %v5431, %v5431
    %v5436 = vpack.c.bf16 %v5432, %v5432
    %v5437 = vld [vmem:[#allocation10] sm:$0xff]
    %v5438 = vld [vmem:[#allocation10 + $0x8] sm:$0xff]
    %v5439 = vld [vmem:[#allocation10 + $0x10] sm:$0xff]
    %v5440 = vld [vmem:[#allocation10 + $0x18] sm:$0xff]
    %v5441 = vld [vmem:[#allocation10 + $0x20] sm:$0xff]
    %v5442 = vld [vmem:[#allocation10 + $0x28] sm:$0xff]
    %v5443 = vld [vmem:[#allocation10 + $0x30] sm:$0xff]
    %v5444 = vld [vmem:[#allocation10 + $0x38] sm:$0xff]
    %v5445 = vld [vmem:[#allocation10 + $0x40] sm:$0xff]
    %v5446 = vld [vmem:[#allocation10 + $0x48] sm:$0xff]
    %v5447 = vld [vmem:[#allocation10 + $0x50] sm:$0xff]
    %v5448 = vld [vmem:[#allocation10 + $0x58] sm:$0xff]
    %v5449 = vld [vmem:[#allocation10 + $0x60] sm:$0xff]
    %v5450 = vld [vmem:[#allocation10 + $0x68] sm:$0xff]
    %v5451 = vld [vmem:[#allocation10 + $0x70] sm:$0xff]
    %v5452 = vld [vmem:[#allocation10 + $0x78] sm:$0xff]
    %v5453 = vld [vmem:[#allocation10 + $0x80] sm:$0xff]
    %v5454 = vld [vmem:[#allocation10 + $0x88] sm:$0xff]
    %v5455 = vld [vmem:[#allocation10 + $0x90] sm:$0xff]
    %v5456 = vld [vmem:[#allocation10 + $0x98] sm:$0xff]
    %v5457 = vld [vmem:[#allocation10 + $0xa0] sm:$0xff]
    %v5458 = vld [vmem:[#allocation10 + $0xa8] sm:$0xff]
    %v5459 = vld [vmem:[#allocation10 + $0xb0] sm:$0xff]
    %v5460 = vld [vmem:[#allocation10 + $0xb8] sm:$0xff]
    %v5461 = vld [vmem:[#allocation10 + $0xc0] sm:$0xff]
    %v5462 = vld [vmem:[#allocation10 + $0xc8] sm:$0xff]
    %v5463 = vld [vmem:[#allocation10 + $0xd0] sm:$0xff]
    %v5464 = vld [vmem:[#allocation10 + $0xd8] sm:$0xff]
    %v5465 = vld [vmem:[#allocation10 + $0xe0] sm:$0xff]
    %v5466 = vld [vmem:[#allocation10 + $0xe8] sm:$0xff]
    %v5467 = vld [vmem:[#allocation10 + $0xf0] sm:$0xff]
    %v5468 = vld [vmem:[#allocation10 + $0xf8] sm:$0xff]
    %v5469 = vld [vmem:[#allocation10 + $0x100] sm:$0xff]
    %v5470 = vld [vmem:[#allocation10 + $0x108] sm:$0xff]
    %v5471 = vld [vmem:[#allocation10 + $0x110] sm:$0xff]
    %v5472 = vld [vmem:[#allocation10 + $0x118] sm:$0xff]
    %v5473 = vld [vmem:[#allocation10 + $0x120] sm:$0xff]
    %v5474 = vld [vmem:[#allocation10 + $0x128] sm:$0xff]
    %v5475 = vld [vmem:[#allocation10 + $0x130] sm:$0xff]
    %v5476 = vld [vmem:[#allocation10 + $0x138] sm:$0xff]
    %v5477 = vld [vmem:[#allocation10 + $0x140] sm:$0xff]
    %v5478 = vld [vmem:[#allocation10 + $0x148] sm:$0xff]
    %v5479 = vld [vmem:[#allocation10 + $0x150] sm:$0xff]
    %v5480 = vld [vmem:[#allocation10 + $0x158] sm:$0xff]
    %v5481 = vld [vmem:[#allocation10 + $0x160] sm:$0xff]
    %v5482 = vld [vmem:[#allocation10 + $0x168] sm:$0xff]
    %v5483 = vld [vmem:[#allocation10 + $0x170] sm:$0xff]
    %v5484 = vld [vmem:[#allocation10 + $0x178] sm:$0xff]
    %v5485 = vld [vmem:[#allocation10 + $0x180] sm:$0xff]
    %v5486 = vld [vmem:[#allocation10 + $0x188] sm:$0xff]
    %v5487 = vld [vmem:[#allocation10 + $0x190] sm:$0xff]
    %v5488 = vld [vmem:[#allocation10 + $0x198] sm:$0xff]
    %v5489 = vld [vmem:[#allocation10 + $0x1a0] sm:$0xff]
    %v5490 = vld [vmem:[#allocation10 + $0x1a8] sm:$0xff]
    %v5491 = vld [vmem:[#allocation10 + $0x1b0] sm:$0xff]
    %v5492 = vld [vmem:[#allocation10 + $0x1b8] sm:$0xff]
    %v5493 = vld [vmem:[#allocation10 + $0x1c0] sm:$0xff]
    %v5494 = vld [vmem:[#allocation10 + $0x1c8] sm:$0xff]
    %v5495 = vld [vmem:[#allocation10 + $0x1d0] sm:$0xff]
    %v5496 = vld [vmem:[#allocation10 + $0x1d8] sm:$0xff]
    %v5497 = vld [vmem:[#allocation10 + $0x1e0] sm:$0xff]
    %v5498 = vld [vmem:[#allocation10 + $0x1e8] sm:$0xff]
    %v5499 = vld [vmem:[#allocation10 + $0x1f0] sm:$0xff]
    %v5500 = vld [vmem:[#allocation10 + $0x1f8] sm:$0xff]
    %v5501 = vld [vmem:[#allocation11] sm:$0x3]
    %v5503 = vlaneseq
    %v5504 = vshrl.u32 %v5503, 7
    %v5505 = vsub.s32 0, %v5504
    %v5506 = vrot.slane %v5501, %v5505
    %v5507 = vlaneseq
    %v5508 = vshrl.u32 %v5507, 7
    %v5509 = vsub.s32 1, %v5508
    %v5510 = vrot.slane %v5501, %v5509
    %v5577 = vunpack.c.l.b16 %v5437
    %v5578 = vunpack.c.h.b16 %v5437
    %v5579 = vunpack.c.l.b16 %v5438
    %v5580 = vunpack.c.h.b16 %v5438
    %v5581 = vunpack.c.l.b16 %v5439
    %v5582 = vunpack.c.h.b16 %v5439
    %v5583 = vunpack.c.l.b16 %v5440
    %v5584 = vunpack.c.h.b16 %v5440
    %v5585 = vunpack.c.l.b16 %v5441
    %v5586 = vunpack.c.h.b16 %v5441
    %v5587 = vunpack.c.l.b16 %v5442
    %v5588 = vunpack.c.h.b16 %v5442
    %v5589 = vunpack.c.l.b16 %v5443
    %v5590 = vunpack.c.h.b16 %v5443
    %v5591 = vunpack.c.l.b16 %v5444
    %v5592 = vunpack.c.h.b16 %v5444
    %v5593 = vunpack.c.l.b16 %v5445
    %v5594 = vunpack.c.h.b16 %v5445
    %v5595 = vunpack.c.l.b16 %v5446
    %v5596 = vunpack.c.h.b16 %v5446
    %v5597 = vunpack.c.l.b16 %v5447
    %v5598 = vunpack.c.h.b16 %v5447
    %v5599 = vunpack.c.l.b16 %v5448
    %v5600 = vunpack.c.h.b16 %v5448
    %v5601 = vunpack.c.l.b16 %v5449
    %v5602 = vunpack.c.h.b16 %v5449
    %v5603 = vunpack.c.l.b16 %v5450
    %v5604 = vunpack.c.h.b16 %v5450
    %v5605 = vunpack.c.l.b16 %v5451
    %v5606 = vunpack.c.h.b16 %v5451
    %v5607 = vunpack.c.l.b16 %v5452
    %v5608 = vunpack.c.h.b16 %v5452
    %v5609 = vunpack.c.l.b16 %v5453
    %v5610 = vunpack.c.h.b16 %v5453
    %v5611 = vunpack.c.l.b16 %v5454
    %v5612 = vunpack.c.h.b16 %v5454
    %v5613 = vunpack.c.l.b16 %v5455
    %v5614 = vunpack.c.h.b16 %v5455
    %v5615 = vunpack.c.l.b16 %v5456
    %v5616 = vunpack.c.h.b16 %v5456
    %v5617 = vunpack.c.l.b16 %v5457
    %v5618 = vunpack.c.h.b16 %v5457
    %v5619 = vunpack.c.l.b16 %v5458
    %v5620 = vunpack.c.h.b16 %v5458
    %v5621 = vunpack.c.l.b16 %v5459
    %v5622 = vunpack.c.h.b16 %v5459
    %v5623 = vunpack.c.l.b16 %v5460
    %v5624 = vunpack.c.h.b16 %v5460
    %v5625 = vunpack.c.l.b16 %v5461
    %v5626 = vunpack.c.h.b16 %v5461
    %v5627 = vunpack.c.l.b16 %v5462
    %v5628 = vunpack.c.h.b16 %v5462
    %v5629 = vunpack.c.l.b16 %v5463
    %v5630 = vunpack.c.h.b16 %v5463
    %v5631 = vunpack.c.l.b16 %v5464
    %v5632 = vunpack.c.h.b16 %v5464
    %v5633 = vunpack.c.l.b16 %v5465
    %v5634 = vunpack.c.h.b16 %v5465
    %v5635 = vunpack.c.l.b16 %v5466
    %v5636 = vunpack.c.h.b16 %v5466
    %v5637 = vunpack.c.l.b16 %v5467
    %v5638 = vunpack.c.h.b16 %v5467
    %v5639 = vunpack.c.l.b16 %v5468
    %v5640 = vunpack.c.h.b16 %v5468
    %v5641 = vunpack.c.l.b16 %v5469
    %v5642 = vunpack.c.h.b16 %v5469
    %v5643 = vunpack.c.l.b16 %v5470
    %v5644 = vunpack.c.h.b16 %v5470
    %v5645 = vunpack.c.l.b16 %v5471
    %v5646 = vunpack.c.h.b16 %v5471
    %v5647 = vunpack.c.l.b16 %v5472
    %v5648 = vunpack.c.h.b16 %v5472
    %v5649 = vunpack.c.l.b16 %v5473
    %v5650 = vunpack.c.h.b16 %v5473
    %v5651 = vunpack.c.l.b16 %v5474
    %v5652 = vunpack.c.h.b16 %v5474
    %v5653 = vunpack.c.l.b16 %v5475
    %v5654 = vunpack.c.h.b16 %v5475
    %v5655 = vunpack.c.l.b16 %v5476
    %v5656 = vunpack.c.h.b16 %v5476
    %v5657 = vunpack.c.l.b16 %v5477
    %v5658 = vunpack.c.h.b16 %v5477
    %v5659 = vunpack.c.l.b16 %v5478
    %v5660 = vunpack.c.h.b16 %v5478
    %v5661 = vunpack.c.l.b16 %v5479
    %v5662 = vunpack.c.h.b16 %v5479
    %v5663 = vunpack.c.l.b16 %v5480
    %v5664 = vunpack.c.h.b16 %v5480
    %v5665 = vunpack.c.l.b16 %v5481
    %v5666 = vunpack.c.h.b16 %v5481
    %v5667 = vunpack.c.l.b16 %v5482
    %v5668 = vunpack.c.h.b16 %v5482
    %v5669 = vunpack.c.l.b16 %v5483
    %v5670 = vunpack.c.h.b16 %v5483
    %v5671 = vunpack.c.l.b16 %v5484
    %v5672 = vunpack.c.h.b16 %v5484
    %v5673 = vunpack.c.l.b16 %v5485
    %v5674 = vunpack.c.h.b16 %v5485
    %v5675 = vunpack.c.l.b16 %v5486
    %v5676 = vunpack.c.h.b16 %v5486
    %v5677 = vunpack.c.l.b16 %v5487
    %v5678 = vunpack.c.h.b16 %v5487
    %v5679 = vunpack.c.l.b16 %v5488
    %v5680 = vunpack.c.h.b16 %v5488
    %v5681 = vunpack.c.l.b16 %v5489
    %v5682 = vunpack.c.h.b16 %v5489
    %v5683 = vunpack.c.l.b16 %v5490
    %v5684 = vunpack.c.h.b16 %v5490
    %v5685 = vunpack.c.l.b16 %v5491
    %v5686 = vunpack.c.h.b16 %v5491
    %v5687 = vunpack.c.l.b16 %v5492
    %v5688 = vunpack.c.h.b16 %v5492
    %v5689 = vunpack.c.l.b16 %v5493
    %v5690 = vunpack.c.h.b16 %v5493
    %v5691 = vunpack.c.l.b16 %v5494
    %v5692 = vunpack.c.h.b16 %v5494
    %v5693 = vunpack.c.l.b16 %v5495
    %v5694 = vunpack.c.h.b16 %v5495
    %v5695 = vunpack.c.l.b16 %v5496
    %v5696 = vunpack.c.h.b16 %v5496
    %v5697 = vunpack.c.l.b16 %v5497
    %v5698 = vunpack.c.h.b16 %v5497
    %v5699 = vunpack.c.l.b16 %v5498
    %v5700 = vunpack.c.h.b16 %v5498
    %v5701 = vunpack.c.l.b16 %v5499
    %v5702 = vunpack.c.h.b16 %v5499
    %v5703 = vunpack.c.l.b16 %v5500
    %v5704 = vunpack.c.h.b16 %v5500
    %v5705 = vpack.c.b16 %v5579, %v5577
    %v5706 = vpack.c.b16 %v5580, %v5578
    %v5707 = vpack.c.b16 %v5583, %v5581
    %v5708 = vpack.c.b16 %v5584, %v5582
    %v5709 = vpack.c.b16 %v5587, %v5585
    %v5710 = vpack.c.b16 %v5588, %v5586
    %v5711 = vpack.c.b16 %v5591, %v5589
    %v5712 = vpack.c.b16 %v5592, %v5590
    %v5713 = vpack.c.b16 %v5595, %v5593
    %v5714 = vpack.c.b16 %v5596, %v5594
    %v5715 = vpack.c.b16 %v5599, %v5597
    %v5716 = vpack.c.b16 %v5600, %v5598
    %v5717 = vpack.c.b16 %v5603, %v5601
    %v5718 = vpack.c.b16 %v5604, %v5602
    %v5719 = vpack.c.b16 %v5607, %v5605
    %v5720 = vpack.c.b16 %v5608, %v5606
    %v5721 = vpack.c.b16 %v5611, %v5609
    %v5722 = vpack.c.b16 %v5612, %v5610
    %v5723 = vpack.c.b16 %v5615, %v5613
    %v5724 = vpack.c.b16 %v5616, %v5614
    %v5725 = vpack.c.b16 %v5619, %v5617
    %v5726 = vpack.c.b16 %v5620, %v5618
    %v5727 = vpack.c.b16 %v5623, %v5621
    %v5728 = vpack.c.b16 %v5624, %v5622
    %v5729 = vpack.c.b16 %v5627, %v5625
    %v5730 = vpack.c.b16 %v5628, %v5626
    %v5731 = vpack.c.b16 %v5631, %v5629
    %v5732 = vpack.c.b16 %v5632, %v5630
    %v5733 = vpack.c.b16 %v5635, %v5633
    %v5734 = vpack.c.b16 %v5636, %v5634
    %v5735 = vpack.c.b16 %v5639, %v5637
    %v5736 = vpack.c.b16 %v5640, %v5638
    %v5737 = vpack.c.b16 %v5643, %v5641
    %v5738 = vpack.c.b16 %v5644, %v5642
    %v5739 = vpack.c.b16 %v5647, %v5645
    %v5740 = vpack.c.b16 %v5648, %v5646
    %v5741 = vpack.c.b16 %v5651, %v5649
    %v5742 = vpack.c.b16 %v5652, %v5650
    %v5743 = vpack.c.b16 %v5655, %v5653
    %v5744 = vpack.c.b16 %v5656, %v5654
    %v5745 = vpack.c.b16 %v5659, %v5657
    %v5746 = vpack.c.b16 %v5660, %v5658
    %v5747 = vpack.c.b16 %v5663, %v5661
    %v5748 = vpack.c.b16 %v5664, %v5662
    %v5749 = vpack.c.b16 %v5667, %v5665
    %v5750 = vpack.c.b16 %v5668, %v5666
    %v5751 = vpack.c.b16 %v5671, %v5669
    %v5752 = vpack.c.b16 %v5672, %v5670
    %v5753 = vpack.c.b16 %v5675, %v5673
    %v5754 = vpack.c.b16 %v5676, %v5674
    %v5755 = vpack.c.b16 %v5679, %v5677
    %v5756 = vpack.c.b16 %v5680, %v5678
    %v5757 = vpack.c.b16 %v5683, %v5681
    %v5758 = vpack.c.b16 %v5684, %v5682
    %v5759 = vpack.c.b16 %v5687, %v5685
    %v5760 = vpack.c.b16 %v5688, %v5686
    %v5761 = vpack.c.b16 %v5691, %v5689
    %v5762 = vpack.c.b16 %v5692, %v5690
    %v5763 = vpack.c.b16 %v5695, %v5693
    %v5764 = vpack.c.b16 %v5696, %v5694
    %v5765 = vpack.c.b16 %v5699, %v5697
    %v5766 = vpack.c.b16 %v5700, %v5698
    %v5767 = vpack.c.b16 %v5703, %v5701
    %v5768 = vpack.c.b16 %v5704, %v5702
    %5833 = vmatprep.subr.bf16.mxu0 %v5706
    %5834 = vmatpush1.bf16.msra.mxu0 %v5705
    %5835 = vmatprep.subr.bf16.mxu0 %v5708
    %5836 = vmatpush1.bf16.msra.mxu0 %v5707
    %5837 = vmatprep.subr.bf16.mxu0 %v5710
    %5838 = vmatpush1.bf16.msra.mxu0 %v5709
    %5839 = vmatprep.subr.bf16.mxu0 %v5712
    %5840 = vmatpush1.bf16.msra.mxu0 %v5711
    %5841 = vmatprep.subr.bf16.mxu0 %v5714
    %5842 = vmatpush1.bf16.msra.mxu0 %v5713
    %5843 = vmatprep.subr.bf16.mxu0 %v5716
    %5844 = vmatpush1.bf16.msra.mxu0 %v5715
    %5845 = vmatprep.subr.bf16.mxu0 %v5718
    %5846 = vmatpush1.bf16.msra.mxu0 %v5717
    %5847 = vmatprep.subr.bf16.mxu0 %v5720
    %5848 = vmatpush1.bf16.msra.mxu0 %v5719
    %5849 = vmatprep.subr.bf16.mxu0 %v5722
    %5850 = vmatpush1.bf16.msra.mxu0 %v5721
    %5851 = vmatprep.subr.bf16.mxu0 %v5724
    %5852 = vmatpush1.bf16.msra.mxu0 %v5723
    %5853 = vmatprep.subr.bf16.mxu0 %v5726
    %5854 = vmatpush1.bf16.msra.mxu0 %v5725
    %5855 = vmatprep.subr.bf16.mxu0 %v5728
    %5856 = vmatpush1.bf16.msra.mxu0 %v5727
    %5857 = vmatprep.subr.bf16.mxu0 %v5730
    %5858 = vmatpush1.bf16.msra.mxu0 %v5729
    %5859 = vmatprep.subr.bf16.mxu0 %v5732
    %5860 = vmatpush1.bf16.msra.mxu0 %v5731
    %5861 = vmatprep.subr.bf16.mxu0 %v5734
    %5862 = vmatpush1.bf16.msra.mxu0 %v5733
    %5863 = vmatprep.subr.bf16.mxu0 %v5736
    %5864 = vmatpush1.bf16.msra.mxu0 %v5735
    %5865 = vmatprep.mubr.bf16.mxu0 %v5426
    %5866 = vmatmul.mubr.bf16.gmra.mrb[0].mxu0 %v5425
    %v5867 = vpop.f32.mrb[0].mxu0
    %v5868 = vadd.f32 %v5506, %v5867
    %v5869 = vpop.f32.mrb[0].mxu0
    %v5870 = vadd.f32 %v5510, %v5869
    %v5871 = vpop.f32.mrb[0].mxu0
    %v5872 = vpop.f32.mrb[0].mxu0
    %5873 = vdwg.mxu0
    %5874 = vmatprep.subr.bf16.mxu0 %v5738
    %5875 = vmatpush1.bf16.msra.mxu0 %v5737
    %5876 = vmatprep.subr.bf16.mxu0 %v5740
    %5877 = vmatpush1.bf16.msra.mxu0 %v5739
    %5878 = vmatprep.subr.bf16.mxu0 %v5742
    %5879 = vmatpush1.bf16.msra.mxu0 %v5741
    %5880 = vmatprep.subr.bf16.mxu0 %v5744
    %5881 = vmatpush1.bf16.msra.mxu0 %v5743
    %5882 = vmatprep.subr.bf16.mxu0 %v5746
    %5883 = vmatpush1.bf16.msra.mxu0 %v5745
    %5884 = vmatprep.subr.bf16.mxu0 %v5748
    %5885 = vmatpush1.bf16.msra.mxu0 %v5747
    %5886 = vmatprep.subr.bf16.mxu0 %v5750
    %5887 = vmatpush1.bf16.msra.mxu0 %v5749
    %5888 = vmatprep.subr.bf16.mxu0 %v5752
    %5889 = vmatpush1.bf16.msra.mxu0 %v5751
    %5890 = vmatprep.subr.bf16.mxu0 %v5754
    %5891 = vmatpush1.bf16.msra.mxu0 %v5753
    %5892 = vmatprep.subr.bf16.mxu0 %v5756
    %5893 = vmatpush1.bf16.msra.mxu0 %v5755
    %5894 = vmatprep.subr.bf16.mxu0 %v5758
    %5895 = vmatpush1.bf16.msra.mxu0 %v5757
    %5896 = vmatprep.subr.bf16.mxu0 %v5760
    %5897 = vmatpush1.bf16.msra.mxu0 %v5759
    %5898 = vmatprep.subr.bf16.mxu0 %v5762
    %5899 = vmatpush1.bf16.msra.mxu0 %v5761
    %5900 = vmatprep.subr.bf16.mxu0 %v5764
    %5901 = vmatpush1.bf16.msra.mxu0 %v5763
    %5902 = vmatprep.subr.bf16.mxu0 %v5766
    %5903 = vmatpush1.bf16.msra.mxu0 %v5765
    %5904 = vmatprep.subr.bf16.mxu0 %v5768
    %5905 = vmatpush1.bf16.msra.mxu0 %v5767
    %5906 = vmatprep.mubr.bf16.mxu0 %v5428
    %5907 = vmatmul.mubr.bf16.gmra.mrb[0].mxu0 %v5427
    %v5908 = vpop.f32.mrb[0].mxu0
    %v5909 = vadd.f32 %v5868, %v5908
    %v5910 = vpop.f32.mrb[0].mxu0
    %v5911 = vadd.f32 %v5870, %v5910
    %v5912 = vpop.f32.mrb[0].mxu0
    %v5913 = vpop.f32.mrb[0].mxu0
    %5914 = vdwg.mxu0
    %5915 = vmatprep.subr.bf16.mxu0 %v5706
    %5916 = vmatpush1.bf16.msra.mxu0 %v5705
    %5917 = vmatprep.subr.bf16.mxu0 %v5708
    %5918 = vmatpush1.bf16.msra.mxu0 %v5707
    %5919 = vmatprep.subr.bf16.mxu0 %v5710
    %5920 = vmatpush1.bf16.msra.mxu0 %v5709
    %5921 = vmatprep.subr.bf16.mxu0 %v5712
    %5922 = vmatpush1.bf16.msra.mxu0 %v5711
    %5923 = vmatprep.subr.bf16.mxu0 %v5714
    %5924 = vmatpush1.bf16.msra.mxu0 %v5713
    %5925 = vmatprep.subr.bf16.mxu0 %v5716
    %5926 = vmatpush1.bf16.msra.mxu0 %v5715
    %5927 = vmatprep.subr.bf16.mxu0 %v5718
    %5928 = vmatpush1.bf16.msra.mxu0 %v5717
    %5929 = vmatprep.subr.bf16.mxu0 %v5720
    %5930 = vmatpush1.bf16.msra.mxu0 %v5719
    %5931 = vmatprep.subr.bf16.mxu0 %v5722
    %5932 = vmatpush1.bf16.msra.mxu0 %v5721
    %5933 = vmatprep.subr.bf16.mxu0 %v5724
    %5934 = vmatpush1.bf16.msra.mxu0 %v5723
    %5935 = vmatprep.subr.bf16.mxu0 %v5726
    %5936 = vmatpush1.bf16.msra.mxu0 %v5725
    %5937 = vmatprep.subr.bf16.mxu0 %v5728
    %5938 = vmatpush1.bf16.msra.mxu0 %v5727
    %5939 = vmatprep.subr.bf16.mxu0 %v5730
    %5940 = vmatpush1.bf16.msra.mxu0 %v5729
    %5941 = vmatprep.subr.bf16.mxu0 %v5732
    %5942 = vmatpush1.bf16.msra.mxu0 %v5731
    %5943 = vmatprep.subr.bf16.mxu0 %v5734
    %5944 = vmatpush1.bf16.msra.mxu0 %v5733
    %5945 = vmatprep.subr.bf16.mxu0 %v5736
    %5946 = vmatpush1.bf16.msra.mxu0 %v5735
    %5947 = vmatprep.mubr.bf16.mxu0 %v5434
    %5948 = vmatmul.mubr.bf16.gmra.mrb[0].mxu0 %v5433
    %v5949 = vpop.f32.mrb[0].mxu0
    %v5950 = vadd.f32 %v5506, %v5949
    %v5951 = vpop.f32.mrb[0].mxu0
    %v5952 = vadd.f32 %v5510, %v5951
    %v5953 = vpop.f32.mrb[0].mxu0
    %v5954 = vpop.f32.mrb[0].mxu0
    %5955 = vdwg.mxu0
    %5956 = vmatprep.subr.bf16.mxu0 %v5738
    %5957 = vmatpush1.bf16.msra.mxu0 %v5737
    %5958 = vmatprep.subr.bf16.mxu0 %v5740
    %5959 = vmatpush1.bf16.msra.mxu0 %v5739
    %5960 = vmatprep.subr.bf16.mxu0 %v5742
    %5961 = vmatpush1.bf16.msra.mxu0 %v5741
    %5962 = vmatprep.subr.bf16.mxu0 %v5744
    %5963 = vmatpush1.bf16.msra.mxu0 %v5743
    %5964 = vmatprep.subr.bf16.mxu0 %v5746
    %5965 = vmatpush1.bf16.msra.mxu0 %v5745
    %5966 = vmatprep.subr.bf16.mxu0 %v5748
    %5967 = vmatpush1.bf16.msra.mxu0 %v5747
    %5968 = vmatprep.subr.bf16.mxu0 %v5750
    %5969 = vmatpush1.bf16.msra.mxu0 %v5749
    %5970 = vmatprep.subr.bf16.mxu0 %v5752
    %5971 = vmatpush1.bf16.msra.mxu0 %v5751
    %5972 = vmatprep.subr.bf16.mxu0 %v5754
    %5973 = vmatpush1.bf16.msra.mxu0 %v5753
    %5974 = vmatprep.subr.bf16.mxu0 %v5756
    %5975 = vmatpush1.bf16.msra.mxu0 %v5755
    %5976 = vmatprep.subr.bf16.mxu0 %v5758
    %5977 = vmatpush1.bf16.msra.mxu0 %v5757
    %5978 = vmatprep.subr.bf16.mxu0 %v5760
    %5979 = vmatpush1.bf16.msra.mxu0 %v5759
    %5980 = vmatprep.subr.bf16.mxu0 %v5762
    %5981 = vmatpush1.bf16.msra.mxu0 %v5761
    %5982 = vmatprep.subr.bf16.mxu0 %v5764
    %5983 = vmatpush1.bf16.msra.mxu0 %v5763
    %5984 = vmatprep.subr.bf16.mxu0 %v5766
    %5985 = vmatpush1.bf16.msra.mxu0 %v5765
    %5986 = vmatprep.subr.bf16.mxu0 %v5768
    %5987 = vmatpush1.bf16.msra.mxu0 %v5767
    %5988 = vmatprep.mubr.bf16.mxu0 %v5436
    %5989 = vmatmul.mubr.bf16.gmra.mrb[0].mxu0 %v5435
    %v5990 = vpop.f32.mrb[0].mxu0
    %v5991 = vadd.f32 %v5950, %v5990
    %v5992 = vpop.f32.mrb[0].mxu0
    %v5993 = vadd.f32 %v5952, %v5992
    %v5994 = vpop.f32.mrb[0].mxu0
    %v5995 = vpop.f32.mrb[0].mxu0
    %5996 = vdwg.mxu0
    %v5997 = vmax.f32 %v5909, 0.0
    %v5998 = vmax.f32 %v5911, 0.0
    %v5999 = vpack.c.bf16 %v5997, %v5997
    %v6000 = vpack.c.bf16 %v5998, %v5998
    %v6001 = vmax.f32 %v5991, 0.0
    %v6002 = vmax.f32 %v5993, 0.0
    %v6003 = vpack.c.bf16 %v6001, %v6001
    %v6004 = vpack.c.bf16 %v6002, %v6002
    %v6005 = vld [vmem:[#allocation13] sm:$0xf]
    %v6006 = vld [vmem:[#allocation13 + $0x4] sm:$0xf]
    %v6007 = vld [vmem:[#allocation13 + $0x8] sm:$0xf]
    %v6008 = vld [vmem:[#allocation13 + $0xc] sm:$0xf]
    %v6009 = vld [vmem:[#allocation13 + $0x10] sm:$0xf]
    %v6010 = vld [vmem:[#allocation13 + $0x14] sm:$0xf]
    %v6011 = vld [vmem:[#allocation13 + $0x18] sm:$0xf]
    %v6012 = vld [vmem:[#allocation13 + $0x1c] sm:$0xf]
    %v6013 = vld [vmem:[#allocation13 + $0x20] sm:$0xf]
    %v6014 = vld [vmem:[#allocation13 + $0x24] sm:$0xf]
    %v6015 = vld [vmem:[#allocation13 + $0x28] sm:$0xf]
    %v6016 = vld [vmem:[#allocation13 + $0x2c] sm:$0xf]
    %v6017 = vld [vmem:[#allocation13 + $0x30] sm:$0xf]
    %v6018 = vld [vmem:[#allocation13 + $0x34] sm:$0xf]
    %v6019 = vld [vmem:[#allocation13 + $0x38] sm:$0xf]
    %v6020 = vld [vmem:[#allocation13 + $0x3c] sm:$0xf]
    %v6021 = vld [vmem:[#allocation13 + $0x40] sm:$0xf]
    %v6022 = vld [vmem:[#allocation13 + $0x44] sm:$0xf]
    %v6023 = vld [vmem:[#allocation13 + $0x48] sm:$0xf]
    %v6024 = vld [vmem:[#allocation13 + $0x4c] sm:$0xf]
    %v6025 = vld [vmem:[#allocation13 + $0x50] sm:$0xf]
    %v6026 = vld [vmem:[#allocation13 + $0x54] sm:$0xf]
    %v6027 = vld [vmem:[#allocation13 + $0x58] sm:$0xf]
    %v6028 = vld [vmem:[#allocation13 + $0x5c] sm:$0xf]
    %v6029 = vld [vmem:[#allocation13 + $0x60] sm:$0xf]
    %v6030 = vld [vmem:[#allocation13 + $0x64] sm:$0xf]
    %v6031 = vld [vmem:[#allocation13 + $0x68] sm:$0xf]
    %v6032 = vld [vmem:[#allocation13 + $0x6c] sm:$0xf]
    %v6033 = vld [vmem:[#allocation13 + $0x70] sm:$0xf]
    %v6034 = vld [vmem:[#allocation13 + $0x74] sm:$0xf]
    %v6035 = vld [vmem:[#allocation13 + $0x78] sm:$0xf]
    %v6036 = vld [vmem:[#allocation13 + $0x7c] sm:$0xf]
    %v6037 = vld [vmem:[#allocation14] sm:$0x1]
    %v6039 = vlaneseq
    %v6040 = vshrl.u32 %v6039, 7
    %v6041 = vsub.s32 0, %v6040
    %v6042 = vrot.slane %v6037, %v6041
    %v6076 = vunpack.c.l.b16 %v6005
    %v6077 = vunpack.c.l.b16 %v6006
    %v6078 = vunpack.c.l.b16 %v6007
    %v6079 = vunpack.c.l.b16 %v6008
    %v6080 = vunpack.c.l.b16 %v6009
    %v6081 = vunpack.c.l.b16 %v6010
    %v6082 = vunpack.c.l.b16 %v6011
    %v6083 = vunpack.c.l.b16 %v6012
    %v6084 = vunpack.c.l.b16 %v6013
    %v6085 = vunpack.c.l.b16 %v6014
    %v6086 = vunpack.c.l.b16 %v6015
    %v6087 = vunpack.c.l.b16 %v6016
    %v6088 = vunpack.c.l.b16 %v6017
    %v6089 = vunpack.c.l.b16 %v6018
    %v6090 = vunpack.c.l.b16 %v6019
    %v6091 = vunpack.c.l.b16 %v6020
    %v6092 = vunpack.c.l.b16 %v6021
    %v6093 = vunpack.c.l.b16 %v6022
    %v6094 = vunpack.c.l.b16 %v6023
    %v6095 = vunpack.c.l.b16 %v6024
    %v6096 = vunpack.c.l.b16 %v6025
    %v6097 = vunpack.c.l.b16 %v6026
    %v6098 = vunpack.c.l.b16 %v6027
    %v6099 = vunpack.c.l.b16 %v6028
    %v6100 = vunpack.c.l.b16 %v6029
    %v6101 = vunpack.c.l.b16 %v6030
    %v6102 = vunpack.c.l.b16 %v6031
    %v6103 = vunpack.c.l.b16 %v6032
    %v6104 = vunpack.c.l.b16 %v6033
    %v6105 = vunpack.c.l.b16 %v6034
    %v6106 = vunpack.c.l.b16 %v6035
    %v6107 = vunpack.c.l.b16 %v6036
    %v6108 = vpack.c.b16 %v6077, %v6076
    %v6109 = vpack.c.b16 %v6079, %v6078
    %v6110 = vpack.c.b16 %v6081, %v6080
    %v6111 = vpack.c.b16 %v6083, %v6082
    %v6112 = vpack.c.b16 %v6085, %v6084
    %v6113 = vpack.c.b16 %v6087, %v6086
    %v6114 = vpack.c.b16 %v6089, %v6088
    %v6115 = vpack.c.b16 %v6091, %v6090
    %v6116 = vpack.c.b16 %v6093, %v6092
    %v6117 = vpack.c.b16 %v6095, %v6094
    %v6118 = vpack.c.b16 %v6097, %v6096
    %v6119 = vpack.c.b16 %v6099, %v6098
    %v6120 = vpack.c.b16 %v6101, %v6100
    %v6121 = vpack.c.b16 %v6103, %v6102
    %v6122 = vpack.c.b16 %v6105, %v6104
    %v6123 = vpack.c.b16 %v6107, %v6106
    %6140 = vmatprep.subr.bf16.mxu0 0
    %6141 = vmatpush1.bf16.msra.mxu0 %v6108
    %6142 = vmatprep.subr.bf16.mxu0 0
    %6143 = vmatpush1.bf16.msra.mxu0 %v6109
    %6144 = vmatprep.subr.bf16.mxu0 0
    %6145 = vmatpush1.bf16.msra.mxu0 %v6110
    %6146 = vmatprep.subr.bf16.mxu0 0
    %6147 = vmatpush1.bf16.msra.mxu0 %v6111
    %6148 = vmatprep.subr.bf16.mxu0 0
    %6149 = vmatpush1.bf16.msra.mxu0 %v6112
    %6150 = vmatprep.subr.bf16.mxu0 0
    %6151 = vmatpush1.bf16.msra.mxu0 %v6113
    %6152 = vmatprep.subr.bf16.mxu0 0
    %6153 = vmatpush1.bf16.msra.mxu0 %v6114
    %6154 = vmatprep.subr.bf16.mxu0 0
    %6155 = vmatpush1.bf16.msra.mxu0 %v6115
    %6156 = vmatprep.subr.bf16.mxu0 0
    %6157 = vmatpush1.bf16.msra.mxu0 %v6116
    %6158 = vmatprep.subr.bf16.mxu0 0
    %6159 = vmatpush1.bf16.msra.mxu0 %v6117
    %6160 = vmatprep.subr.bf16.mxu0 0
    %6161 = vmatpush1.bf16.msra.mxu0 %v6118
    %6162 = vmatprep.subr.bf16.mxu0 0
    %6163 = vmatpush1.bf16.msra.mxu0 %v6119
    %6164 = vmatprep.subr.bf16.mxu0 0
    %6165 = vmatpush1.bf16.msra.mxu0 %v6120
    %6166 = vmatprep.subr.bf16.mxu0 0
    %6167 = vmatpush1.bf16.msra.mxu0 %v6121
    %6168 = vmatprep.subr.bf16.mxu0 0
    %6169 = vmatpush1.bf16.msra.mxu0 %v6122
    %6170 = vmatprep.subr.bf16.mxu0 0
    %6171 = vmatpush1.bf16.msra.mxu0 %v6123
    %6172 = vmatprep.mubr.bf16.mxu0 %v6000
    %6173 = vmatmul.mubr.bf16.gmra.mrb[0].mxu0 %v5999
    %v6174 = vpop.f32.mrb[0].mxu0
    %v6175 = vadd.f32 %v6042, %v6174
    %v6176 = vpop.f32.mrb[0].mxu0
    %v6177 = vpop.f32.mrb[0].mxu0
    %v6178 = vpop.f32.mrb[0].mxu0
    %6179 = vdwg.mxu0
    %6180 = vmatprep.subr.bf16.mxu0 0
    %6181 = vmatpush1.bf16.msra.mxu0 %v6108
    %6182 = vmatprep.subr.bf16.mxu0 0
    %6183 = vmatpush1.bf16.msra.mxu0 %v6109
    %6184 = vmatprep.subr.bf16.mxu0 0
    %6185 = vmatpush1.bf16.msra.mxu0 %v6110
    %6186 = vmatprep.subr.bf16.mxu0 0
    %6187 = vmatpush1.bf16.msra.mxu0 %v6111
    %6188 = vmatprep.subr.bf16.mxu0 0
    %6189 = vmatpush1.bf16.msra.mxu0 %v6112
    %6190 = vmatprep.subr.bf16.mxu0 0
    %6191 = vmatpush1.bf16.msra.mxu0 %v6113
    %6192 = vmatprep.subr.bf16.mxu0 0
    %6193 = vmatpush1.bf16.msra.mxu0 %v6114
    %6194 = vmatprep.subr.bf16.mxu0 0
    %6195 = vmatpush1.bf16.msra.mxu0 %v6115
    %6196 = vmatprep.subr.bf16.mxu0 0
    %6197 = vmatpush1.bf16.msra.mxu0 %v6116
    %6198 = vmatprep.subr.bf16.mxu0 0
    %6199 = vmatpush1.bf16.msra.mxu0 %v6117
    %6200 = vmatprep.subr.bf16.mxu0 0
    %6201 = vmatpush1.bf16.msra.mxu0 %v6118
    %6202 = vmatprep.subr.bf16.mxu0 0
    %6203 = vmatpush1.bf16.msra.mxu0 %v6119
    %6204 = vmatprep.subr.bf16.mxu0 0
    %6205 = vmatpush1.bf16.msra.mxu0 %v6120
    %6206 = vmatprep.subr.bf16.mxu0 0
    %6207 = vmatpush1.bf16.msra.mxu0 %v6121
    %6208 = vmatprep.subr.bf16.mxu0 0
    %6209 = vmatpush1.bf16.msra.mxu0 %v6122
    %6210 = vmatprep.subr.bf16.mxu0 0
    %6211 = vmatpush1.bf16.msra.mxu0 %v6123
    %6212 = vmatprep.mubr.bf16.mxu0 %v6004
    %6213 = vmatmul.mubr.bf16.gmra.mrb[0].mxu0 %v6003
    %v6214 = vpop.f32.mrb[0].mxu0
    %v6215 = vadd.f32 %v6042, %v6214
    %v6216 = vpop.f32.mrb[0].mxu0
    %v6217 = vpop.f32.mrb[0].mxu0
    %v6218 = vpop.f32.mrb[0].mxu0
    %6219 = vdwg.mxu0
    %v6220 = vmax.f32 %v6175, 0.0
    %v6221 = vpack.c.bf16 %v6220, %v6220
    %v6222 = vmax.f32 %v6215, 0.0
    %v6223 = vpack.c.bf16 %v6222, %v6222
    %v6224 = vld [vmem:[%s9] sm:$0xf]
    %v6225 = vld [vmem:[%s9 + $0x4] sm:$0xf]
    %v6226 = vld [vmem:[%s9 + $0x8] sm:$0xf]
    %v6227 = vld [vmem:[%s9 + $0xc] sm:$0xf]
    %v6228 = vld [vmem:[%s9 + $0x10] sm:$0xf]
    %v6229 = vld [vmem:[%s9 + $0x14] sm:$0xf]
    %v6230 = vld [vmem:[%s9 + $0x18] sm:$0xf]
    %v6231 = vld [vmem:[%s9 + $0x1c] sm:$0xf]
    %v6232 = vld [vmem:[%s9 + $0x20] sm:$0xf]
    %v6233 = vld [vmem:[%s9 + $0x24] sm:$0xf]
    %v6234 = vld [vmem:[%s9 + $0x28] sm:$0xf]
    %v6235 = vld [vmem:[%s9 + $0x2c] sm:$0xf]
    %v6236 = vld [vmem:[%s9 + $0x30] sm:$0xf]
    %v6237 = vld [vmem:[%s9 + $0x34] sm:$0xf]
    %v6238 = vld [vmem:[%s9 + $0x38] sm:$0xf]
    %v6239 = vld [vmem:[%s9 + $0x3c] sm:$0xf]
    %v6240 = vld [vmem:[#allocation16] sm:$0x1]
    %v6242 = vlaneseq
    %v6243 = vshrl.u32 %v6242, 7
    %v6244 = vsub.s32 0, %v6243
    %v6245 = vrot.slane %v6240, %v6244
    %v6263 = vunpack.c.l.b16 %v6224
    %v6264 = vunpack.c.l.b16 %v6225
    %v6265 = vunpack.c.l.b16 %v6226
    %v6266 = vunpack.c.l.b16 %v6227
    %v6267 = vunpack.c.l.b16 %v6228
    %v6268 = vunpack.c.l.b16 %v6229
    %v6269 = vunpack.c.l.b16 %v6230
    %v6270 = vunpack.c.l.b16 %v6231
    %v6271 = vunpack.c.l.b16 %v6232
    %v6272 = vunpack.c.l.b16 %v6233
    %v6273 = vunpack.c.l.b16 %v6234
    %v6274 = vunpack.c.l.b16 %v6235
    %v6275 = vunpack.c.l.b16 %v6236
    %v6276 = vunpack.c.l.b16 %v6237
    %v6277 = vunpack.c.l.b16 %v6238
    %v6278 = vunpack.c.l.b16 %v6239
    %v6279 = vpack.c.b16 %v6264, %v6263
    %v6280 = vpack.c.b16 %v6266, %v6265
    %v6281 = vpack.c.b16 %v6268, %v6267
    %v6282 = vpack.c.b16 %v6270, %v6269
    %v6283 = vpack.c.b16 %v6272, %v6271
    %v6284 = vpack.c.b16 %v6274, %v6273
    %v6285 = vpack.c.b16 %v6276, %v6275
    %v6286 = vpack.c.b16 %v6278, %v6277
    %6295 = vmatprep.subr.bf16.mxu0 0
    %6296 = vmatpush1.bf16.msra.mxu0 %v6279
    %6297 = vmatprep.subr.bf16.mxu0 0
    %6298 = vmatpush1.bf16.msra.mxu0 %v6280
    %6299 = vmatprep.subr.bf16.mxu0 0
    %6300 = vmatpush1.bf16.msra.mxu0 %v6281
    %6301 = vmatprep.subr.bf16.mxu0 0
    %6302 = vmatpush1.bf16.msra.mxu0 %v6282
    %6303 = vmatprep.subr.bf16.mxu0 0
    %6304 = vmatpush1.bf16.msra.mxu0 %v6283
    %6305 = vmatprep.subr.bf16.mxu0 0
    %6306 = vmatpush1.bf16.msra.mxu0 %v6284
    %6307 = vmatprep.subr.bf16.mxu0 0
    %6308 = vmatpush1.bf16.msra.mxu0 %v6285
    %6309 = vmatprep.subr.bf16.mxu0 0
    %6310 = vmatpush1.bf16.msra.mxu0 %v6286
    %6311 = vmatprep.subr.bf16.mxu0 0
    %6312 = vmatpush1.bf16.msra.mxu0 0
    %6313 = vmatprep.subr.bf16.mxu0 0
    %6314 = vmatpush1.bf16.msra.mxu0 0
    %6315 = vmatprep.subr.bf16.mxu0 0
    %6316 = vmatpush1.bf16.msra.mxu0 0
    %6317 = vmatprep.subr.bf16.mxu0 0
    %6318 = vmatpush1.bf16.msra.mxu0 0
    %6319 = vmatprep.subr.bf16.mxu0 0
    %6320 = vmatpush1.bf16.msra.mxu0 0
    %6321 = vmatprep.subr.bf16.mxu0 0
    %6322 = vmatpush1.bf16.msra.mxu0 0
    %6323 = vmatprep.subr.bf16.mxu0 0
    %6324 = vmatpush1.bf16.msra.mxu0 0
    %6325 = vmatprep.subr.bf16.mxu0 0
    %6326 = vmatpush1.bf16.msra.mxu0 0
    %6327 = vmatprep.mubr.bf16.mxu0 0
    %6328 = vmatmul.mubr.bf16.gmra.mrb[0].mxu0 %v6221
    %v6329 = vpop.f32.mrb[0].mxu0
    %v6330 = vadd.f32 %v6245, %v6329
    %v6331 = vpop.f32.mrb[0].mxu0
    %v6332 = vpop.f32.mrb[0].mxu0
    %v6333 = vpop.f32.mrb[0].mxu0
    %6334 = vdwg.mxu0
    %6335 = vmatprep.subr.bf16.mxu0 0
    %6336 = vmatpush1.bf16.msra.mxu0 %v6279
    %6337 = vmatprep.subr.bf16.mxu0 0
    %6338 = vmatpush1.bf16.msra.mxu0 %v6280
    %6339 = vmatprep.subr.bf16.mxu0 0
    %6340 = vmatpush1.bf16.msra.mxu0 %v6281
    %6341 = vmatprep.subr.bf16.mxu0 0
    %6342 = vmatpush1.bf16.msra.mxu0 %v6282
    %6343 = vmatprep.subr.bf16.mxu0 0
    %6344 = vmatpush1.bf16.msra.mxu0 %v6283
    %6345 = vmatprep.subr.bf16.mxu0 0
    %6346 = vmatpush1.bf16.msra.mxu0 %v6284
    %6347 = vmatprep.subr.bf16.mxu0 0
    %6348 = vmatpush1.bf16.msra.mxu0 %v6285
    %6349 = vmatprep.subr.bf16.mxu0 0
    %6350 = vmatpush1.bf16.msra.mxu0 %v6286
    %6351 = vmatprep.subr.bf16.mxu0 0
    %6352 = vmatpush1.bf16.msra.mxu0 0
    %6353 = vmatprep.subr.bf16.mxu0 0
    %6354 = vmatpush1.bf16.msra.mxu0 0
    %6355 = vmatprep.subr.bf16.mxu0 0
    %6356 = vmatpush1.bf16.msra.mxu0 0
    %6357 = vmatprep.subr.bf16.mxu0 0
    %6358 = vmatpush1.bf16.msra.mxu0 0
    %6359 = vmatprep.subr.bf16.mxu0 0
    %6360 = vmatpush1.bf16.msra.mxu0 0
    %6361 = vmatprep.subr.bf16.mxu0 0
    %6362 = vmatpush1.bf16.msra.mxu0 0
    %6363 = vmatprep.subr.bf16.mxu0 0
    %6364 = vmatpush1.bf16.msra.mxu0 0
    %6365 = vmatprep.subr.bf16.mxu0 0
    %6366 = vmatpush1.bf16.msra.mxu0 0
    %6367 = vmatprep.mubr.bf16.mxu0 0
    %6368 = vmatmul.mubr.bf16.gmra.mrb[0].mxu0 %v6223
    %v6369 = vpop.f32.mrb[0].mxu0
    %v6370 = vadd.f32 %v6245, %v6369
    %v6371 = vpop.f32.mrb[0].mxu0
    %v6372 = vpop.f32.mrb[0].mxu0
    %v6373 = vpop.f32.mrb[0].mxu0
    %6374 = vdwg.mxu0
    %v6375 = vmax.f32 %v6330, 0.0
    %v6376 = vpack.c.bf16 %v6375, %v6375
    %v6377 = vmax.f32 %v6370, 0.0
    %v6378 = vpack.c.bf16 %v6377, %v6377
    %v6379 = vld [vmem:[#allocation17] sm:$0xf]
    %v6380 = vld [vmem:[#allocation17 + $0x4] sm:$0xf]
    %v6381 = vld [vmem:[#allocation17 + $0x8] sm:$0xf]
    %v6382 = vld [vmem:[#allocation17 + $0xc] sm:$0xf]
    %v6383 = vld [vmem:[#allocation17 + $0x10] sm:$0xf]
    %v6384 = vld [vmem:[#allocation17 + $0x14] sm:$0xf]
    %v6385 = vld [vmem:[#allocation17 + $0x18] sm:$0xf]
    %v6386 = vld [vmem:[#allocation17 + $0x1c] sm:$0xf]
    %v6387 = vld [vmem:[#allocation19] sm:$0x1]
    %v6389 = vlaneseq
    %v6390 = vshrl.u32 %v6389, 7
    %v6391 = vsub.s32 0, %v6390
    %v6392 = vrot.slane %v6387, %v6391
    %v6402 = vunpack.c.l.b16 %v6379
    %v6403 = vunpack.c.l.b16 %v6380
    %v6404 = vunpack.c.l.b16 %v6381
    %v6405 = vunpack.c.l.b16 %v6382
    %v6406 = vunpack.c.l.b16 %v6383
    %v6407 = vunpack.c.l.b16 %v6384
    %v6408 = vunpack.c.l.b16 %v6385
    %v6409 = vunpack.c.l.b16 %v6386
    %v6410 = vpack.c.b16 %v6403, %v6402
    %v6411 = vpack.c.b16 %v6405, %v6404
    %v6412 = vpack.c.b16 %v6407, %v6406
    %v6413 = vpack.c.b16 %v6409, %v6408
    %vm6418 = vcmask 523264
    %v6420 = vsel %vm6418, %v6376, 0
    %6422 = vmatprep.subr.bf16.mxu0 0
    %6423 = vmatpush1.bf16.msra.mxu0 %v6410
    %6424 = vmatprep.subr.bf16.mxu0 0
    %6425 = vmatpush1.bf16.msra.mxu0 %v6411
    %6426 = vmatprep.subr.bf16.mxu0 0
    %6427 = vmatpush1.bf16.msra.mxu0 %v6412
    %6428 = vmatprep.subr.bf16.mxu0 0
    %6429 = vmatpush1.bf16.msra.mxu0 %v6413
    %6430 = vmatprep.subr.bf16.mxu0 0
    %6431 = vmatpush1.bf16.msra.mxu0 0
    %6432 = vmatprep.subr.bf16.mxu0 0
    %6433 = vmatpush1.bf16.msra.mxu0 0
    %6434 = vmatprep.subr.bf16.mxu0 0
    %6435 = vmatpush1.bf16.msra.mxu0 0
    %6436 = vmatprep.subr.bf16.mxu0 0
    %6437 = vmatpush1.bf16.msra.mxu0 0
    %6438 = vmatprep.subr.bf16.mxu0 0
    %6439 = vmatpush1.bf16.msra.mxu0 0
    %6440 = vmatprep.subr.bf16.mxu0 0
    %6441 = vmatpush1.bf16.msra.mxu0 0
    %6442 = vmatprep.subr.bf16.mxu0 0
    %6443 = vmatpush1.bf16.msra.mxu0 0
    %6444 = vmatprep.subr.bf16.mxu0 0
    %6445 = vmatpush1.bf16.msra.mxu0 0
    %6446 = vmatprep.subr.bf16.mxu0 0
    %6447 = vmatpush1.bf16.msra.mxu0 0
    %6448 = vmatprep.subr.bf16.mxu0 0
    %6449 = vmatpush1.bf16.msra.mxu0 0
    %6450 = vmatprep.subr.bf16.mxu0 0
    %6451 = vmatpush1.bf16.msra.mxu0 0
    %6452 = vmatprep.subr.bf16.mxu0 0
    %6453 = vmatpush1.bf16.msra.mxu0 0
    %6454 = vmatprep.mubr.bf16.mxu0 0
    %6455 = vmatmul.mubr.bf16.gmra.mrb[0].mxu0 %v6420
    %v6456 = vpop.f32.mrb[0].mxu0
    %v6457 = vadd.f32 %v6392, %v6456
    %v6458 = vpop.f32.mrb[0].mxu0
    %v6459 = vpop.f32.mrb[0].mxu0
    %v6460 = vpop.f32.mrb[0].mxu0
    %6461 = vdwg.mxu0
    %v6463 = vsel %vm6418, %v6378, 0
    %6465 = vmatprep.subr.bf16.mxu0 0
    %6466 = vmatpush1.bf16.msra.mxu0 %v6410
    %6467 = vmatprep.subr.bf16.mxu0 0
    %6468 = vmatpush1.bf16.msra.mxu0 %v6411
    %6469 = vmatprep.subr.bf16.mxu0 0
    %6470 = vmatpush1.bf16.msra.mxu0 %v6412
    %6471 = vmatprep.subr.bf16.mxu0 0
    %6472 = vmatpush1.bf16.msra.mxu0 %v6413
    %6473 = vmatprep.subr.bf16.mxu0 0
    %6474 = vmatpush1.bf16.msra.mxu0 0
    %6475 = vmatprep.subr.bf16.mxu0 0
    %6476 = vmatpush1.bf16.msra.mxu0 0
    %6477 = vmatprep.subr.bf16.mxu0 0
    %6478 = vmatpush1.bf16.msra.mxu0 0
    %6479 = vmatprep.subr.bf16.mxu0 0
    %6480 = vmatpush1.bf16.msra.mxu0 0
    %6481 = vmatprep.subr.bf16.mxu0 0
    %6482 = vmatpush1.bf16.msra.mxu0 0
    %6483 = vmatprep.subr.bf16.mxu0 0
    %6484 = vmatpush1.bf16.msra.mxu0 0
    %6485 = vmatprep.subr.bf16.mxu0 0
    %6486 = vmatpush1.bf16.msra.mxu0 0
    %6487 = vmatprep.subr.bf16.mxu0 0
    %6488 = vmatpush1.bf16.msra.mxu0 0
    %6489 = vmatprep.subr.bf16.mxu0 0
    %6490 = vmatpush1.bf16.msra.mxu0 0
    %6491 = vmatprep.subr.bf16.mxu0 0
    %6492 = vmatpush1.bf16.msra.mxu0 0
    %6493 = vmatprep.subr.bf16.mxu0 0
    %6494 = vmatpush1.bf16.msra.mxu0 0
    %6495 = vmatprep.subr.bf16.mxu0 0
    %6496 = vmatpush1.bf16.msra.mxu0 0
    %6497 = vmatprep.mubr.bf16.mxu0 0
    %6498 = vmatmul.mubr.bf16.gmra.mrb[0].mxu0 %v6463
    %v6499 = vpop.f32.mrb[0].mxu0
    %v6500 = vadd.f32 %v6392, %v6499
    %v6501 = vpop.f32.mrb[0].mxu0
    %v6502 = vpop.f32.mrb[0].mxu0
    %v6503 = vpop.f32.mrb[0].mxu0
    %6504 = vdwg.mxu0
    %6505 = vst [vmem:[%s13] sm:$0xff] %v6457
    %6506 = vst [vmem:[%s13 + $0x8] sm:$0xff] %v6500
    // Predicated region
    $region98: #{_forward.1} parent=1 // pred_check
      _
    $region99: #{_forward.1} parent=1 // pred_check_branch
      %6508 = sbr.rel (0) target = $region101
    $region100: #{_forward.1} parent=1 // pred_region
      _
    $region101: #{_forward.1} parent=1 // pred_fallthru
      _
    // Predicated region
    $region102: #{_forward.1} parent=1 // pred_check
      _
    $region103: #{_forward.1} parent=1 // pred_check_branch
      %6510 = sbr.rel (0) target = $region105
    $region104: #{_forward.1} parent=1 // pred_region
      _
    $region105: #{_forward.1} parent=1 // pred_fallthru
      _
    %6511 = vsyncpa [#allocation4], 1
    %6512 = vsyncpa [#allocation6], 1
    %6513 = vsyncpa [#allocation9], 1
    %6514 = vsyncpa [#allocation12], 1
    %6515 = vsyncpa [#allocation15], 1
    %6516 = vsyncpa [#allocation18], 1

</llo_original>
